<compile_context>
chip_gen: v5e
topology: v5e:2x2
jax: 0.10.0
libtpu: 0.0.40
codegen_flags: <defaults>
</compile_context>

<pallas_src>
import jax
import jax.numpy as jnp
from jax.experimental import pallas as pl
from jax.experimental.pallas import tpu as pltpu


# ----------------------------------------------------------------------------
# Fused Group kernel
# ----------------------------------------------------------------------------

def _make_group_kernel(K, H_img, W_img):
    pad = K // 2
    HW = H_img * W_img
    s_max = pad * (W_img + 1)                       # max |flattened shift|
    PADL = ((s_max + 127) // 128) * 128 if s_max > 0 else 0

    def conv_same(h, w_ref, masks, cpad_ref):
        """Same-padding KxK conv of h:(C,HW) with w_ref:(K*K, C_out, C_in)."""
        cpad_ref[:, PADL:PADL + HW] = h             # aligned store into workspace
        acc = None
        for dy in range(K):
            for dx in range(K):
                t = dy * K + dx
                s = (dy - pad) * W_img + (dx - pad)
                hs = cpad_ref[:, PADL + s:PADL + s + HW]      # static slice read
                if not (dy == pad and dx == pad):
                    hs = hs * masks[t:t + 1, :]               # zero invalid pixels
                c = jnp.dot(w_ref[t], hs, preferred_element_type=jnp.float32)
                acc = c if acc is None else acc + c
        return acc

    def kernel(x_ref, mask_ref, scal_ref,
               w1_ref, b1_ref, w2_ref, b2_ref, band_ref,
               wp1_ref, bp1_ref, wp2_ref,
               wf_ref, bf_ref,
               o_ref, cpad_ref, h_scr):
        n = pl.program_id(1)
        nblk = pl.num_programs(1)
        C = x_ref.shape[0]

        @pl.when(n == 0)
        def _init():
            # Seed the carried activation with the group input and zero the halo
            # of the conv workspace (the halo is never written afterwards).
            h_scr[...] = x_ref[...]
            if PADL:
                cpad_ref[:, :PADL] = jnp.zeros((C, PADL), jnp.float32)
                cpad_ref[:, PADL + HW:] = jnp.zeros((C, PADL), jnp.float32)

        h = h_scr[...]
        masks = mask_ref[...]
        a1 = scal_ref[n, 0]      # PReLU slope after conv1
        ap = scal_ref[n, 1]      # PReLU slope inside PALayer
        bp2 = scal_ref[n, 2]     # bias of PALayer's second 1x1 conv

        # --- conv1 -> PReLU -> + h ------------------------------------------
        r = conv_same(h, w1_ref, masks, cpad_ref) + b1_ref[...]
        r = jnp.where(r > 0, r, a1 * r)
        r = r + h

        # --- conv2 ------------------------------------------------------------
        t = conv_same(r, w2_ref, masks, cpad_ref) + b2_ref[...]

        # --- eca_layer: global avg pool FIRST, then 3-tap channel conv --------
        mu = jnp.mean(t, axis=1, keepdims=True)                       # (C, 1)
        ca = jax.nn.sigmoid(jnp.dot(band_ref[...], mu,
                                    preferred_element_type=jnp.float32))
        t = t * ca

        # --- PALayer: per-pixel attention --------------------------------------
        z = jnp.dot(wp1_ref[...], t,
                    preferred_element_type=jnp.float32) + bp1_ref[...]  # (C8, HW)
        z = jnp.where(z > 0, z, ap * z)
        pa = jax.nn.sigmoid(jnp.sum(wp2_ref[...] * z, axis=0, keepdims=True)
                            + bp2)                                       # (1, HW)
        t = t * pa

        # --- Block residual; carry to the next block (grid step) ---------------
        h_new = t + h
        h_scr[...] = h_new

        # --- After the last Block: final conv + group residual -----------------
        @pl.when(n == nblk - 1)
        def _final():
            y = conv_same(h_new, wf_ref, masks, cpad_ref) + bf_ref[...]
            o_ref[...] = y + x_ref[...]

    return kernel, PADL


# ----------------------------------------------------------------------------
# Wrapper
# ----------------------------------------------------------------------------

def _eca_band_matrix(w_eca, C):
    """(C,C) M with (M@v)[c] = w0*v[c-1] + w1*v[c] + w2*v[c+1] (zero padded)."""
    idx = jnp.arange(C)
    d = idx[None, :] - idx[:, None]
    return (jnp.where(d == -1, w_eca[0], 0.0)
            + jnp.where(d == 0, w_eca[1], 0.0)
            + jnp.where(d == 1, w_eca[2], 0.0)).astype(jnp.float32)


def group_forward_pallas(x, params, K):
    B, C, H, W = x.shape
    HW = H * W
    KK = K * K
    pad = K // 2
    blocks = params["blocks"]
    nblocks = len(blocks)
    C8 = blocks[0]["wp1"].shape[0]

    xf = x.reshape(B, C, HW).astype(jnp.float32)

    # Per-tap validity masks (K*K, HW): 1 where the (dy,dx)-shifted source pixel
    # lies inside the image, 0 where the conv reads zero padding.
    ys = jnp.arange(H)[:, None]
    xs = jnp.arange(W)[None, :]
    rows = []
    for dy in range(K):
        for dx in range(K):
            valid = ((ys + dy - pad >= 0) & (ys + dy - pad < H)
                     & (xs + dx - pad >= 0) & (xs + dx - pad < W))
            rows.append(valid.reshape(HW))
    mask = jnp.stack(rows).astype(jnp.float32)                    # (KK, HW)

    def taps(w):   # (C_out, C_in, K, K) -> (K*K, C_out, C_in)
        return jnp.transpose(w, (2, 3, 0, 1)).reshape(KK, C, C)

    w1 = jnp.stack([taps(bp["w1"]) for bp in blocks])             # (n, KK, C, C)
    b1 = jnp.stack([bp["b1"].reshape(C, 1) for bp in blocks])     # (n, C, 1)
    w2 = jnp.stack([taps(bp["w2"]) for bp in blocks])
    b2 = jnp.stack([bp["b2"].reshape(C, 1) for bp in blocks])
    band = jnp.stack([_eca_band_matrix(bp["w_eca"], C) for bp in blocks])
    wp1 = jnp.stack([bp["wp1"] for bp in blocks])                 # (n, C8, C)
    bp1 = jnp.stack([bp["bp1"].reshape(C8, 1) for bp in blocks])  # (n, C8, 1)
    wp2 = jnp.stack([bp["wp2"].reshape(C8, 1) for bp in blocks])  # (n, C8, 1)
    scal = jnp.stack([jnp.stack([bp["a1"].reshape(()),
                                 bp["ap"].reshape(()),
                                 bp["bp2"].reshape(())])
                      for bp in blocks]).astype(jnp.float32)      # (n, 3) -> SMEM
    wf = taps(params["wf"])                                       # (KK, C, C)
    bf = params["bf"].reshape(C, 1)

    kernel, PADL = _make_group_kernel(K, H, W)

    def bspec_batch(shape):                  # (B, ...) indexed by grid axis 0
        nd = len(shape) - 1
        def im(b, n):
            return (b,) + (0,) * nd
        return pl.BlockSpec((None,) + tuple(shape[1:]), im)

    def bspec_block(shape):                  # (nblocks, ...) indexed by grid axis 1
        nd = len(shape) - 1
        def im(b, n):
            return (n,) + (0,) * nd
        return pl.BlockSpec((None,) + tuple(shape[1:]), im)

    def bspec_full(shape):                   # shared, fetched once
        nd = len(shape)
        def im(b, n):
            return (0,) * nd
        return pl.BlockSpec(tuple(shape), im)

    smem_spec = pl.BlockSpec(memory_space=pltpu.MemorySpace.SMEM)

    out = pl.pallas_call(
        kernel,
        out_shape=jax.ShapeDtypeStruct((B, C, HW), jnp.float32),
        grid_spec=pltpu.PrefetchScalarGridSpec(
            num_scalar_prefetch=0,
            grid=(B, nblocks),
            in_specs=[
                bspec_batch(xf.shape),        # x (group residual / block 0 input)
                bspec_full(mask.shape),       # conv tap validity masks
                smem_spec,                    # per-block scalars in SMEM
                bspec_block(w1.shape), bspec_block(b1.shape),
                bspec_block(w2.shape), bspec_block(b2.shape),
                bspec_block(band.shape),
                bspec_block(wp1.shape), bspec_block(bp1.shape),
                bspec_block(wp2.shape),
                bspec_full(wf.shape), bspec_full(bf.shape),
            ],
            out_specs=bspec_batch((B, C, HW)),
            scratch_shapes=[
                pltpu.VMEM((C, HW + 2 * PADL), jnp.float32),   # zero-haloed conv workspace
                pltpu.VMEM((C, HW), jnp.float32),              # carried activation
            ],
        ),
        compiler_params=pltpu.CompilerParams(
            dimension_semantics=("parallel", "arbitrary")),
    )(xf, mask, scal, w1, b1, w2, b2, band, wp1, bp1, wp2, wf, bf)

    return out.reshape(B, C, H, W)


group_forward_pallas_jit = jax.jit(group_forward_pallas, static_argnums=2)


# ----------------------------------------------------------------------------
# Pure-JAX reference (independent code path, mirrors the PyTorch module)
# ----------------------------------------------------------------------------

def _prelu(x, a):
    return jnp.where(x > 0, x, a * x)


def _conv2d_ref(x, w, b):
    y = jax.lax.conv_general_dilated(
        x, w, window_strides=(1, 1), padding="SAME",
        dimension_numbers=("NCHW", "OIHW", "NCHW"))
    return y + b[None, :, None, None]


def _eca_ref(x, w_eca):
    avg = x.mean(axis=(2, 3))                       # (B, C)
    p = jnp.pad(avg, ((0, 0), (1, 1)))
    logit = w_eca[0] * p[:, :-2] + w_eca[1] * p[:, 1:-1] + w_eca[2] * p[:, 2:]
    return x * jax.nn.sigmoid(logit)[:, :, None, None]


def _pa_ref(x, wp1, bp1, ap, wp2, bp2):
    z = jnp.einsum("oc,bchw->bohw", wp1, x) + bp1[None, :, None, None]
    z = _prelu(z, ap)
    y = jnp.einsum("oc,bchw->bohw", wp2, z) + bp2[None, :, None, None]
    return x * jax.nn.sigmoid(y)


def _block_ref(x, bp):
    r = _prelu(_conv2d_ref(x, bp["w1"], bp["b1"]), bp["a1"])
    r = r + x
    r = _conv2d_ref(r, bp["w2"], bp["b2"])
    r = _eca_ref(r, bp["w_eca"])
    r = _pa_ref(r, bp["wp1"], bp["bp1"], bp["ap"], bp["wp2"], bp["bp2"])
    return r + x


def group_forward_ref(x, params):
    h = x
    for bp in params["blocks"]:
        h = _block_ref(h, bp)
    h = _conv2d_ref(h, params["wf"], params["bf"])
    return h + x


# ----------------------------------------------------------------------------
# Parameters & test
# ----------------------------------------------------------------------------

def make_params(key, dim, K, blocks):
    C8 = max(dim // 8, 1)
    keys = iter(jax.random.split(key, blocks * 12 + 4))

    def nrm(shape, scale=0.1):
        return scale * jax.random.normal(next(keys), shape, dtype=jnp.float32)

    blk = []
    for _ in range(blocks):
        blk.append(dict(
            w1=nrm((dim, dim, K, K)), b1=nrm((dim,)),
            a1=jnp.float32(0.25) + nrm(()),
            w2=nrm((dim, dim, K, K)), b2=nrm((dim,)),
            w_eca=nrm((3,), scale=0.5),
            wp1=nrm((C8, dim)), bp1=nrm((C8,)),
            ap=jnp.float32(0.25) + nrm(()),
            wp2=nrm((1, C8)), bp2=nrm((1,)),
        ))
    return dict(blocks=blk, wf=nrm((dim, dim, K, K)), bf=nrm((dim,)))


if __name__ == "__main__":
    key = jax.random.PRNGKey(0)
    B, dim, H, W, K, nblocks = 2, 16, 16, 16, 3, 2

    kp, kx = jax.random.split(key)
    params = make_params(kp, dim, K, nblocks)
    x = jax.random.normal(kx, (B, dim, H, W), dtype=jnp.float32)

    y = jax.block_until_ready(group_forward_pallas_jit(x, params, K))
    y_ref = jax.block_until_ready(group_forward_ref(x, params))

    assert y.shape == (B, dim, H, W), y.shape
    assert y.dtype == jnp.float32
    err = float(jnp.max(jnp.abs(y - y_ref)))
    assert jnp.allclose(y, y_ref, atol=2e-4, rtol=2e-4), f"mismatch vs reference: {err}"

    print("KERNEL_OK")
</pallas_src>

<mosaic_0001>
module attributes {stable_mosaic.version = 11 : i64} {
  func.func @kernel(%arg0: i32, %arg1: i32, %arg2: memref<1x16x256xf32, #tpu.memory_space<vmem>>, %arg3: memref<9x256xf32, #tpu.memory_space<vmem>>, %arg4: memref<2x3xf32, #tpu.memory_space<smem>>, %arg5: memref<1x9x16x16xf32, #tpu.memory_space<vmem>>, %arg6: memref<1x16x1xf32, #tpu.memory_space<vmem>>, %arg7: memref<1x9x16x16xf32, #tpu.memory_space<vmem>>, %arg8: memref<1x16x1xf32, #tpu.memory_space<vmem>>, %arg9: memref<1x16x16xf32, #tpu.memory_space<vmem>>, %arg10: memref<1x2x16xf32, #tpu.memory_space<vmem>>, %arg11: memref<1x2x1xf32, #tpu.memory_space<vmem>>, %arg12: memref<1x2x1xf32, #tpu.memory_space<vmem>>, %arg13: memref<9x16x16xf32, #tpu.memory_space<vmem>>, %arg14: memref<16x1xf32, #tpu.memory_space<vmem>>, %arg15: memref<1x16x256xf32, #tpu.memory_space<vmem>>, %arg16: memref<16x512xf32, #tpu.memory_space<vmem>>, %arg17: memref<16x256xf32, #tpu.memory_space<vmem>>) attributes {dimension_semantics = [#tpu.dimension_semantics<parallel>, #tpu.dimension_semantics<arbitrary>], iteration_bounds = array<i64: 2, 2>, scalar_prefetch = 0 : i64, scratch_operands = 2 : i64, tpu.core_type = #tpu.core_type<tc>, window_params = [{transform_indices = @transform_0, window_bounds = array<i64: 1, 16, 256>}, {pipeline_mode = #tpu.pipeline_mode<synchronous>, transform_indices = @transform_1, window_bounds = array<i64: 9, 256>}, {transform_indices = @transform_2, window_bounds = array<i64: 2, 3>}, {transform_indices = @transform_3, window_bounds = array<i64: 1, 9, 16, 16>}, {transform_indices = @transform_4, window_bounds = array<i64: 1, 16, 1>}, {transform_indices = @transform_5, window_bounds = array<i64: 1, 9, 16, 16>}, {transform_indices = @transform_6, window_bounds = array<i64: 1, 16, 1>}, {transform_indices = @transform_7, window_bounds = array<i64: 1, 16, 16>}, {transform_indices = @transform_8, window_bounds = array<i64: 1, 2, 16>}, {transform_indices = @transform_9, window_bounds = array<i64: 1, 2, 1>}, {transform_indices = @transform_10, window_bounds = array<i64: 1, 2, 1>}, {pipeline_mode = #tpu.pipeline_mode<synchronous>, transform_indices = @transform_11, window_bounds = array<i64: 9, 16, 16>}, {pipeline_mode = #tpu.pipeline_mode<synchronous>, transform_indices = @transform_12, window_bounds = array<i64: 16, 1>}, {transform_indices = @transform_13, window_bounds = array<i64: 1, 16, 256>}]} {
    %c0_i32 = arith.constant 0 : i32
    %0 = arith.cmpi eq, %arg1, %c0_i32 : i32
    %1 = arith.extui %0 : i1 to i32
    %c0_i32_0 = arith.constant 0 : i32
    %2 = arith.cmpi ne, %1, %c0_i32_0 : i32
    scf.if %2 {
      %c0_149 = arith.constant 0 : index
      %c0_150 = arith.constant 0 : index
      %c0_151 = arith.constant 0 : index
      %209 = vector.load %arg2[%c0_149, %c0_150, %c0_151] : memref<1x16x256xf32, #tpu.memory_space<vmem>>, vector<1x16x256xf32>
      %210 = vector.shape_cast %209 : vector<1x16x256xf32> to vector<16x256xf32>
      %c0_152 = arith.constant 0 : index
      %c0_153 = arith.constant 0 : index
      %211 = vector.load %arg17[%c0_152, %c0_153] : memref<16x256xf32, #tpu.memory_space<vmem>>, vector<16x256xf32>
      tpu.vector_store %arg17[%c0_152, %c0_153], %210 {strides = array<i32>} : memref<16x256xf32, #tpu.memory_space<vmem>>, vector<16x256xf32>,
      %cst_154 = arith.constant 0.000000e+00 : f32
      %212 = vector.broadcast %cst_154 : f32 to vector<16x128xf32>
      %c0_155 = arith.constant 0 : index
      %c0_156 = arith.constant 0 : index
      %213 = vector.load %arg16[%c0_155, %c0_156] : memref<16x512xf32, #tpu.memory_space<vmem>>, vector<16x128xf32>
      tpu.vector_store %arg16[%c0_155, %c0_156], %212 {strides = array<i32>} : memref<16x512xf32, #tpu.memory_space<vmem>>, vector<16x128xf32>,
      %cst_157 = arith.constant 0.000000e+00 : f32
      %214 = vector.broadcast %cst_157 : f32 to vector<16x128xf32>
      %c0_158 = arith.constant 0 : index
      %c384 = arith.constant 384 : index
      %215 = vector.load %arg16[%c0_158, %c384] : memref<16x512xf32, #tpu.memory_space<vmem>>, vector<16x128xf32>
      tpu.vector_store %arg16[%c0_158, %c384], %214 {strides = array<i32>} : memref<16x512xf32, #tpu.memory_space<vmem>>, vector<16x128xf32>,
    } else {
    }
    %c0 = arith.constant 0 : index
    %c0_1 = arith.constant 0 : index
    %3 = vector.load %arg17[%c0, %c0_1] : memref<16x256xf32, #tpu.memory_space<vmem>>, vector<16x256xf32>
    %c0_2 = arith.constant 0 : index
    %c0_3 = arith.constant 0 : index
    %4 = vector.load %arg3[%c0_2, %c0_3] : memref<9x256xf32, #tpu.memory_space<vmem>>, vector<9x256xf32>
    %5 = arith.index_cast %arg1 : i32 to index
    %c0_4 = arith.constant 0 : index
    %6 = memref.load %arg4[%5, %c0_4] : memref<2x3xf32, #tpu.memory_space<smem>>
    %7 = arith.index_cast %arg1 : i32 to index
    %c1 = arith.constant 1 : index
    %8 = memref.load %arg4[%7, %c1] : memref<2x3xf32, #tpu.memory_space<smem>>
    %9 = arith.index_cast %arg1 : i32 to index
    %c2 = arith.constant 2 : index
    %10 = memref.load %arg4[%9, %c2] : memref<2x3xf32, #tpu.memory_space<smem>>
    %c0_5 = arith.constant 0 : index
    %c128 = arith.constant 128 : index
    %11 = vector.load %arg16[%c0_5, %c128] : memref<16x512xf32, #tpu.memory_space<vmem>>, vector<16x256xf32>
    tpu.vector_store %arg16[%c0_5, %c128], %3 {strides = array<i32>} : memref<16x512xf32, #tpu.memory_space<vmem>>, vector<16x256xf32>,
    %c0_6 = arith.constant 0 : index
    %c111 = arith.constant 111 : index
    %12 = vector.load %arg16[%c0_6, %c111] : memref<16x512xf32, #tpu.memory_space<vmem>>, vector<16x256xf32>
    %13 = vector.extract_strided_slice %4 {offsets = [0, 0], sizes = [1, 256], strides = [1, 1]} : vector<9x256xf32> to vector<1x256xf32>
    %14 = vector.broadcast %13 : vector<1x256xf32> to vector<16x256xf32>
    %15 = arith.mulf %12, %14 : vector<16x256xf32>
    %c0_7 = arith.constant 0 : index
    %c0_8 = arith.constant 0 : index
    %c0_9 = arith.constant 0 : index
    %c0_10 = arith.constant 0 : index
    %16 = vector.load %arg5[%c0_7, %c0_8, %c0_9, %c0_10] : memref<1x9x16x16xf32, #tpu.memory_space<vmem>>, vector<1x1x16x16xf32>
    %17 = vector.shape_cast %16 : vector<1x1x16x16xf32> to vector<16x16xf32>
    %cst = arith.constant dense<0.000000e+00> : vector<16x256xf32>
    %18 = tpu.matmul %17, %15, %cst {dimension_numbers = #tpu.dot_dimension_numbers<[1], [0], [0], [1], [0, 0, 1, 1], [], []>} : vector<16x16xf32>, vector<16x256xf32>, vector<16x256xf32> -> vector<16x256xf32>
    %c0_11 = arith.constant 0 : index
    %c112 = arith.constant 112 : index
    %19 = vector.load %arg16[%c0_11, %c112] : memref<16x512xf32, #tpu.memory_space<vmem>>, vector<16x256xf32>
    %20 = vector.extract_strided_slice %4 {offsets = [1, 0], sizes = [1, 256], strides = [1, 1]} : vector<9x256xf32> to vector<1x256xf32>
    %21 = vector.broadcast %20 : vector<1x256xf32> to vector<16x256xf32>
    %22 = arith.mulf %19, %21 : vector<16x256xf32>
    %c0_12 = arith.constant 0 : index
    %c1_13 = arith.constant 1 : index
    %c0_14 = arith.constant 0 : index
    %c0_15 = arith.constant 0 : index
    %23 = vector.load %arg5[%c0_12, %c1_13, %c0_14, %c0_15] : memref<1x9x16x16xf32, #tpu.memory_space<vmem>>, vector<1x1x16x16xf32>
    %24 = vector.shape_cast %23 : vector<1x1x16x16xf32> to vector<16x16xf32>
    %cst_16 = arith.constant dense<0.000000e+00> : vector<16x256xf32>
    %25 = tpu.matmul %24, %22, %cst_16 {dimension_numbers = #tpu.dot_dimension_numbers<[1], [0], [0], [1], [0, 0, 1, 1], [], []>} : vector<16x16xf32>, vector<16x256xf32>, vector<16x256xf32> -> vector<16x256xf32>
    %26 = arith.addf %18, %25 : vector<16x256xf32>
    %c0_17 = arith.constant 0 : index
    %c113 = arith.constant 113 : index
    %27 = vector.load %arg16[%c0_17, %c113] : memref<16x512xf32, #tpu.memory_space<vmem>>, vector<16x256xf32>
    %28 = vector.extract_strided_slice %4 {offsets = [2, 0], sizes = [1, 256], strides = [1, 1]} : vector<9x256xf32> to vector<1x256xf32>
    %29 = vector.broadcast %28 : vector<1x256xf32> to vector<16x256xf32>
    %30 = arith.mulf %27, %29 : vector<16x256xf32>
    %c0_18 = arith.constant 0 : index
    %c2_19 = arith.constant 2 : index
    %c0_20 = arith.constant 0 : index
    %c0_21 = arith.constant 0 : index
    %31 = vector.load %arg5[%c0_18, %c2_19, %c0_20, %c0_21] : memref<1x9x16x16xf32, #tpu.memory_space<vmem>>, vector<1x1x16x16xf32>
    %32 = vector.shape_cast %31 : vector<1x1x16x16xf32> to vector<16x16xf32>
    %cst_22 = arith.constant dense<0.000000e+00> : vector<16x256xf32>
    %33 = tpu.matmul %32, %30, %cst_22 {dimension_numbers = #tpu.dot_dimension_numbers<[1], [0], [0], [1], [0, 0, 1, 1], [], []>} : vector<16x16xf32>, vector<16x256xf32>, vector<16x256xf32> -> vector<16x256xf32>
    %34 = arith.addf %26, %33 : vector<16x256xf32>
    %c0_23 = arith.constant 0 : index
    %c127 = arith.constant 127 : index
    %35 = vector.load %arg16[%c0_23, %c127] : memref<16x512xf32, #tpu.memory_space<vmem>>, vector<16x256xf32>
    %36 = vector.extract_strided_slice %4 {offsets = [3, 0], sizes = [1, 256], strides = [1, 1]} : vector<9x256xf32> to vector<1x256xf32>
    %37 = vector.broadcast %36 : vector<1x256xf32> to vector<16x256xf32>
    %38 = arith.mulf %35, %37 : vector<16x256xf32>
    %c0_24 = arith.constant 0 : index
    %c3 = arith.constant 3 : index
    %c0_25 = arith.constant 0 : index
    %c0_26 = arith.constant 0 : index
    %39 = vector.load %arg5[%c0_24, %c3, %c0_25, %c0_26] : memref<1x9x16x16xf32, #tpu.memory_space<vmem>>, vector<1x1x16x16xf32>
    %40 = vector.shape_cast %39 : vector<1x1x16x16xf32> to vector<16x16xf32>
    %cst_27 = arith.constant dense<0.000000e+00> : vector<16x256xf32>
    %41 = tpu.matmul %40, %38, %cst_27 {dimension_numbers = #tpu.dot_dimension_numbers<[1], [0], [0], [1], [0, 0, 1, 1], [], []>} : vector<16x16xf32>, vector<16x256xf32>, vector<16x256xf32> -> vector<16x256xf32>
    %42 = arith.addf %34, %41 : vector<16x256xf32>
    %c0_28 = arith.constant 0 : index
    %c128_29 = arith.constant 128 : index
    %43 = vector.load %arg16[%c0_28, %c128_29] : memref<16x512xf32, #tpu.memory_space<vmem>>, vector<16x256xf32>
    %c0_30 = arith.constant 0 : index
    %c4 = arith.constant 4 : index
    %c0_31 = arith.constant 0 : index
    %c0_32 = arith.constant 0 : index
    %44 = vector.load %arg5[%c0_30, %c4, %c0_31, %c0_32] : memref<1x9x16x16xf32, #tpu.memory_space<vmem>>, vector<1x1x16x16xf32>
    %45 = vector.shape_cast %44 : vector<1x1x16x16xf32> to vector<16x16xf32>
    %cst_33 = arith.constant dense<0.000000e+00> : vector<16x256xf32>
    %46 = tpu.matmul %45, %43, %cst_33 {dimension_numbers = #tpu.dot_dimension_numbers<[1], [0], [0], [1], [0, 0, 1, 1], [], []>} : vector<16x16xf32>, vector<16x256xf32>, vector<16x256xf32> -> vector<16x256xf32>
    %47 = arith.addf %42, %46 : vector<16x256xf32>
    %c0_34 = arith.constant 0 : index
    %c129 = arith.constant 129 : index
    %48 = vector.load %arg16[%c0_34, %c129] : memref<16x512xf32, #tpu.memory_space<vmem>>, vector<16x256xf32>
    %49 = vector.extract_strided_slice %4 {offsets = [5, 0], sizes = [1, 256], strides = [1, 1]} : vector<9x256xf32> to vector<1x256xf32>
    %50 = vector.broadcast %49 : vector<1x256xf32> to vector<16x256xf32>
    %51 = arith.mulf %48, %50 : vector<16x256xf32>
    %c0_35 = arith.constant 0 : index
    %c5 = arith.constant 5 : index
    %c0_36 = arith.constant 0 : index
    %c0_37 = arith.constant 0 : index
    %52 = vector.load %arg5[%c0_35, %c5, %c0_36, %c0_37] : memref<1x9x16x16xf32, #tpu.memory_space<vmem>>, vector<1x1x16x16xf32>
    %53 = vector.shape_cast %52 : vector<1x1x16x16xf32> to vector<16x16xf32>
    %cst_38 = arith.constant dense<0.000000e+00> : vector<16x256xf32>
    %54 = tpu.matmul %53, %51, %cst_38 {dimension_numbers = #tpu.dot_dimension_numbers<[1], [0], [0], [1], [0, 0, 1, 1], [], []>} : vector<16x16xf32>, vector<16x256xf32>, vector<16x256xf32> -> vector<16x256xf32>
    %55 = arith.addf %47, %54 : vector<16x256xf32>
    %c0_39 = arith.constant 0 : index
    %c143 = arith.constant 143 : index
    %56 = vector.load %arg16[%c0_39, %c143] : memref<16x512xf32, #tpu.memory_space<vmem>>, vector<16x256xf32>
    %57 = vector.extract_strided_slice %4 {offsets = [6, 0], sizes = [1, 256], strides = [1, 1]} : vector<9x256xf32> to vector<1x256xf32>
    %58 = vector.broadcast %57 : vector<1x256xf32> to vector<16x256xf32>
    %59 = arith.mulf %56, %58 : vector<16x256xf32>
    %c0_40 = arith.constant 0 : index
    %c6 = arith.constant 6 : index
    %c0_41 = arith.constant 0 : index
    %c0_42 = arith.constant 0 : index
    %60 = vector.load %arg5[%c0_40, %c6, %c0_41, %c0_42] : memref<1x9x16x16xf32, #tpu.memory_space<vmem>>, vector<1x1x16x16xf32>
    %61 = vector.shape_cast %60 : vector<1x1x16x16xf32> to vector<16x16xf32>
    %cst_43 = arith.constant dense<0.000000e+00> : vector<16x256xf32>
    %62 = tpu.matmul %61, %59, %cst_43 {dimension_numbers = #tpu.dot_dimension_numbers<[1], [0], [0], [1], [0, 0, 1, 1], [], []>} : vector<16x16xf32>, vector<16x256xf32>, vector<16x256xf32> -> vector<16x256xf32>
    %63 = arith.addf %55, %62 : vector<16x256xf32>
    %c0_44 = arith.constant 0 : index
    %c144 = arith.constant 144 : index
    %64 = vector.load %arg16[%c0_44, %c144] : memref<16x512xf32, #tpu.memory_space<vmem>>, vector<16x256xf32>
    %65 = vector.extract_strided_slice %4 {offsets = [7, 0], sizes = [1, 256], strides = [1, 1]} : vector<9x256xf32> to vector<1x256xf32>
    %66 = vector.broadcast %65 : vector<1x256xf32> to vector<16x256xf32>
    %67 = arith.mulf %64, %66 : vector<16x256xf32>
    %c0_45 = arith.constant 0 : index
    %c7 = arith.constant 7 : index
    %c0_46 = arith.constant 0 : index
    %c0_47 = arith.constant 0 : index
    %68 = vector.load %arg5[%c0_45, %c7, %c0_46, %c0_47] : memref<1x9x16x16xf32, #tpu.memory_space<vmem>>, vector<1x1x16x16xf32>
    %69 = vector.shape_cast %68 : vector<1x1x16x16xf32> to vector<16x16xf32>
    %cst_48 = arith.constant dense<0.000000e+00> : vector<16x256xf32>
    %70 = tpu.matmul %69, %67, %cst_48 {dimension_numbers = #tpu.dot_dimension_numbers<[1], [0], [0], [1], [0, 0, 1, 1], [], []>} : vector<16x16xf32>, vector<16x256xf32>, vector<16x256xf32> -> vector<16x256xf32>
    %71 = arith.addf %63, %70 : vector<16x256xf32>
    %c0_49 = arith.constant 0 : index
    %c145 = arith.constant 145 : index
    %72 = vector.load %arg16[%c0_49, %c145] : memref<16x512xf32, #tpu.memory_space<vmem>>, vector<16x256xf32>
    %73 = vector.extract_strided_slice %4 {offsets = [8, 0], sizes = [1, 256], strides = [1, 1]} : vector<9x256xf32> to vector<1x256xf32>
    %74 = vector.broadcast %73 : vector<1x256xf32> to vector<16x256xf32>
    %75 = arith.mulf %72, %74 : vector<16x256xf32>
    %c0_50 = arith.constant 0 : index
    %c8 = arith.constant 8 : index
    %c0_51 = arith.constant 0 : index
    %c0_52 = arith.constant 0 : index
    %76 = vector.load %arg5[%c0_50, %c8, %c0_51, %c0_52] : memref<1x9x16x16xf32, #tpu.memory_space<vmem>>, vector<1x1x16x16xf32>
    %77 = vector.shape_cast %76 : vector<1x1x16x16xf32> to vector<16x16xf32>
    %cst_53 = arith.constant dense<0.000000e+00> : vector<16x256xf32>
    %78 = tpu.matmul %77, %75, %cst_53 {dimension_numbers = #tpu.dot_dimension_numbers<[1], [0], [0], [1], [0, 0, 1, 1], [], []>} : vector<16x16xf32>, vector<16x256xf32>, vector<16x256xf32> -> vector<16x256xf32>
    %79 = arith.addf %71, %78 : vector<16x256xf32>
    %c0_54 = arith.constant 0 : index
    %c0_55 = arith.constant 0 : index
    %c0_56 = arith.constant 0 : index
    %80 = vector.load %arg6[%c0_54, %c0_55, %c0_56] : memref<1x16x1xf32, #tpu.memory_space<vmem>>, vector<1x16x1xf32>
    %81 = vector.shape_cast %80 : vector<1x16x1xf32> to vector<16x1xf32>
    %82 = vector.broadcast %81 : vector<16x1xf32> to vector<16x256xf32>
    %83 = arith.addf %79, %82 : vector<16x256xf32>
    %cst_57 = arith.constant 0.000000e+00 : f32
    %84 = vector.broadcast %cst_57 : f32 to vector<16x256xf32>
    %85 = arith.cmpf ogt, %83, %84 : vector<16x256xf32>
    %86 = vector.broadcast %6 : f32 to vector<16x256xf32>
    %87 = arith.mulf %86, %83 : vector<16x256xf32>
    %88 = arith.select %85, %83, %87 : vector<16x256xi1>, vector<16x256xf32>
    %89 = arith.addf %88, %3 : vector<16x256xf32>
    %c0_58 = arith.constant 0 : index
    %c128_59 = arith.constant 128 : index
    %90 = vector.load %arg16[%c0_58, %c128_59] : memref<16x512xf32, #tpu.memory_space<vmem>>, vector<16x256xf32>
    tpu.vector_store %arg16[%c0_58, %c128_59], %89 {strides = array<i32>} : memref<16x512xf32, #tpu.memory_space<vmem>>, vector<16x256xf32>,
    %c0_60 = arith.constant 0 : index
    %c111_61 = arith.constant 111 : index
    %91 = vector.load %arg16[%c0_60, %c111_61] : memref<16x512xf32, #tpu.memory_space<vmem>>, vector<16x256xf32>
    %92 = vector.extract_strided_slice %4 {offsets = [0, 0], sizes = [1, 256], strides = [1, 1]} : vector<9x256xf32> to vector<1x256xf32>
    %93 = vector.broadcast %92 : vector<1x256xf32> to vector<16x256xf32>
    %94 = arith.mulf %91, %93 : vector<16x256xf32>
    %c0_62 = arith.constant 0 : index
    %c0_63 = arith.constant 0 : index
    %c0_64 = arith.constant 0 : index
    %c0_65 = arith.constant 0 : index
    %95 = vector.load %arg7[%c0_62, %c0_63, %c0_64, %c0_65] : memref<1x9x16x16xf32, #tpu.memory_space<vmem>>, vector<1x1x16x16xf32>
    %96 = vector.shape_cast %95 : vector<1x1x16x16xf32> to vector<16x16xf32>
    %cst_66 = arith.constant dense<0.000000e+00> : vector<16x256xf32>
    %97 = tpu.matmul %96, %94, %cst_66 {dimension_numbers = #tpu.dot_dimension_numbers<[1], [0], [0], [1], [0, 0, 1, 1], [], []>} : vector<16x16xf32>, vector<16x256xf32>, vector<16x256xf32> -> vector<16x256xf32>
    %c0_67 = arith.constant 0 : index
    %c112_68 = arith.constant 112 : index
    %98 = vector.load %arg16[%c0_67, %c112_68] : memref<16x512xf32, #tpu.memory_space<vmem>>, vector<16x256xf32>
    %99 = vector.extract_strided_slice %4 {offsets = [1, 0], sizes = [1, 256], strides = [1, 1]} : vector<9x256xf32> to vector<1x256xf32>
    %100 = vector.broadcast %99 : vector<1x256xf32> to vector<16x256xf32>
    %101 = arith.mulf %98, %100 : vector<16x256xf32>
    %c0_69 = arith.constant 0 : index
    %c1_70 = arith.constant 1 : index
    %c0_71 = arith.constant 0 : index
    %c0_72 = arith.constant 0 : index
    %102 = vector.load %arg7[%c0_69, %c1_70, %c0_71, %c0_72] : memref<1x9x16x16xf32, #tpu.memory_space<vmem>>, vector<1x1x16x16xf32>
    %103 = vector.shape_cast %102 : vector<1x1x16x16xf32> to vector<16x16xf32>
    %cst_73 = arith.constant dense<0.000000e+00> : vector<16x256xf32>
    %104 = tpu.matmul %103, %101, %cst_73 {dimension_numbers = #tpu.dot_dimension_numbers<[1], [0], [0], [1], [0, 0, 1, 1], [], []>} : vector<16x16xf32>, vector<16x256xf32>, vector<16x256xf32> -> vector<16x256xf32>
    %105 = arith.addf %97, %104 : vector<16x256xf32>
    %c0_74 = arith.constant 0 : index
    %c113_75 = arith.constant 113 : index
    %106 = vector.load %arg16[%c0_74, %c113_75] : memref<16x512xf32, #tpu.memory_space<vmem>>, vector<16x256xf32>
    %107 = vector.extract_strided_slice %4 {offsets = [2, 0], sizes = [1, 256], strides = [1, 1]} : vector<9x256xf32> to vector<1x256xf32>
    %108 = vector.broadcast %107 : vector<1x256xf32> to vector<16x256xf32>
    %109 = arith.mulf %106, %108 : vector<16x256xf32>
    %c0_76 = arith.constant 0 : index
    %c2_77 = arith.constant 2 : index
    %c0_78 = arith.constant 0 : index
    %c0_79 = arith.constant 0 : index
    %110 = vector.load %arg7[%c0_76, %c2_77, %c0_78, %c0_79] : memref<1x9x16x16xf32, #tpu.memory_space<vmem>>, vector<1x1x16x16xf32>
    %111 = vector.shape_cast %110 : vector<1x1x16x16xf32> to vector<16x16xf32>
    %cst_80 = arith.constant dense<0.000000e+00> : vector<16x256xf32>
    %112 = tpu.matmul %111, %109, %cst_80 {dimension_numbers = #tpu.dot_dimension_numbers<[1], [0], [0], [1], [0, 0, 1, 1], [], []>} : vector<16x16xf32>, vector<16x256xf32>, vector<16x256xf32> -> vector<16x256xf32>
    %113 = arith.addf %105, %112 : vector<16x256xf32>
    %c0_81 = arith.constant 0 : index
    %c127_82 = arith.constant 127 : index
    %114 = vector.load %arg16[%c0_81, %c127_82] : memref<16x512xf32, #tpu.memory_space<vmem>>, vector<16x256xf32>
    %115 = vector.extract_strided_slice %4 {offsets = [3, 0], sizes = [1, 256], strides = [1, 1]} : vector<9x256xf32> to vector<1x256xf32>
    %116 = vector.broadcast %115 : vector<1x256xf32> to vector<16x256xf32>
    %117 = arith.mulf %114, %116 : vector<16x256xf32>
    %c0_83 = arith.constant 0 : index
    %c3_84 = arith.constant 3 : index
    %c0_85 = arith.constant 0 : index
    %c0_86 = arith.constant 0 : index
    %118 = vector.load %arg7[%c0_83, %c3_84, %c0_85, %c0_86] : memref<1x9x16x16xf32, #tpu.memory_space<vmem>>, vector<1x1x16x16xf32>
    %119 = vector.shape_cast %118 : vector<1x1x16x16xf32> to vector<16x16xf32>
    %cst_87 = arith.constant dense<0.000000e+00> : vector<16x256xf32>
    %120 = tpu.matmul %119, %117, %cst_87 {dimension_numbers = #tpu.dot_dimension_numbers<[1], [0], [0], [1], [0, 0, 1, 1], [], []>} : vector<16x16xf32>, vector<16x256xf32>, vector<16x256xf32> -> vector<16x256xf32>
    %121 = arith.addf %113, %120 : vector<16x256xf32>
    %c0_88 = arith.constant 0 : index
    %c128_89 = arith.constant 128 : index
    %122 = vector.load %arg16[%c0_88, %c128_89] : memref<16x512xf32, #tpu.memory_space<vmem>>, vector<16x256xf32>
    %c0_90 = arith.constant 0 : index
    %c4_91 = arith.constant 4 : index
    %c0_92 = arith.constant 0 : index
    %c0_93 = arith.constant 0 : index
    %123 = vector.load %arg7[%c0_90, %c4_91, %c0_92, %c0_93] : memref<1x9x16x16xf32, #tpu.memory_space<vmem>>, vector<1x1x16x16xf32>
    %124 = vector.shape_cast %123 : vector<1x1x16x16xf32> to vector<16x16xf32>
    %cst_94 = arith.constant dense<0.000000e+00> : vector<16x256xf32>
    %125 = tpu.matmul %124, %122, %cst_94 {dimension_numbers = #tpu.dot_dimension_numbers<[1], [0], [0], [1], [0, 0, 1, 1], [], []>} : vector<16x16xf32>, vector<16x256xf32>, vector<16x256xf32> -> vector<16x256xf32>
    %126 = arith.addf %121, %125 : vector<16x256xf32>
    %c0_95 = arith.constant 0 : index
    %c129_96 = arith.constant 129 : index
    %127 = vector.load %arg16[%c0_95, %c129_96] : memref<16x512xf32, #tpu.memory_space<vmem>>, vector<16x256xf32>
    %128 = vector.extract_strided_slice %4 {offsets = [5, 0], sizes = [1, 256], strides = [1, 1]} : vector<9x256xf32> to vector<1x256xf32>
    %129 = vector.broadcast %128 : vector<1x256xf32> to vector<16x256xf32>
    %130 = arith.mulf %127, %129 : vector<16x256xf32>
    %c0_97 = arith.constant 0 : index
    %c5_98 = arith.constant 5 : index
    %c0_99 = arith.constant 0 : index
    %c0_100 = arith.constant 0 : index
    %131 = vector.load %arg7[%c0_97, %c5_98, %c0_99, %c0_100] : memref<1x9x16x16xf32, #tpu.memory_space<vmem>>, vector<1x1x16x16xf32>
    %132 = vector.shape_cast %131 : vector<1x1x16x16xf32> to vector<16x16xf32>
    %cst_101 = arith.constant dense<0.000000e+00> : vector<16x256xf32>
    %133 = tpu.matmul %132, %130, %cst_101 {dimension_numbers = #tpu.dot_dimension_numbers<[1], [0], [0], [1], [0, 0, 1, 1], [], []>} : vector<16x16xf32>, vector<16x256xf32>, vector<16x256xf32> -> vector<16x256xf32>
    %134 = arith.addf %126, %133 : vector<16x256xf32>
    %c0_102 = arith.constant 0 : index
    %c143_103 = arith.constant 143 : index
    %135 = vector.load %arg16[%c0_102, %c143_103] : memref<16x512xf32, #tpu.memory_space<vmem>>, vector<16x256xf32>
    %136 = vector.extract_strided_slice %4 {offsets = [6, 0], sizes = [1, 256], strides = [1, 1]} : vector<9x256xf32> to vector<1x256xf32>
    %137 = vector.broadcast %136 : vector<1x256xf32> to vector<16x256xf32>
    %138 = arith.mulf %135, %137 : vector<16x256xf32>
    %c0_104 = arith.constant 0 : index
    %c6_105 = arith.constant 6 : index
    %c0_106 = arith.constant 0 : index
    %c0_107 = arith.constant 0 : index
    %139 = vector.load %arg7[%c0_104, %c6_105, %c0_106, %c0_107] : memref<1x9x16x16xf32, #tpu.memory_space<vmem>>, vector<1x1x16x16xf32>
    %140 = vector.shape_cast %139 : vector<1x1x16x16xf32> to vector<16x16xf32>
    %cst_108 = arith.constant dense<0.000000e+00> : vector<16x256xf32>
    %141 = tpu.matmul %140, %138, %cst_108 {dimension_numbers = #tpu.dot_dimension_numbers<[1], [0], [0], [1], [0, 0, 1, 1], [], []>} : vector<16x16xf32>, vector<16x256xf32>, vector<16x256xf32> -> vector<16x256xf32>
    %142 = arith.addf %134, %141 : vector<16x256xf32>
    %c0_109 = arith.constant 0 : index
    %c144_110 = arith.constant 144 : index
    %143 = vector.load %arg16[%c0_109, %c144_110] : memref<16x512xf32, #tpu.memory_space<vmem>>, vector<16x256xf32>
    %144 = vector.extract_strided_slice %4 {offsets = [7, 0], sizes = [1, 256], strides = [1, 1]} : vector<9x256xf32> to vector<1x256xf32>
    %145 = vector.broadcast %144 : vector<1x256xf32> to vector<16x256xf32>
    %146 = arith.mulf %143, %145 : vector<16x256xf32>
    %c0_111 = arith.constant 0 : index
    %c7_112 = arith.constant 7 : index
    %c0_113 = arith.constant 0 : index
    %c0_114 = arith.constant 0 : index
    %147 = vector.load %arg7[%c0_111, %c7_112, %c0_113, %c0_114] : memref<1x9x16x16xf32, #tpu.memory_space<vmem>>, vector<1x1x16x16xf32>
    %148 = vector.shape_cast %147 : vector<1x1x16x16xf32> to vector<16x16xf32>
    %cst_115 = arith.constant dense<0.000000e+00> : vector<16x256xf32>
    %149 = tpu.matmul %148, %146, %cst_115 {dimension_numbers = #tpu.dot_dimension_numbers<[1], [0], [0], [1], [0, 0, 1, 1], [], []>} : vector<16x16xf32>, vector<16x256xf32>, vector<16x256xf32> -> vector<16x256xf32>
    %150 = arith.addf %142, %149 : vector<16x256xf32>
    %c0_116 = arith.constant 0 : index
    %c145_117 = arith.constant 145 : index
    %151 = vector.load %arg16[%c0_116, %c145_117] : memref<16x512xf32, #tpu.memory_space<vmem>>, vector<16x256xf32>
    %152 = vector.extract_strided_slice %4 {offsets = [8, 0], sizes = [1, 256], strides = [1, 1]} : vector<9x256xf32> to vector<1x256xf32>
    %153 = vector.broadcast %152 : vector<1x256xf32> to vector<16x256xf32>
    %154 = arith.mulf %151, %153 : vector<16x256xf32>
    %c0_118 = arith.constant 0 : index
    %c8_119 = arith.constant 8 : index
    %c0_120 = arith.constant 0 : index
    %c0_121 = arith.constant 0 : index
    %155 = vector.load %arg7[%c0_118, %c8_119, %c0_120, %c0_121] : memref<1x9x16x16xf32, #tpu.memory_space<vmem>>, vector<1x1x16x16xf32>
    %156 = vector.shape_cast %155 : vector<1x1x16x16xf32> to vector<16x16xf32>
    %cst_122 = arith.constant dense<0.000000e+00> : vector<16x256xf32>
    %157 = tpu.matmul %156, %154, %cst_122 {dimension_numbers = #tpu.dot_dimension_numbers<[1], [0], [0], [1], [0, 0, 1, 1], [], []>} : vector<16x16xf32>, vector<16x256xf32>, vector<16x256xf32> -> vector<16x256xf32>
    %158 = arith.addf %150, %157 : vector<16x256xf32>
    %c0_123 = arith.constant 0 : index
    %c0_124 = arith.constant 0 : index
    %c0_125 = arith.constant 0 : index
    %159 = vector.load %arg8[%c0_123, %c0_124, %c0_125] : memref<1x16x1xf32, #tpu.memory_space<vmem>>, vector<1x16x1xf32>
    %160 = vector.shape_cast %159 : vector<1x16x1xf32> to vector<16x1xf32>
    %161 = vector.broadcast %160 : vector<16x1xf32> to vector<16x256xf32>
    %162 = arith.addf %158, %161 : vector<16x256xf32>
    %cst_126 = arith.constant dense<0.000000e+00> : vector<16xf32>
    %163 = vector.multi_reduction <add>, %162, %cst_126 [1] : vector<16x256xf32> to vector<16xf32>
    %164 = vector.shape_cast %163 : vector<16xf32> to vector<16x1xf32>
    %cst_127 = arith.constant 2.560000e+02 : f32
    %165 = vector.broadcast %cst_127 : f32 to vector<16x1xf32>
    %166 = arith.divf %164, %165 : vector<16x1xf32>
    %c0_128 = arith.constant 0 : index
    %c0_129 = arith.constant 0 : index
    %c0_130 = arith.constant 0 : index
    %167 = vector.load %arg9[%c0_128, %c0_129, %c0_130] : memref<1x16x16xf32, #tpu.memory_space<vmem>>, vector<1x16x16xf32>
    %168 = vector.shape_cast %167 : vector<1x16x16xf32> to vector<16x16xf32>
    %cst_131 = arith.constant dense<0.000000e+00> : vector<16x1xf32>
    %169 = tpu.matmul %168, %166, %cst_131 {dimension_numbers = #tpu.dot_dimension_numbers<[1], [0], [0], [1], [0, 0, 1, 1], [], []>} : vector<16x16xf32>, vector<16x1xf32>, vector<16x1xf32> -> vector<16x1xf32>
    %170 = arith.negf %169 : vector<16x1xf32>
    %171 = math.exp %170 : vector<16x1xf32>
    %cst_132 = arith.constant 1.000000e+00 : f32
    %172 = vector.broadcast %cst_132 : f32 to vector<16x1xf32>
    %173 = arith.addf %172, %171 : vector<16x1xf32>
    %174 = arith.divf %172, %173 : vector<16x1xf32>
    %175 = vector.broadcast %174 : vector<16x1xf32> to vector<16x256xf32>
    %176 = arith.mulf %162, %175 : vector<16x256xf32>
    %c0_133 = arith.constant 0 : index
    %c0_134 = arith.constant 0 : index
    %c0_135 = arith.constant 0 : index
    %177 = vector.load %arg10[%c0_133, %c0_134, %c0_135] : memref<1x2x16xf32, #tpu.memory_space<vmem>>, vector<1x2x16xf32>
    %178 = vector.shape_cast %177 : vector<1x2x16xf32> to vector<2x16xf32>
    %cst_136 = arith.constant dense<0.000000e+00> : vector<2x256xf32>
    %179 = tpu.matmul %178, %176, %cst_136 {dimension_numbers = #tpu.dot_dimension_numbers<[1], [0], [0], [1], [0, 0, 1, 1], [], []>} : vector<2x16xf32>, vector<16x256xf32>, vector<2x256xf32> -> vector<2x256xf32>
    %c0_137 = arith.constant 0 : index
    %c0_138 = arith.constant 0 : index
    %c0_139 = arith.constant 0 : index
    %180 = vector.load %arg11[%c0_137, %c0_138, %c0_139] : memref<1x2x1xf32, #tpu.memory_space<vmem>>, vector<1x2x1xf32>
    %181 = vector.shape_cast %180 : vector<1x2x1xf32> to vector<2x1xf32>
    %182 = vector.broadcast %181 : vector<2x1xf32> to vector<2x256xf32>
    %183 = arith.addf %179, %182 : vector<2x256xf32>
    %cst_140 = arith.constant 0.000000e+00 : f32
    %184 = vector.broadcast %cst_140 : f32 to vector<2x256xf32>
    %185 = arith.cmpf ogt, %183, %184 : vector<2x256xf32>
    %186 = vector.broadcast %8 : f32 to vector<2x256xf32>
    %187 = arith.mulf %186, %183 : vector<2x256xf32>
    %188 = arith.select %185, %183, %187 : vector<2x256xi1>, vector<2x256xf32>
    %c0_141 = arith.constant 0 : index
    %c0_142 = arith.constant 0 : index
    %c0_143 = arith.constant 0 : index
    %189 = vector.load %arg12[%c0_141, %c0_142, %c0_143] : memref<1x2x1xf32, #tpu.memory_space<vmem>>, vector<1x2x1xf32>
    %190 = vector.shape_cast %189 : vector<1x2x1xf32> to vector<2x1xf32>
    %191 = vector.broadcast %190 : vector<2x1xf32> to vector<2x256xf32>
    %192 = arith.mulf %191, %188 : vector<2x256xf32>
    %cst_144 = arith.constant dense<0.000000e+00> : vector<256xf32>
    %193 = vector.multi_reduction <add>, %192, %cst_144 [0] : vector<2x256xf32> to vector<256xf32>
    %194 = vector.shape_cast %193 : vector<256xf32> to vector<1x256xf32>
    %195 = vector.broadcast %10 : f32 to vector<1x256xf32>
    %196 = arith.addf %194, %195 : vector<1x256xf32>
    %197 = arith.negf %196 : vector<1x256xf32>
    %198 = math.exp %197 : vector<1x256xf32>
    %cst_145 = arith.constant 1.000000e+00 : f32
    %199 = vector.broadcast %cst_145 : f32 to vector<1x256xf32>
    %200 = arith.addf %199, %198 : vector<1x256xf32>
    %201 = arith.divf %199, %200 : vector<1x256xf32>
    %202 = vector.broadcast %201 : vector<1x256xf32> to vector<16x256xf32>
    %203 = arith.mulf %176, %202 : vector<16x256xf32>
    %204 = arith.addf %203, %3 : vector<16x256xf32>
    %c0_146 = arith.constant 0 : index
    %c0_147 = arith.constant 0 : index
    %205 = vector.load %arg17[%c0_146, %c0_147] : memref<16x256xf32, #tpu.memory_space<vmem>>, vector<16x256xf32>
    tpu.vector_store %arg17[%c0_146, %c0_147], %204 {strides = array<i32>} : memref<16x256xf32, #tpu.memory_space<vmem>>, vector<16x256xf32>,
    %c1_i32 = arith.constant 1 : i32
    %206 = arith.cmpi eq, %arg1, %c1_i32 : i32
    %207 = arith.extui %206 : i1 to i32
    %c0_i32_148 = arith.constant 0 : i32
    %208 = arith.cmpi ne, %207, %c0_i32_148 : i32
    scf.if %208 {
      %c0_149 = arith.constant 0 : index
      %c128_150 = arith.constant 128 : index
      %209 = vector.load %arg16[%c0_149, %c128_150] : memref<16x512xf32, #tpu.memory_space<vmem>>, vector<16x256xf32>
      tpu.vector_store %arg16[%c0_149, %c128_150], %204 {strides = array<i32>} : memref<16x512xf32, #tpu.memory_space<vmem>>, vector<16x256xf32>,
      %c0_151 = arith.constant 0 : index
      %c111_152 = arith.constant 111 : index
      %210 = vector.load %arg16[%c0_151, %c111_152] : memref<16x512xf32, #tpu.memory_space<vmem>>, vector<16x256xf32>
      %211 = vector.extract_strided_slice %4 {offsets = [0, 0], sizes = [1, 256], strides = [1, 1]} : vector<9x256xf32> to vector<1x256xf32>
      %212 = vector.broadcast %211 : vector<1x256xf32> to vector<16x256xf32>
      %213 = arith.mulf %210, %212 : vector<16x256xf32>
      %c0_153 = arith.constant 0 : index
      %c0_154 = arith.constant 0 : index
      %c0_155 = arith.constant 0 : index
      %214 = vector.load %arg13[%c0_153, %c0_154, %c0_155] : memref<9x16x16xf32, #tpu.memory_space<vmem>>, vector<1x16x16xf32>
      %215 = vector.shape_cast %214 : vector<1x16x16xf32> to vector<16x16xf32>
      %cst_156 = arith.constant dense<0.000000e+00> : vector<16x256xf32>
      %216 = tpu.matmul %215, %213, %cst_156 {dimension_numbers = #tpu.dot_dimension_numbers<[1], [0], [0], [1], [0, 0, 1, 1], [], []>} : vector<16x16xf32>, vector<16x256xf32>, vector<16x256xf32> -> vector<16x256xf32>
      %c0_157 = arith.constant 0 : index
      %c112_158 = arith.constant 112 : index
      %217 = vector.load %arg16[%c0_157, %c112_158] : memref<16x512xf32, #tpu.memory_space<vmem>>, vector<16x256xf32>
      %218 = vector.extract_strided_slice %4 {offsets = [1, 0], sizes = [1, 256], strides = [1, 1]} : vector<9x256xf32> to vector<1x256xf32>
      %219 = vector.broadcast %218 : vector<1x256xf32> to vector<16x256xf32>
      %220 = arith.mulf %217, %219 : vector<16x256xf32>
      %c1_159 = arith.constant 1 : index
      %c0_160 = arith.constant 0 : index
      %c0_161 = arith.constant 0 : index
      %221 = vector.load %arg13[%c1_159, %c0_160, %c0_161] : memref<9x16x16xf32, #tpu.memory_space<vmem>>, vector<1x16x16xf32>
      %222 = vector.shape_cast %221 : vector<1x16x16xf32> to vector<16x16xf32>
      %cst_162 = arith.constant dense<0.000000e+00> : vector<16x256xf32>
      %223 = tpu.matmul %222, %220, %cst_162 {dimension_numbers = #tpu.dot_dimension_numbers<[1], [0], [0], [1], [0, 0, 1, 1], [], []>} : vector<16x16xf32>, vector<16x256xf32>, vector<16x256xf32> -> vector<16x256xf32>
      %224 = arith.addf %216, %223 : vector<16x256xf32>
      %c0_163 = arith.constant 0 : index
      %c113_164 = arith.constant 113 : index
      %225 = vector.load %arg16[%c0_163, %c113_164] : memref<16x512xf32, #tpu.memory_space<vmem>>, vector<16x256xf32>
      %226 = vector.extract_strided_slice %4 {offsets = [2, 0], sizes = [1, 256], strides = [1, 1]} : vector<9x256xf32> to vector<1x256xf32>
      %227 = vector.broadcast %226 : vector<1x256xf32> to vector<16x256xf32>
      %228 = arith.mulf %225, %227 : vector<16x256xf32>
      %c2_165 = arith.constant 2 : index
      %c0_166 = arith.constant 0 : index
      %c0_167 = arith.constant 0 : index
      %229 = vector.load %arg13[%c2_165, %c0_166, %c0_167] : memref<9x16x16xf32, #tpu.memory_space<vmem>>, vector<1x16x16xf32>
      %230 = vector.shape_cast %229 : vector<1x16x16xf32> to vector<16x16xf32>
      %cst_168 = arith.constant dense<0.000000e+00> : vector<16x256xf32>
      %231 = tpu.matmul %230, %228, %cst_168 {dimension_numbers = #tpu.dot_dimension_numbers<[1], [0], [0], [1], [0, 0, 1, 1], [], []>} : vector<16x16xf32>, vector<16x256xf32>, vector<16x256xf32> -> vector<16x256xf32>
      %232 = arith.addf %224, %231 : vector<16x256xf32>
      %c0_169 = arith.constant 0 : index
      %c127_170 = arith.constant 127 : index
      %233 = vector.load %arg16[%c0_169, %c127_170] : memref<16x512xf32, #tpu.memory_space<vmem>>, vector<16x256xf32>
      %234 = vector.extract_strided_slice %4 {offsets = [3, 0], sizes = [1, 256], strides = [1, 1]} : vector<9x256xf32> to vector<1x256xf32>
      %235 = vector.broadcast %234 : vector<1x256xf32> to vector<16x256xf32>
      %236 = arith.mulf %233, %235 : vector<16x256xf32>
      %c3_171 = arith.constant 3 : index
      %c0_172 = arith.constant 0 : index
      %c0_173 = arith.constant 0 : index
      %237 = vector.load %arg13[%c3_171, %c0_172, %c0_173] : memref<9x16x16xf32, #tpu.memory_space<vmem>>, vector<1x16x16xf32>
      %238 = vector.shape_cast %237 : vector<1x16x16xf32> to vector<16x16xf32>
      %cst_174 = arith.constant dense<0.000000e+00> : vector<16x256xf32>
      %239 = tpu.matmul %238, %236, %cst_174 {dimension_numbers = #tpu.dot_dimension_numbers<[1], [0], [0], [1], [0, 0, 1, 1], [], []>} : vector<16x16xf32>, vector<16x256xf32>, vector<16x256xf32> -> vector<16x256xf32>
      %240 = arith.addf %232, %239 : vector<16x256xf32>
      %c0_175 = arith.constant 0 : index
      %c128_176 = arith.constant 128 : index
      %241 = vector.load %arg16[%c0_175, %c128_176] : memref<16x512xf32, #tpu.memory_space<vmem>>, vector<16x256xf32>
      %c4_177 = arith.constant 4 : index
      %c0_178 = arith.constant 0 : index
      %c0_179 = arith.constant 0 : index
      %242 = vector.load %arg13[%c4_177, %c0_178, %c0_179] : memref<9x16x16xf32, #tpu.memory_space<vmem>>, vector<1x16x16xf32>
      %243 = vector.shape_cast %242 : vector<1x16x16xf32> to vector<16x16xf32>
      %cst_180 = arith.constant dense<0.000000e+00> : vector<16x256xf32>
      %244 = tpu.matmul %243, %241, %cst_180 {dimension_numbers = #tpu.dot_dimension_numbers<[1], [0], [0], [1], [0, 0, 1, 1], [], []>} : vector<16x16xf32>, vector<16x256xf32>, vector<16x256xf32> -> vector<16x256xf32>
      %245 = arith.addf %240, %244 : vector<16x256xf32>
      %c0_181 = arith.constant 0 : index
      %c129_182 = arith.constant 129 : index
      %246 = vector.load %arg16[%c0_181, %c129_182] : memref<16x512xf32, #tpu.memory_space<vmem>>, vector<16x256xf32>
      %247 = vector.extract_strided_slice %4 {offsets = [5, 0], sizes = [1, 256], strides = [1, 1]} : vector<9x256xf32> to vector<1x256xf32>
      %248 = vector.broadcast %247 : vector<1x256xf32> to vector<16x256xf32>
      %249 = arith.mulf %246, %248 : vector<16x256xf32>
      %c5_183 = arith.constant 5 : index
      %c0_184 = arith.constant 0 : index
      %c0_185 = arith.constant 0 : index
      %250 = vector.load %arg13[%c5_183, %c0_184, %c0_185] : memref<9x16x16xf32, #tpu.memory_space<vmem>>, vector<1x16x16xf32>
      %251 = vector.shape_cast %250 : vector<1x16x16xf32> to vector<16x16xf32>
      %cst_186 = arith.constant dense<0.000000e+00> : vector<16x256xf32>
      %252 = tpu.matmul %251, %249, %cst_186 {dimension_numbers = #tpu.dot_dimension_numbers<[1], [0], [0], [1], [0, 0, 1, 1], [], []>} : vector<16x16xf32>, vector<16x256xf32>, vector<16x256xf32> -> vector<16x256xf32>
      %253 = arith.addf %245, %252 : vector<16x256xf32>
      %c0_187 = arith.constant 0 : index
      %c143_188 = arith.constant 143 : index
      %254 = vector.load %arg16[%c0_187, %c143_188] : memref<16x512xf32, #tpu.memory_space<vmem>>, vector<16x256xf32>
      %255 = vector.extract_strided_slice %4 {offsets = [6, 0], sizes = [1, 256], strides = [1, 1]} : vector<9x256xf32> to vector<1x256xf32>
      %256 = vector.broadcast %255 : vector<1x256xf32> to vector<16x256xf32>
      %257 = arith.mulf %254, %256 : vector<16x256xf32>
      %c6_189 = arith.constant 6 : index
      %c0_190 = arith.constant 0 : index
      %c0_191 = arith.constant 0 : index
      %258 = vector.load %arg13[%c6_189, %c0_190, %c0_191] : memref<9x16x16xf32, #tpu.memory_space<vmem>>, vector<1x16x16xf32>
      %259 = vector.shape_cast %258 : vector<1x16x16xf32> to vector<16x16xf32>
      %cst_192 = arith.constant dense<0.000000e+00> : vector<16x256xf32>
      %260 = tpu.matmul %259, %257, %cst_192 {dimension_numbers = #tpu.dot_dimension_numbers<[1], [0], [0], [1], [0, 0, 1, 1], [], []>} : vector<16x16xf32>, vector<16x256xf32>, vector<16x256xf32> -> vector<16x256xf32>
      %261 = arith.addf %253, %260 : vector<16x256xf32>
      %c0_193 = arith.constant 0 : index
      %c144_194 = arith.constant 144 : index
      %262 = vector.load %arg16[%c0_193, %c144_194] : memref<16x512xf32, #tpu.memory_space<vmem>>, vector<16x256xf32>
      %263 = vector.extract_strided_slice %4 {offsets = [7, 0], sizes = [1, 256], strides = [1, 1]} : vector<9x256xf32> to vector<1x256xf32>
      %264 = vector.broadcast %263 : vector<1x256xf32> to vector<16x256xf32>
      %265 = arith.mulf %262, %264 : vector<16x256xf32>
      %c7_195 = arith.constant 7 : index
      %c0_196 = arith.constant 0 : index
      %c0_197 = arith.constant 0 : index
      %266 = vector.load %arg13[%c7_195, %c0_196, %c0_197] : memref<9x16x16xf32, #tpu.memory_space<vmem>>, vector<1x16x16xf32>
      %267 = vector.shape_cast %266 : vector<1x16x16xf32> to vector<16x16xf32>
      %cst_198 = arith.constant dense<0.000000e+00> : vector<16x256xf32>
      %268 = tpu.matmul %267, %265, %cst_198 {dimension_numbers = #tpu.dot_dimension_numbers<[1], [0], [0], [1], [0, 0, 1, 1], [], []>} : vector<16x16xf32>, vector<16x256xf32>, vector<16x256xf32> -> vector<16x256xf32>
      %269 = arith.addf %261, %268 : vector<16x256xf32>
      %c0_199 = arith.constant 0 : index
      %c145_200 = arith.constant 145 : index
      %270 = vector.load %arg16[%c0_199, %c145_200] : memref<16x512xf32, #tpu.memory_space<vmem>>, vector<16x256xf32>
      %271 = vector.extract_strided_slice %4 {offsets = [8, 0], sizes = [1, 256], strides = [1, 1]} : vector<9x256xf32> to vector<1x256xf32>
      %272 = vector.broadcast %271 : vector<1x256xf32> to vector<16x256xf32>
      %273 = arith.mulf %270, %272 : vector<16x256xf32>
      %c8_201 = arith.constant 8 : index
      %c0_202 = arith.constant 0 : index
      %c0_203 = arith.constant 0 : index
      %274 = vector.load %arg13[%c8_201, %c0_202, %c0_203] : memref<9x16x16xf32, #tpu.memory_space<vmem>>, vector<1x16x16xf32>
      %275 = vector.shape_cast %274 : vector<1x16x16xf32> to vector<16x16xf32>
      %cst_204 = arith.constant dense<0.000000e+00> : vector<16x256xf32>
      %276 = tpu.matmul %275, %273, %cst_204 {dimension_numbers = #tpu.dot_dimension_numbers<[1], [0], [0], [1], [0, 0, 1, 1], [], []>} : vector<16x16xf32>, vector<16x256xf32>, vector<16x256xf32> -> vector<16x256xf32>
      %277 = arith.addf %269, %276 : vector<16x256xf32>
      %c0_205 = arith.constant 0 : index
      %c0_206 = arith.constant 0 : index
      %278 = vector.load %arg14[%c0_205, %c0_206] : memref<16x1xf32, #tpu.memory_space<vmem>>, vector<16x1xf32>
      %279 = vector.broadcast %278 : vector<16x1xf32> to vector<16x256xf32>
      %280 = arith.addf %277, %279 : vector<16x256xf32>
      %c0_207 = arith.constant 0 : index
      %c0_208 = arith.constant 0 : index
      %c0_209 = arith.constant 0 : index
      %281 = vector.load %arg2[%c0_207, %c0_208, %c0_209] : memref<1x16x256xf32, #tpu.memory_space<vmem>>, vector<1x16x256xf32>
      %282 = vector.shape_cast %281 : vector<1x16x256xf32> to vector<16x256xf32>
      %283 = arith.addf %280, %282 : vector<16x256xf32>
      %c0_210 = arith.constant 0 : index
      %c0_211 = arith.constant 0 : index
      %c0_212 = arith.constant 0 : index
      %284 = vector.load %arg15[%c0_210, %c0_211, %c0_212] : memref<1x16x256xf32, #tpu.memory_space<vmem>>, vector<1x16x256xf32>
      %285 = vector.shape_cast %284 : vector<1x16x256xf32> to vector<16x256xf32>
      %286 = vector.shape_cast %283 : vector<16x256xf32> to vector<1x16x256xf32>
      tpu.vector_store %arg15[%c0_210, %c0_211, %c0_212], %286 {strides = array<i32>} : memref<1x16x256xf32, #tpu.memory_space<vmem>>, vector<1x16x256xf32>,
    } else {
    }
    return
  }
  func.func @transform_0(%arg0: i32, %arg1: i32) -> (i32, i32, i32) {
    %c0_i32 = arith.constant 0 : i32
    %c0_i32_0 = arith.constant 0 : i32
    %c0_i32_1 = arith.constant 0 : i32
    return %arg0, %c0_i32, %c0_i32_0 : i32, i32, i32
  }
  func.func @transform_1(%arg0: i32, %arg1: i32) -> (i32, i32) {
    %c0_i32 = arith.constant 0 : i32
    %c0_i32_0 = arith.constant 0 : i32
    %c0_i32_1 = arith.constant 0 : i32
    return %c0_i32, %c0_i32_0 : i32, i32
  }
  func.func @transform_2(%arg0: i32, %arg1: i32) -> (i32, i32) {
    %c0_i32 = arith.constant 0 : i32
    %c0_i32_0 = arith.constant 0 : i32
    %c0_i32_1 = arith.constant 0 : i32
    return %c0_i32, %c0_i32_0 : i32, i32
  }
  func.func @transform_3(%arg0: i32, %arg1: i32) -> (i32, i32, i32, i32) {
    %c0_i32 = arith.constant 0 : i32
    %c0_i32_0 = arith.constant 0 : i32
    %c0_i32_1 = arith.constant 0 : i32
    %c0_i32_2 = arith.constant 0 : i32
    return %arg1, %c0_i32, %c0_i32_0, %c0_i32_1 : i32, i32, i32, i32
  }
  func.func @transform_4(%arg0: i32, %arg1: i32) -> (i32, i32, i32) {
    %c0_i32 = arith.constant 0 : i32
    %c0_i32_0 = arith.constant 0 : i32
    %c0_i32_1 = arith.constant 0 : i32
    return %arg1, %c0_i32, %c0_i32_0 : i32, i32, i32
  }
  func.func @transform_5(%arg0: i32, %arg1: i32) -> (i32, i32, i32, i32) {
    %c0_i32 = arith.constant 0 : i32
    %c0_i32_0 = arith.constant 0 : i32
    %c0_i32_1 = arith.constant 0 : i32
    %c0_i32_2 = arith.constant 0 : i32
    return %arg1, %c0_i32, %c0_i32_0, %c0_i32_1 : i32, i32, i32, i32
  }
  func.func @transform_6(%arg0: i32, %arg1: i32) -> (i32, i32, i32) {
    %c0_i32 = arith.constant 0 : i32
    %c0_i32_0 = arith.constant 0 : i32
    %c0_i32_1 = arith.constant 0 : i32
    return %arg1, %c0_i32, %c0_i32_0 : i32, i32, i32
  }
  func.func @transform_7(%arg0: i32, %arg1: i32) -> (i32, i32, i32) {
    %c0_i32 = arith.constant 0 : i32
    %c0_i32_0 = arith.constant 0 : i32
    %c0_i32_1 = arith.constant 0 : i32
    return %arg1, %c0_i32, %c0_i32_0 : i32, i32, i32
  }
  func.func @transform_8(%arg0: i32, %arg1: i32) -> (i32, i32, i32) {
    %c0_i32 = arith.constant 0 : i32
    %c0_i32_0 = arith.constant 0 : i32
    %c0_i32_1 = arith.constant 0 : i32
    return %arg1, %c0_i32, %c0_i32_0 : i32, i32, i32
  }
  func.func @transform_9(%arg0: i32, %arg1: i32) -> (i32, i32, i32) {
    %c0_i32 = arith.constant 0 : i32
    %c0_i32_0 = arith.constant 0 : i32
    %c0_i32_1 = arith.constant 0 : i32
    return %arg1, %c0_i32, %c0_i32_0 : i32, i32, i32
  }
  func.func @transform_10(%arg0: i32, %arg1: i32) -> (i32, i32, i32) {
    %c0_i32 = arith.constant 0 : i32
    %c0_i32_0 = arith.constant 0 : i32
    %c0_i32_1 = arith.constant 0 : i32
    return %arg1, %c0_i32, %c0_i32_0 : i32, i32, i32
  }
  func.func @transform_11(%arg0: i32, %arg1: i32) -> (i32, i32, i32) {
    %c0_i32 = arith.constant 0 : i32
    %c0_i32_0 = arith.constant 0 : i32
    %c0_i32_1 = arith.constant 0 : i32
    %c0_i32_2 = arith.constant 0 : i32
    return %c0_i32, %c0_i32_0, %c0_i32_1 : i32, i32, i32
  }
  func.func @transform_12(%arg0: i32, %arg1: i32) -> (i32, i32) {
    %c0_i32 = arith.constant 0 : i32
    %c0_i32_0 = arith.constant 0 : i32
    %c0_i32_1 = arith.constant 0 : i32
    return %c0_i32, %c0_i32_0 : i32, i32
  }
  func.func @transform_13(%arg0: i32, %arg1: i32) -> (i32, i32, i32) {
    %c0_i32 = arith.constant 0 : i32
    %c0_i32_0 = arith.constant 0 : i32
    %c0_i32_1 = arith.constant 0 : i32
    return %arg0, %c0_i32, %c0_i32_0 : i32, i32, i32
  }
}

</mosaic_0001>

<llo_original>
// kernel: group_forward_pallas.1
$region0: #{group_forward_pallas.1}
  #allocation0 [shape = 'u32[]', space=smem, size = 0x4, offset = 0x4, fixed_abs, tag = 'smem constant byte address 0x4 - core index']
  #allocation1 [shape = 'u32[72,128]{1,0:T(1,128)}', space=vmem, size = 0x9000, scoped, tag = 'internal scratch']
  #allocation2 [shape = 'f32[16,512]{1,0:T(8,128)}', space=vmem, size = 0x8000, scoped, tag = 'scratch operand']
  #allocation3 [shape = 'f32[16,256]{1,0:T(8,128)}', space=vmem, size = 0x4000, scoped, tag = 'scratch operand']
  %s0 = inlined_call_operand.vmem [shape: f32[2,16,256], index: 0, kind: input, shape index: {}]
  %s1 = inlined_call_operand.vmem [shape: f32[9,256], index: 1, kind: input, shape index: {}]
  %s2 = inlined_call_operand.vmem [shape: f32[2,3], index: 2, kind: input, shape index: {}]
  %s3 = inlined_call_operand.vmem [shape: f32[2,9,16,16], index: 3, kind: input, shape index: {}]
  %s4 = inlined_call_operand.vmem [shape: f32[2,16,1], index: 4, kind: input, shape index: {}]
  %s5 = inlined_call_operand.vmem [shape: f32[2,9,16,16], index: 5, kind: input, shape index: {}]
  %s6 = inlined_call_operand.vmem [shape: f32[2,16,1], index: 6, kind: input, shape index: {}]
  %s7 = inlined_call_operand.vmem [shape: f32[2,16,16], index: 7, kind: input, shape index: {}]
  %s8 = inlined_call_operand.vmem [shape: f32[2,2,16], index: 8, kind: input, shape index: {}]
  %s9 = inlined_call_operand.vmem [shape: f32[2,2,1], index: 9, kind: input, shape index: {}]
  %s10 = inlined_call_operand.vmem [shape: f32[2,2,1], index: 10, kind: input, shape index: {}]
  %s11 = inlined_call_operand.vmem [shape: f32[9,16,16], index: 11, kind: input, shape index: {}]
  %s12 = inlined_call_operand.vmem [shape: f32[16,1], index: 12, kind: input, shape index: {}]
  %s13 = inlined_call_operand.vmem [shape: f32[2,16,256], index: 13, kind: output, shape index: {}]
  %s14 = sld [smem:[#allocation0]]
  $region97: #{group_forward_pallas.1} parent=0
    _
  %s16 = ssub.s32 1, %s14
  %s17 = scalar_select 0, %s16, %s14
  $region1: #{group_forward_pallas.1} parent=0
    #allocation4 [shape = 'u8[1024]{0}', space=smem, size = 0x400, scoped, tag = 'input window, operand 2, single buffered']
    #allocation5 [shape = 's32[2]{0}', space=sflag, size = 0x8, scoped, tag = 'scoped memory for group_forward_pallas.1']
    %18 = vsyncpa [#allocation5], 0
    loop: start=0, step=1, limit=6
    $region2: #{group_forward_pallas.1} parent=1 // loop_pre_header
      _
    $region3: #{group_forward_pallas.1} parent=1 // loop_header
      %s20 = sphi 0, %s24
      %p21 = scmp.ge.s32.totalorder %s20, 6
      %s27 = sphi 0, %s39
      %s28 = sphi 0, %s35
      %s29 = sphi 0, %s27
      %s30 = sphi 0, %s28
      %s31 = sphi 0, %s29
      %s32 = sphi 0, %s30
      %s42 = sphi 0, %s44
      %s45 = sphi 0, %s42
      %s46 = sphi 0, %s45
      %s62 = sphi 0, %s46
      %s66 = sphi 0, %s66
      %s68 = sphi 0, %s66
      %s69 = sphi 0, %s68
      %s83 = sphi 0, %s69
      %s87 = sphi 0, %s87
      %s89 = sphi 0, %s87
      %s90 = sphi 0, %s89
      %s104 = sphi 0, %s90
      %s110 = sphi 0, %s112
      %s113 = sphi 0, %s110
      %s114 = sphi 0, %s113
      %s130 = sphi 0, %s114
      %s136 = sphi 0, %s138
      %s139 = sphi 0, %s136
      %s140 = sphi 0, %s139
      %s156 = sphi 0, %s140
      %s162 = sphi 0, %s164
      %s165 = sphi 0, %s162
      %s166 = sphi 0, %s165
      %s182 = sphi 0, %s166
      %s188 = sphi 0, %s190
      %s191 = sphi 0, %s188
      %s192 = sphi 0, %s191
      %s208 = sphi 0, %s192
      %s214 = sphi 0, %s216
      %s217 = sphi 0, %s214
      %s218 = sphi 0, %s217
      %s234 = sphi 0, %s218
      %s240 = sphi 0, %s242
      %s243 = sphi 0, %s240
      %s244 = sphi 0, %s243
      %s260 = sphi 0, %s244
      %s266 = sphi 0, %s268
      %s269 = sphi 0, %s266
      %s270 = sphi 0, %s269
      %s286 = sphi 0, %s270
      %s292 = sphi 0, %s294
      %s295 = sphi 0, %s292
      %s296 = sphi 0, %s295
      %s312 = sphi 0, %s296
      %s316 = sphi 0, %s316
      %s318 = sphi 0, %s316
      %s319 = sphi 0, %s318
      %s333 = sphi 0, %s319
      %s337 = sphi 0, %s337
      %s339 = sphi 0, %s337
      %s340 = sphi 0, %s339
      %s354 = sphi 0, %s340
      %s360 = sphi 0, %s362
      %s363 = sphi 0, %s360
      %s364 = sphi 0, %s363
      %s380 = sphi 0, %s364
    $region4: #{group_forward_pallas.1} parent=1 // loop_header_branch
      %23 = sbr.rel (%p21) target = $region8
    $region5: #{group_forward_pallas.1} parent=1 // loop_body
      %s25 = ssub.s32 %s20, 1
      %s26 = ssub.s32 %s20, 2
      %s33 = sadd.s32 1, %s28
      %p34 = scmp.ge.s32.totalorder %s33, 2
      %s35 = scalar_select %p34, 0, %s33
      %s36 = sadd.s32 1, %s27
      %s37 = scalar_select %p34, %s36, %s27
      %p38 = scmp.ge.s32.totalorder %s37, 2
      %s39 = scalar_select %p38, 0, %s37
      %s40 = ssub.s32 %s27, %s39
      %p41 = scmp.eq.s32.totalorder %s40, 0
      %s43 = sadd.s32 %s42, 1
      %s44 = scalar_select %p41, %s42, %s43
      %p47 = pneg %p41
      %p48 = scmp.eq.s32.totalorder %s20, 3
      %p49 = por %p47, %p48
      %p50 = scmp.ne.s32.totalorder %s42, %s45
      %p51 = scmp.eq.s32.totalorder %s20, 0
      %p52 = por %p50, %p51
      %p53 = scmp.ne.s32.totalorder %s42, %s45
      %p54 = scmp.eq.s32.totalorder %s25, 3
      %p55 = por %p53, %p54
      %p56 = scmp.ne.s32.totalorder %s45, %s46
      %p57 = scmp.eq.s32.totalorder %s25, 0
      %p58 = por %p56, %p57
      %p59 = scmp.ne.s32.totalorder %s45, %s46
      %p60 = scmp.eq.s32.totalorder %s26, 3
      %p61 = por %p59, %p60
      %p63 = scmp.ne.s32.totalorder %s46, %s62
      %p64 = scmp.eq.s32.totalorder %s26, 0
      %p65 = por %p63, %p64
      %s67 = sadd.s32 %s66, 1
      %p70 = scmp.eq.s32.totalorder %s20, 3
      %p71 = scmp.ne.s32.totalorder %s66, %s68
      %p72 = scmp.eq.s32.totalorder %s20, 0
      %p73 = por %p71, %p72
      %p74 = scmp.ne.s32.totalorder %s66, %s68
      %p75 = scmp.eq.s32.totalorder %s25, 3
      %p76 = por %p74, %p75
      %p77 = scmp.ne.s32.totalorder %s68, %s69
      %p78 = scmp.eq.s32.totalorder %s25, 0
      %p79 = por %p77, %p78
      %p80 = scmp.ne.s32.totalorder %s68, %s69
      %p81 = scmp.eq.s32.totalorder %s26, 3
      %p82 = por %p80, %p81
      %p84 = scmp.ne.s32.totalorder %s69, %s83
      %p85 = scmp.eq.s32.totalorder %s26, 0
      %p86 = por %p84, %p85
      %s88 = sadd.s32 %s87, 1
      %p91 = scmp.eq.s32.totalorder %s20, 3
      %p92 = scmp.ne.s32.totalorder %s87, %s89
      %p93 = scmp.eq.s32.totalorder %s20, 0
      %p94 = por %p92, %p93
      %p95 = scmp.ne.s32.totalorder %s87, %s89
      %p96 = scmp.eq.s32.totalorder %s25, 3
      %p97 = por %p95, %p96
      %p98 = scmp.ne.s32.totalorder %s89, %s90
      %p99 = scmp.eq.s32.totalorder %s25, 0
      %p100 = por %p98, %p99
      %p101 = scmp.ne.s32.totalorder %s89, %s90
      %p102 = scmp.eq.s32.totalorder %s26, 3
      %p103 = por %p101, %p102
      %p105 = scmp.ne.s32.totalorder %s90, %s104
      %p106 = scmp.eq.s32.totalorder %s26, 0
      %p107 = por %p105, %p106
      %s108 = ssub.s32 %s28, %s35
      %p109 = scmp.eq.s32.totalorder %s108, 0
      %s111 = sadd.s32 %s110, 1
      %s112 = scalar_select %p109, %s110, %s111
      %p115 = pneg %p109
      %p116 = scmp.eq.s32.totalorder %s20, 3
      %p117 = por %p115, %p116
      %p118 = scmp.ne.s32.totalorder %s110, %s113
      %p119 = scmp.eq.s32.totalorder %s20, 0
      %p120 = por %p118, %p119
      %p121 = scmp.ne.s32.totalorder %s110, %s113
      %p122 = scmp.eq.s32.totalorder %s25, 3
      %p123 = por %p121, %p122
      %p124 = scmp.ne.s32.totalorder %s113, %s114
      %p125 = scmp.eq.s32.totalorder %s25, 0
      %p126 = por %p124, %p125
      %p127 = scmp.ne.s32.totalorder %s113, %s114
      %p128 = scmp.eq.s32.totalorder %s26, 3
      %p129 = por %p127, %p128
      %p131 = scmp.ne.s32.totalorder %s114, %s130
      %p132 = scmp.eq.s32.totalorder %s26, 0
      %p133 = por %p131, %p132
      %s134 = ssub.s32 %s28, %s35
      %p135 = scmp.eq.s32.totalorder %s134, 0
      %s137 = sadd.s32 %s136, 1
      %s138 = scalar_select %p135, %s136, %s137
      %p141 = pneg %p135
      %p142 = scmp.eq.s32.totalorder %s20, 3
      %p143 = por %p141, %p142
      %p144 = scmp.ne.s32.totalorder %s136, %s139
      %p145 = scmp.eq.s32.totalorder %s20, 0
      %p146 = por %p144, %p145
      %p147 = scmp.ne.s32.totalorder %s136, %s139
      %p148 = scmp.eq.s32.totalorder %s25, 3
      %p149 = por %p147, %p148
      %p150 = scmp.ne.s32.totalorder %s139, %s140
      %p151 = scmp.eq.s32.totalorder %s25, 0
      %p152 = por %p150, %p151
      %p153 = scmp.ne.s32.totalorder %s139, %s140
      %p154 = scmp.eq.s32.totalorder %s26, 3
      %p155 = por %p153, %p154
      %p157 = scmp.ne.s32.totalorder %s140, %s156
      %p158 = scmp.eq.s32.totalorder %s26, 0
      %p159 = por %p157, %p158
      %s160 = ssub.s32 %s28, %s35
      %p161 = scmp.eq.s32.totalorder %s160, 0
      %s163 = sadd.s32 %s162, 1
      %s164 = scalar_select %p161, %s162, %s163
      %p167 = pneg %p161
      %p168 = scmp.eq.s32.totalorder %s20, 3
      %p169 = por %p167, %p168
      %p170 = scmp.ne.s32.totalorder %s162, %s165
      %p171 = scmp.eq.s32.totalorder %s20, 0
      %p172 = por %p170, %p171
      %p173 = scmp.ne.s32.totalorder %s162, %s165
      %p174 = scmp.eq.s32.totalorder %s25, 3
      %p175 = por %p173, %p174
      %p176 = scmp.ne.s32.totalorder %s165, %s166
      %p177 = scmp.eq.s32.totalorder %s25, 0
      %p178 = por %p176, %p177
      %p179 = scmp.ne.s32.totalorder %s165, %s166
      %p180 = scmp.eq.s32.totalorder %s26, 3
      %p181 = por %p179, %p180
      %p183 = scmp.ne.s32.totalorder %s166, %s182
      %p184 = scmp.eq.s32.totalorder %s26, 0
      %p185 = por %p183, %p184
      %s186 = ssub.s32 %s28, %s35
      %p187 = scmp.eq.s32.totalorder %s186, 0
      %s189 = sadd.s32 %s188, 1
      %s190 = scalar_select %p187, %s188, %s189
      %p193 = pneg %p187
      %p194 = scmp.eq.s32.totalorder %s20, 3
      %p195 = por %p193, %p194
      %p196 = scmp.ne.s32.totalorder %s188, %s191
      %p197 = scmp.eq.s32.totalorder %s20, 0
      %p198 = por %p196, %p197
      %p199 = scmp.ne.s32.totalorder %s188, %s191
      %p200 = scmp.eq.s32.totalorder %s25, 3
      %p201 = por %p199, %p200
      %p202 = scmp.ne.s32.totalorder %s191, %s192
      %p203 = scmp.eq.s32.totalorder %s25, 0
      %p204 = por %p202, %p203
      %p205 = scmp.ne.s32.totalorder %s191, %s192
      %p206 = scmp.eq.s32.totalorder %s26, 3
      %p207 = por %p205, %p206
      %p209 = scmp.ne.s32.totalorder %s192, %s208
      %p210 = scmp.eq.s32.totalorder %s26, 0
      %p211 = por %p209, %p210
      %s212 = ssub.s32 %s28, %s35
      %p213 = scmp.eq.s32.totalorder %s212, 0
      %s215 = sadd.s32 %s214, 1
      %s216 = scalar_select %p213, %s214, %s215
      %p219 = pneg %p213
      %p220 = scmp.eq.s32.totalorder %s20, 3
      %p221 = por %p219, %p220
      %p222 = scmp.ne.s32.totalorder %s214, %s217
      %p223 = scmp.eq.s32.totalorder %s20, 0
      %p224 = por %p222, %p223
      %p225 = scmp.ne.s32.totalorder %s214, %s217
      %p226 = scmp.eq.s32.totalorder %s25, 3
      %p227 = por %p225, %p226
      %p228 = scmp.ne.s32.totalorder %s217, %s218
      %p229 = scmp.eq.s32.totalorder %s25, 0
      %p230 = por %p228, %p229
      %p231 = scmp.ne.s32.totalorder %s217, %s218
      %p232 = scmp.eq.s32.totalorder %s26, 3
      %p233 = por %p231, %p232
      %p235 = scmp.ne.s32.totalorder %s218, %s234
      %p236 = scmp.eq.s32.totalorder %s26, 0
      %p237 = por %p235, %p236
      %s238 = ssub.s32 %s28, %s35
      %p239 = scmp.eq.s32.totalorder %s238, 0
      %s241 = sadd.s32 %s240, 1
      %s242 = scalar_select %p239, %s240, %s241
      %p245 = pneg %p239
      %p246 = scmp.eq.s32.totalorder %s20, 3
      %p247 = por %p245, %p246
      %p248 = scmp.ne.s32.totalorder %s240, %s243
      %p249 = scmp.eq.s32.totalorder %s20, 0
      %p250 = por %p248, %p249
      %p251 = scmp.ne.s32.totalorder %s240, %s243
      %p252 = scmp.eq.s32.totalorder %s25, 3
      %p253 = por %p251, %p252
      %p254 = scmp.ne.s32.totalorder %s243, %s244
      %p255 = scmp.eq.s32.totalorder %s25, 0
      %p256 = por %p254, %p255
      %p257 = scmp.ne.s32.totalorder %s243, %s244
      %p258 = scmp.eq.s32.totalorder %s26, 3
      %p259 = por %p257, %p258
      %p261 = scmp.ne.s32.totalorder %s244, %s260
      %p262 = scmp.eq.s32.totalorder %s26, 0
      %p263 = por %p261, %p262
      %s264 = ssub.s32 %s28, %s35
      %p265 = scmp.eq.s32.totalorder %s264, 0
      %s267 = sadd.s32 %s266, 1
      %s268 = scalar_select %p265, %s266, %s267
      %p271 = pneg %p265
      %p272 = scmp.eq.s32.totalorder %s20, 3
      %p273 = por %p271, %p272
      %p274 = scmp.ne.s32.totalorder %s266, %s269
      %p275 = scmp.eq.s32.totalorder %s20, 0
      %p276 = por %p274, %p275
      %p277 = scmp.ne.s32.totalorder %s266, %s269
      %p278 = scmp.eq.s32.totalorder %s25, 3
      %p279 = por %p277, %p278
      %p280 = scmp.ne.s32.totalorder %s269, %s270
      %p281 = scmp.eq.s32.totalorder %s25, 0
      %p282 = por %p280, %p281
      %p283 = scmp.ne.s32.totalorder %s269, %s270
      %p284 = scmp.eq.s32.totalorder %s26, 3
      %p285 = por %p283, %p284
      %p287 = scmp.ne.s32.totalorder %s270, %s286
      %p288 = scmp.eq.s32.totalorder %s26, 0
      %p289 = por %p287, %p288
      %s290 = ssub.s32 %s28, %s35
      %p291 = scmp.eq.s32.totalorder %s290, 0
      %s293 = sadd.s32 %s292, 1
      %s294 = scalar_select %p291, %s292, %s293
      %p297 = pneg %p291
      %p298 = scmp.eq.s32.totalorder %s20, 3
      %p299 = por %p297, %p298
      %p300 = scmp.ne.s32.totalorder %s292, %s295
      %p301 = scmp.eq.s32.totalorder %s20, 0
      %p302 = por %p300, %p301
      %p303 = scmp.ne.s32.totalorder %s292, %s295
      %p304 = scmp.eq.s32.totalorder %s25, 3
      %p305 = por %p303, %p304
      %p306 = scmp.ne.s32.totalorder %s295, %s296
      %p307 = scmp.eq.s32.totalorder %s25, 0
      %p308 = por %p306, %p307
      %p309 = scmp.ne.s32.totalorder %s295, %s296
      %p310 = scmp.eq.s32.totalorder %s26, 3
      %p311 = por %p309, %p310
      %p313 = scmp.ne.s32.totalorder %s296, %s312
      %p314 = scmp.eq.s32.totalorder %s26, 0
      %p315 = por %p313, %p314
      %s317 = sadd.s32 %s316, 1
      %p320 = scmp.eq.s32.totalorder %s20, 3
      %p321 = scmp.ne.s32.totalorder %s316, %s318
      %p322 = scmp.eq.s32.totalorder %s20, 0
      %p323 = por %p321, %p322
      %p324 = scmp.ne.s32.totalorder %s316, %s318
      %p325 = scmp.eq.s32.totalorder %s25, 3
      %p326 = por %p324, %p325
      %p327 = scmp.ne.s32.totalorder %s318, %s319
      %p328 = scmp.eq.s32.totalorder %s25, 0
      %p329 = por %p327, %p328
      %p330 = scmp.ne.s32.totalorder %s318, %s319
      %p331 = scmp.eq.s32.totalorder %s26, 3
      %p332 = por %p330, %p331
      %p334 = scmp.ne.s32.totalorder %s319, %s333
      %p335 = scmp.eq.s32.totalorder %s26, 0
      %p336 = por %p334, %p335
      %s338 = sadd.s32 %s337, 1
      %p341 = scmp.eq.s32.totalorder %s20, 3
      %p342 = scmp.ne.s32.totalorder %s337, %s339
      %p343 = scmp.eq.s32.totalorder %s20, 0
      %p344 = por %p342, %p343
      %p345 = scmp.ne.s32.totalorder %s337, %s339
      %p346 = scmp.eq.s32.totalorder %s25, 3
      %p347 = por %p345, %p346
      %p348 = scmp.ne.s32.totalorder %s339, %s340
      %p349 = scmp.eq.s32.totalorder %s25, 0
      %p350 = por %p348, %p349
      %p351 = scmp.ne.s32.totalorder %s339, %s340
      %p352 = scmp.eq.s32.totalorder %s26, 3
      %p353 = por %p351, %p352
      %p355 = scmp.ne.s32.totalorder %s340, %s354
      %p356 = scmp.eq.s32.totalorder %s26, 0
      %p357 = por %p355, %p356
      %s358 = ssub.s32 %s27, %s39
      %p359 = scmp.eq.s32.totalorder %s358, 0
      %s361 = sadd.s32 %s360, 1
      %s362 = scalar_select %p359, %s360, %s361
      %p365 = pneg %p359
      %p366 = scmp.eq.s32.totalorder %s20, 3
      %p367 = por %p365, %p366
      %p368 = scmp.ne.s32.totalorder %s360, %s363
      %p369 = scmp.eq.s32.totalorder %s20, 0
      %p370 = por %p368, %p369
      %p371 = scmp.ne.s32.totalorder %s360, %s363
      %p372 = scmp.eq.s32.totalorder %s25, 3
      %p373 = por %p371, %p372
      %p374 = scmp.ne.s32.totalorder %s363, %s364
      %p375 = scmp.eq.s32.totalorder %s25, 0
      %p376 = por %p374, %p375
      %p377 = scmp.ne.s32.totalorder %s363, %s364
      %p378 = scmp.eq.s32.totalorder %s26, 3
      %p379 = por %p377, %p378
      %p381 = scmp.ne.s32.totalorder %s364, %s380
      %p382 = scmp.eq.s32.totalorder %s26, 0
      %p383 = por %p381, %p382
      %p384 = scmp.le.s32.totalorder 1, %s20
      %p385 = scmp.lt.s32.totalorder %s20, 5
      %p386 = pnand %p384, %p385
      %p387 = pneg %p386
      // Predicated region
      $region9: #{group_forward_pallas.1} parent=5 // pred_check
        _
      $region10: #{group_forward_pallas.1} parent=5 // pred_check_branch
        %389 = sbr.rel (%p386) target = $region12
      $region11: #{group_forward_pallas.1} parent=5 // pred_region
        %s390 = ssub.s32 %s20, 1
        // Predicated region
        $region13: #{group_forward_pallas.1} parent=11 // pred_check
          %p391 = pneg %p79
        $region14: #{group_forward_pallas.1} parent=11 // pred_check_branch
          %393 = sbr.rel (%p391) target = $region16
        $region15: #{group_forward_pallas.1} parent=11 // pred_region
          _
        $region16: #{group_forward_pallas.1} parent=11 // pred_fallthru
          _
        // Predicated region
        $region17: #{group_forward_pallas.1} parent=11 // pred_check
          %p394 = pneg %p100
        $region18: #{group_forward_pallas.1} parent=11 // pred_check_branch
          %396 = sbr.rel (%p394) target = $region20
        $region19: #{group_forward_pallas.1} parent=11 // pred_region
          %398 = vsyncadd [#allocation5], 0
          %s400 = sshll.u32 %s2, 4
          %s401 = int_to_ptr.vmem [resolvable:$true] %s400
          %403 = dma.vmem_to_smem %s401, 32, [#allocation4], [#allocation5]
        $region20: #{group_forward_pallas.1} parent=11 // pred_fallthru
          _
        // Predicated region
        $region21: #{group_forward_pallas.1} parent=11 // pred_check
          %p404 = pneg %p329
        $region22: #{group_forward_pallas.1} parent=11 // pred_check_branch
          %406 = sbr.rel (%p404) target = $region24
        $region23: #{group_forward_pallas.1} parent=11 // pred_region
          _
        $region24: #{group_forward_pallas.1} parent=11 // pred_fallthru
          _
        // Predicated region
        $region25: #{group_forward_pallas.1} parent=11 // pred_check
          %p407 = pneg %p350
        $region26: #{group_forward_pallas.1} parent=11 // pred_check_branch
          %409 = sbr.rel (%p407) target = $region28
        $region27: #{group_forward_pallas.1} parent=11 // pred_region
          _
        $region28: #{group_forward_pallas.1} parent=11 // pred_fallthru
          _
      $region12: #{group_forward_pallas.1} parent=5 // pred_fallthru
        _
      %p410 = scmp.lt.s32.totalorder %s20, 4
      // Predicated region
      $region29: #{group_forward_pallas.1} parent=5 // pred_check
        %p411 = pneg %p410
      $region30: #{group_forward_pallas.1} parent=5 // pred_check_branch
        %413 = sbr.rel (%p411) target = $region32
      $region31: #{group_forward_pallas.1} parent=5 // pred_region
        // Predicated region
        $region33: #{group_forward_pallas.1} parent=31 // pred_check
          %p414 = pneg %p52
        $region34: #{group_forward_pallas.1} parent=31 // pred_check_branch
          %416 = sbr.rel (%p414) target = $region36
        $region35: #{group_forward_pallas.1} parent=31 // pred_region
          %p417 = scmp.lt.s32.totalorder %s27, 1
          %s418 = scalar_select %p417, %s27, 1
          %s419 = smul.addr %s418, 4
          %s420 = smul.addr %s419, 8
          %s421 = scalar_lea.vmem %s0, %s420
        $region36: #{group_forward_pallas.1} parent=31 // pred_fallthru
          _
        // Predicated region
        $region37: #{group_forward_pallas.1} parent=31 // pred_check
          %p422 = pneg %p120
        $region38: #{group_forward_pallas.1} parent=31 // pred_check_branch
          %424 = sbr.rel (%p422) target = $region40
        $region39: #{group_forward_pallas.1} parent=31 // pred_region
          %p425 = scmp.lt.s32.totalorder %s28, 1
          %s426 = scalar_select %p425, %s28, 1
          %s427 = smul.addr %s426, 18
          %s428 = smul.addr %s427, 8
          %s429 = scalar_lea.vmem %s3, %s428
        $region40: #{group_forward_pallas.1} parent=31 // pred_fallthru
          _
        // Predicated region
        $region41: #{group_forward_pallas.1} parent=31 // pred_check
          %p430 = pneg %p146
        $region42: #{group_forward_pallas.1} parent=31 // pred_check_branch
          %432 = sbr.rel (%p430) target = $region44
        $region43: #{group_forward_pallas.1} parent=31 // pred_region
          %p433 = scmp.lt.s32.totalorder %s28, 1
          %s434 = scalar_select %p433, %s28, 1
          %s435 = smul.addr %s434, 2
          %s436 = smul.addr %s435, 8
          %s437 = scalar_lea.vmem %s4, %s436
        $region44: #{group_forward_pallas.1} parent=31 // pred_fallthru
          _
        // Predicated region
        $region45: #{group_forward_pallas.1} parent=31 // pred_check
          %p438 = pneg %p172
        $region46: #{group_forward_pallas.1} parent=31 // pred_check_branch
          %440 = sbr.rel (%p438) target = $region48
        $region47: #{group_forward_pallas.1} parent=31 // pred_region
          %p441 = scmp.lt.s32.totalorder %s28, 1
          %s442 = scalar_select %p441, %s28, 1
          %s443 = smul.addr %s442, 18
          %s444 = smul.addr %s443, 8
          %s445 = scalar_lea.vmem %s5, %s444
        $region48: #{group_forward_pallas.1} parent=31 // pred_fallthru
          _
        // Predicated region
        $region49: #{group_forward_pallas.1} parent=31 // pred_check
          %p446 = pneg %p198
        $region50: #{group_forward_pallas.1} parent=31 // pred_check_branch
          %448 = sbr.rel (%p446) target = $region52
        $region51: #{group_forward_pallas.1} parent=31 // pred_region
          %p449 = scmp.lt.s32.totalorder %s28, 1
          %s450 = scalar_select %p449, %s28, 1
          %s451 = smul.addr %s450, 2
          %s452 = smul.addr %s451, 8
          %s453 = scalar_lea.vmem %s6, %s452
        $region52: #{group_forward_pallas.1} parent=31 // pred_fallthru
          _
        // Predicated region
        $region53: #{group_forward_pallas.1} parent=31 // pred_check
          %p454 = pneg %p224
        $region54: #{group_forward_pallas.1} parent=31 // pred_check_branch
          %456 = sbr.rel (%p454) target = $region56
        $region55: #{group_forward_pallas.1} parent=31 // pred_region
          %p457 = scmp.lt.s32.totalorder %s28, 1
          %s458 = scalar_select %p457, %s28, 1
          %s459 = smul.addr %s458, 2
          %s460 = smul.addr %s459, 8
          %s461 = scalar_lea.vmem %s7, %s460
        $region56: #{group_forward_pallas.1} parent=31 // pred_fallthru
          _
        // Predicated region
        $region57: #{group_forward_pallas.1} parent=31 // pred_check
          %p462 = pneg %p250
        $region58: #{group_forward_pallas.1} parent=31 // pred_check_branch
          %464 = sbr.rel (%p462) target = $region60
        $region59: #{group_forward_pallas.1} parent=31 // pred_region
          %p465 = scmp.lt.s32.totalorder %s28, 1
          %s466 = scalar_select %p465, %s28, 1
          %s467 = smul.addr %s466, 2
          %s468 = scalar_lea.vmem %s8, %s467
        $region60: #{group_forward_pallas.1} parent=31 // pred_fallthru
          _
        // Predicated region
        $region61: #{group_forward_pallas.1} parent=31 // pred_check
          %p469 = pneg %p276
        $region62: #{group_forward_pallas.1} parent=31 // pred_check_branch
          %471 = sbr.rel (%p469) target = $region64
        $region63: #{group_forward_pallas.1} parent=31 // pred_region
          %p472 = scmp.lt.s32.totalorder %s28, 1
          %s473 = scalar_select %p472, %s28, 1
          %s474 = smul.addr %s473, 2
          %s475 = scalar_lea.vmem %s9, %s474
        $region64: #{group_forward_pallas.1} parent=31 // pred_fallthru
          _
        // Predicated region
        $region65: #{group_forward_pallas.1} parent=31 // pred_check
          %p476 = pneg %p302
        $region66: #{group_forward_pallas.1} parent=31 // pred_check_branch
          %478 = sbr.rel (%p476) target = $region68
        $region67: #{group_forward_pallas.1} parent=31 // pred_region
          %p479 = scmp.lt.s32.totalorder %s28, 1
          %s480 = scalar_select %p479, %s28, 1
          %s481 = smul.addr %s480, 2
          %s482 = scalar_lea.vmem %s10, %s481
        $region68: #{group_forward_pallas.1} parent=31 // pred_fallthru
          _
      $region32: #{group_forward_pallas.1} parent=5 // pred_fallthru
        _
      %p483 = scmp.le.s32.totalorder 1, %s20
      %p484 = scmp.lt.s32.totalorder %s20, 5
      %p485 = pnand %p483, %p484
      %p486 = pneg %p485
      // Predicated region
      $region69: #{group_forward_pallas.1} parent=5 // pred_check
        _
      $region70: #{group_forward_pallas.1} parent=5 // pred_check_branch
        %488 = sbr.rel (%p485) target = $region72
      $region71: #{group_forward_pallas.1} parent=5 // pred_region
        %s489 = ssub.s32 %s20, 1
        // Predicated region
        $region73: #{group_forward_pallas.1} parent=71 // pred_check
          %p490 = pneg %p100
        $region74: #{group_forward_pallas.1} parent=71 // pred_check_branch
          %492 = sbr.rel (%p490) target = $region76
        $region75: #{group_forward_pallas.1} parent=71 // pred_region
          %494 = dma.done [#allocation5], 32
        $region76: #{group_forward_pallas.1} parent=71 // pred_fallthru
          _
        %495 = sfence
        %p496 = scmp.lt.s32.totalorder %s29, 1
        %s497 = scalar_select %p496, %s29, 1
        %s498 = smul.addr %s497, 4
        %s499 = smul.addr %s498, 8
        %s500 = scalar_lea.vmem %s0, %s499
        %p501 = pneg %p58
        %p502 = pneg %p55
        %p503 = pneg %p79
        %p504 = pneg %p76
        %p505 = pneg %p100
        %p506 = pneg %p97
        %p507 = scmp.lt.s32.totalorder %s30, 1
        %s508 = scalar_select %p507, %s30, 1
        %s509 = smul.addr %s508, 18
        %s510 = smul.addr %s509, 8
        %s511 = scalar_lea.vmem %s3, %s510
        %p512 = pneg %p126
        %p513 = pneg %p123
        %p514 = scmp.lt.s32.totalorder %s30, 1
        %s515 = scalar_select %p514, %s30, 1
        %s516 = smul.addr %s515, 2
        %s517 = smul.addr %s516, 8
        %s518 = scalar_lea.vmem %s4, %s517
        %p519 = pneg %p152
        %p520 = pneg %p149
        %p521 = scmp.lt.s32.totalorder %s30, 1
        %s522 = scalar_select %p521, %s30, 1
        %s523 = smul.addr %s522, 18
        %s524 = smul.addr %s523, 8
        %s525 = scalar_lea.vmem %s5, %s524
        %p526 = pneg %p178
        %p527 = pneg %p175
        %p528 = scmp.lt.s32.totalorder %s30, 1
        %s529 = scalar_select %p528, %s30, 1
        %s530 = smul.addr %s529, 2
        %s531 = smul.addr %s530, 8
        %s532 = scalar_lea.vmem %s6, %s531
        %p533 = pneg %p204
        %p534 = pneg %p201
        %p535 = scmp.lt.s32.totalorder %s30, 1
        %s536 = scalar_select %p535, %s30, 1
        %s537 = smul.addr %s536, 2
        %s538 = smul.addr %s537, 8
        %s539 = scalar_lea.vmem %s7, %s538
        %p540 = pneg %p230
        %p541 = pneg %p227
        %p542 = scmp.lt.s32.totalorder %s30, 1
        %s543 = scalar_select %p542, %s30, 1
        %s544 = smul.addr %s543, 2
        %s545 = scalar_lea.vmem %s8, %s544
        %p546 = pneg %p256
        %p547 = pneg %p253
        %p548 = scmp.lt.s32.totalorder %s30, 1
        %s549 = scalar_select %p548, %s30, 1
        %s550 = smul.addr %s549, 2
        %s551 = scalar_lea.vmem %s9, %s550
        %p552 = pneg %p282
        %p553 = pneg %p279
        %p554 = scmp.lt.s32.totalorder %s30, 1
        %s555 = scalar_select %p554, %s30, 1
        %s556 = smul.addr %s555, 2
        %s557 = scalar_lea.vmem %s10, %s556
        %p558 = pneg %p308
        %p559 = pneg %p305
        %p560 = pneg %p329
        %p561 = pneg %p326
        %p562 = pneg %p350
        %p563 = pneg %p347
        %p564 = pneg %p376
        %p565 = pneg %p373
        %p566 = scmp.lt.s32.totalorder %s29, 1
        %s567 = scalar_select %p566, %s29, 1
        %s568 = smul.addr %s567, 4
        %s569 = smul.addr %s568, 8
        %s570 = scalar_lea.vmem %s13, %s569
        %p571 = scmp.lt.s32.totalorder %s29, 1
        %s572 = scalar_select %p571, %s29, 1
        %s573 = smul.addr %s572, 4
        %s574 = smul.addr %s573, 8
        %s575 = scalar_lea.vmem %s0, %s574
        %p576 = scmp.lt.s32.totalorder %s30, 1
        %s577 = scalar_select %p576, %s30, 1
        %s578 = smul.addr %s577, 18
        %s579 = smul.addr %s578, 8
        %s580 = scalar_lea.vmem %s3, %s579
        %p581 = scmp.lt.s32.totalorder %s30, 1
        %s582 = scalar_select %p581, %s30, 1
        %s583 = smul.addr %s582, 2
        %s584 = smul.addr %s583, 8
        %s585 = scalar_lea.vmem %s4, %s584
        %p586 = scmp.lt.s32.totalorder %s30, 1
        %s587 = scalar_select %p586, %s30, 1
        %s588 = smul.addr %s587, 18
        %s589 = smul.addr %s588, 8
        %s590 = scalar_lea.vmem %s5, %s589
        %p591 = scmp.lt.s32.totalorder %s30, 1
        %s592 = scalar_select %p591, %s30, 1
        %s593 = smul.addr %s592, 2
        %s594 = smul.addr %s593, 8
        %s595 = scalar_lea.vmem %s6, %s594
        %p596 = scmp.lt.s32.totalorder %s30, 1
        %s597 = scalar_select %p596, %s30, 1
        %s598 = smul.addr %s597, 2
        %s599 = smul.addr %s598, 8
        %s600 = scalar_lea.vmem %s7, %s599
        %p601 = scmp.lt.s32.totalorder %s30, 1
        %s602 = scalar_select %p601, %s30, 1
        %s603 = smul.addr %s602, 2
        %s604 = scalar_lea.vmem %s8, %s603
        %p605 = scmp.lt.s32.totalorder %s30, 1
        %s606 = scalar_select %p605, %s30, 1
        %s607 = smul.addr %s606, 2
        %s608 = scalar_lea.vmem %s9, %s607
        %p609 = scmp.lt.s32.totalorder %s30, 1
        %s610 = scalar_select %p609, %s30, 1
        %s611 = smul.addr %s610, 2
        %s612 = scalar_lea.vmem %s10, %s611
        %p613 = scmp.lt.s32.totalorder %s29, 1
        %s614 = scalar_select %p613, %s29, 1
        %s615 = smul.addr %s614, 4
        %s616 = smul.addr %s615, 8
        %s617 = scalar_lea.vmem %s13, %s616
        %p618 = scmp.eq.s32.totalorder %s30, 0
        // Predicated region
        $region77: #{group_forward_pallas.1} parent=71 // pred_check
          %p619 = pneg %p618
        $region78: #{group_forward_pallas.1} parent=71 // pred_check_branch
          %621 = sbr.rel (%p619) target = $region80
        $region79: #{group_forward_pallas.1} parent=71 // pred_region
          %v622 = vld [vmem:[%s575] sm:$0xff]
          %v623 = vld [vmem:[%s575 + $0x8] sm:$0xff]
          %v624 = vld [vmem:[%s575 + $0x10] sm:$0xff]
          %v625 = vld [vmem:[%s575 + $0x18] sm:$0xff]
          %626 = vst [vmem:[#allocation3] sm:$0xff] %v622
          %627 = vst [vmem:[#allocation3 + $0x8] sm:$0xff] %v623
          %628 = vst [vmem:[#allocation3 + $0x10] sm:$0xff] %v624
          %629 = vst [vmem:[#allocation3 + $0x18] sm:$0xff] %v625
          %630 = vst [vmem:[#allocation2] sm:$0xff] 0.0
          %631 = vst [vmem:[#allocation2 + $0x20] sm:$0xff] 0.0
          %632 = vst [vmem:[#allocation2 + $0x18] sm:$0xff] 0.0
          %633 = vst [vmem:[#allocation2 + $0x38] sm:$0xff] 0.0
        $region80: #{group_forward_pallas.1} parent=71 // pred_fallthru
          _
        %v634 = vld [vmem:[#allocation3] sm:$0xff]
        %v635 = vld [vmem:[#allocation3 + $0x8] sm:$0xff]
        %v636 = vld [vmem:[#allocation3 + $0x10] sm:$0xff]
        %v637 = vld [vmem:[#allocation3 + $0x18] sm:$0xff]
        %v638 = vld [vmem:[%s1] sm:$0xff]
        %v639 = vld [vmem:[%s1 + $0x8] sm:$0xff]
        %v640 = vld [vmem:[%s1 + $0x10] sm:$0x1]
        %v641 = vld [vmem:[%s1 + $0x18] sm:$0x1]
        %s642 = smul.u32 %s30, 128
        %s643 = sld [smem:[#allocation4 + %s642]]
        %s644 = sadd.s32 %s642, 1
        %s645 = sld [smem:[#allocation4 + %s644]]
        %s646 = sadd.s32 %s642, 2
        %s647 = sld [smem:[#allocation4 + %s646]]
        %648 = vst [vmem:[#allocation2 + $0x8] sm:$0xff] %v634
        %649 = vst [vmem:[#allocation2 + $0x10] sm:$0xff] %v635
        %650 = vst [vmem:[#allocation2 + $0x28] sm:$0xff] %v636
        %651 = vst [vmem:[#allocation2 + $0x30] sm:$0xff] %v637
        %v652 = vld [vmem:[#allocation2] sm:$0xff]
        %v653 = vld [vmem:[#allocation2 + $0x8] sm:$0xff]
        %v654 = vld [vmem:[#allocation2 + $0x10] sm:$0xff]
        %v655 = vld [vmem:[#allocation2 + $0x20] sm:$0xff]
        %v656 = vld [vmem:[#allocation2 + $0x28] sm:$0xff]
        %v657 = vld [vmem:[#allocation2 + $0x30] sm:$0xff]
        %v658 = vperm.slane %v638, 0
        %v659 = vperm.slane %v639, 0
        %662 = vrot.lane.b32.xlu0 %v658, 111
        %v663 = vpop.permute.xlu0 %662
        %664 = vrot.lane.b32.xlu0 %v659, 111
        %v665 = vpop.permute.xlu0 %664
        %vm666 = vcmask 908288
        %v667 = vsel %vm666, %v663, %v665
        %v671 = vmul.f32 %v652, %v663
        %v672 = vmul.f32 %v653, %v667
        %v673 = vmul.f32 %v654, %v665
        %v674 = vmul.f32 %v655, %v663
        %v675 = vmul.f32 %v656, %v667
        %v676 = vmul.f32 %v657, %v665
        %v677 = vld [vmem:[%s580] sm:$0xff]
        %v678 = vld [vmem:[%s580 + $0x8] sm:$0xff]
        %v679 = vperm.slane %v638, 1
        %v680 = vperm.slane %v639, 1
        %683 = vrot.lane.b32.xlu0 %v679, 112
        %v684 = vpop.permute.xlu0 %683
        %685 = vrot.lane.b32.xlu0 %v680, 112
        %v686 = vpop.permute.xlu0 %685
        %vm687 = vcmask 916480
        %v688 = vsel %vm687, %v684, %v686
        %v692 = vmul.f32 %v652, %v684
        %v693 = vmul.f32 %v653, %v688
        %v694 = vmul.f32 %v654, %v686
        %v695 = vmul.f32 %v655, %v684
        %v696 = vmul.f32 %v656, %v688
        %v697 = vmul.f32 %v657, %v686
        %s698 = scalar_lea.vmem %s580, 16
        %v699 = vld [vmem:[%s698] sm:$0xff]
        %v700 = vld [vmem:[%s698 + $0x8] sm:$0xff]
        %707 = vrot.lane.b32.xlu0 %v692, 16
        %v708 = vpop.permute.xlu0 %707
        %709 = vrot.lane.b32.xlu0 %v693, 16
        %v710 = vpop.permute.xlu0 %709
        %711 = vrot.lane.b32.xlu0 %v694, 16
        %v712 = vpop.permute.xlu0 %711
        %713 = vrot.lane.b32.xlu0 %v695, 16
        %v714 = vpop.permute.xlu0 %713
        %715 = vrot.lane.b32.xlu0 %v696, 16
        %v716 = vpop.permute.xlu0 %715
        %717 = vrot.lane.b32.xlu0 %v697, 16
        %v718 = vpop.permute.xlu0 %717
        %vm719 = vcmask 130048
        %v720 = vsel %vm719, %v708, %v710
        %v721 = vsel %vm719, %v710, %v712
        %v722 = vsel %vm719, %v714, %v716
        %v723 = vsel %vm719, %v716, %v718
        %v729 = vsel %vm719, %v699, 0
        %v732 = vsel %vm719, %v700, 0
        %734 = vmatpush.msra.mxu0 0.0
        %735 = vmatpush.msra.mxu0 0.0
        %736 = vmatpush.msra.mxu0 0.0
        %737 = vmatpush.msra.mxu0 0.0
        %738 = vmatpush.msra.mxu0 0.0
        %739 = vmatpush.msra.mxu0 0.0
        %740 = vmatpush.msra.mxu0 0.0
        %741 = vmatpush.msra.mxu0 0.0
        %742 = vmatpush.msra.mxu0 0.0
        %743 = vmatpush.msra.mxu0 0.0
        %744 = vmatpush.msra.mxu0 0.0
        %745 = vmatpush.msra.mxu0 0.0
        %746 = vmatpush.msra.mxu0 0.0
        %747 = vmatpush.msra.mxu0 0.0
        %748 = vmatpush.msra.mxu0 %v722
        %749 = vmatpush.msra.mxu0 %v720
        %750 = vmatmul.f32.gmra.mxu0 %v729
        %v751 = vpop.f32.mrf.mxu0
        %v752 = vadd.f32 0.0, %v751
        %753 = vmatmul.f32.gmra.mxu0 %v732
        %v754 = vpop.f32.mrf.mxu0
        %v755 = vadd.f32 0.0, %v754
        %756 = vdwg.mxu0
        %757 = vmatpush.msra.mxu0 0.0
        %758 = vmatpush.msra.mxu0 0.0
        %759 = vmatpush.msra.mxu0 0.0
        %760 = vmatpush.msra.mxu0 0.0
        %761 = vmatpush.msra.mxu0 0.0
        %762 = vmatpush.msra.mxu0 0.0
        %763 = vmatpush.msra.mxu0 0.0
        %764 = vmatpush.msra.mxu0 0.0
        %765 = vmatpush.msra.mxu0 0.0
        %766 = vmatpush.msra.mxu0 0.0
        %767 = vmatpush.msra.mxu0 0.0
        %768 = vmatpush.msra.mxu0 0.0
        %769 = vmatpush.msra.mxu0 0.0
        %770 = vmatpush.msra.mxu0 0.0
        %771 = vmatpush.msra.mxu0 %v723
        %772 = vmatpush.msra.mxu0 %v721
        %773 = vmatmul.f32.gmra.mxu0 %v729
        %v774 = vpop.f32.mrf.mxu0
        %v775 = vadd.f32 0.0, %v774
        %776 = vmatmul.f32.gmra.mxu0 %v732
        %v777 = vpop.f32.mrf.mxu0
        %v778 = vadd.f32 0.0, %v777
        %779 = vdwg.mxu0
        %786 = vrot.lane.b32.xlu0 %v671, 17
        %v787 = vpop.permute.xlu0 %786
        %788 = vrot.lane.b32.xlu0 %v672, 17
        %v789 = vpop.permute.xlu0 %788
        %790 = vrot.lane.b32.xlu0 %v673, 17
        %v791 = vpop.permute.xlu0 %790
        %792 = vrot.lane.b32.xlu0 %v674, 17
        %v793 = vpop.permute.xlu0 %792
        %794 = vrot.lane.b32.xlu0 %v675, 17
        %v795 = vpop.permute.xlu0 %794
        %796 = vrot.lane.b32.xlu0 %v676, 17
        %v797 = vpop.permute.xlu0 %796
        %vm798 = vcmask 138240
        %v799 = vsel %vm798, %v787, %v789
        %v800 = vsel %vm798, %v789, %v791
        %v801 = vsel %vm798, %v793, %v795
        %v802 = vsel %vm798, %v795, %v797
        %v808 = vsel %vm719, %v677, 0
        %v811 = vsel %vm719, %v678, 0
        %813 = vmatpush.msra.mxu0 0.0
        %814 = vmatpush.msra.mxu0 0.0
        %815 = vmatpush.msra.mxu0 0.0
        %816 = vmatpush.msra.mxu0 0.0
        %817 = vmatpush.msra.mxu0 0.0
        %818 = vmatpush.msra.mxu0 0.0
        %819 = vmatpush.msra.mxu0 0.0
        %820 = vmatpush.msra.mxu0 0.0
        %821 = vmatpush.msra.mxu0 0.0
        %822 = vmatpush.msra.mxu0 0.0
        %823 = vmatpush.msra.mxu0 0.0
        %824 = vmatpush.msra.mxu0 0.0
        %825 = vmatpush.msra.mxu0 0.0
        %826 = vmatpush.msra.mxu0 0.0
        %827 = vmatpush.msra.mxu0 %v801
        %828 = vmatpush.msra.mxu0 %v799
        %829 = vmatmul.f32.gmra.mxu0 %v808
        %v830 = vpop.f32.mrf.mxu0
        %v831 = vadd.f32 %v752, %v830
        %832 = vmatmul.f32.gmra.mxu0 %v811
        %v833 = vpop.f32.mrf.mxu0
        %v834 = vadd.f32 %v755, %v833
        %835 = vdwg.mxu0
        %836 = vmatpush.msra.mxu0 0.0
        %837 = vmatpush.msra.mxu0 0.0
        %838 = vmatpush.msra.mxu0 0.0
        %839 = vmatpush.msra.mxu0 0.0
        %840 = vmatpush.msra.mxu0 0.0
        %841 = vmatpush.msra.mxu0 0.0
        %842 = vmatpush.msra.mxu0 0.0
        %843 = vmatpush.msra.mxu0 0.0
        %844 = vmatpush.msra.mxu0 0.0
        %845 = vmatpush.msra.mxu0 0.0
        %846 = vmatpush.msra.mxu0 0.0
        %847 = vmatpush.msra.mxu0 0.0
        %848 = vmatpush.msra.mxu0 0.0
        %849 = vmatpush.msra.mxu0 0.0
        %850 = vmatpush.msra.mxu0 %v802
        %851 = vmatpush.msra.mxu0 %v800
        %852 = vmatmul.f32.gmra.mxu0 %v808
        %v853 = vpop.f32.mrf.mxu0
        %v854 = vadd.f32 %v775, %v853
        %855 = vmatmul.f32.gmra.mxu0 %v811
        %v856 = vpop.f32.mrf.mxu0
        %v857 = vadd.f32 %v778, %v856
        %858 = vdwg.mxu0
        %v859 = vperm.slane %v638, 2
        %v860 = vperm.slane %v639, 2
        %863 = vrot.lane.b32.xlu0 %v859, 113
        %v864 = vpop.permute.xlu0 %863
        %865 = vrot.lane.b32.xlu0 %v860, 113
        %v866 = vpop.permute.xlu0 %865
        %vm867 = vcmask 924672
        %v868 = vsel %vm867, %v864, %v866
        %v872 = vmul.f32 %v652, %v864
        %v873 = vmul.f32 %v653, %v868
        %v874 = vmul.f32 %v654, %v866
        %v875 = vmul.f32 %v655, %v864
        %v876 = vmul.f32 %v656, %v868
        %v877 = vmul.f32 %v657, %v866
        %s878 = scalar_lea.vmem %s580, 32
        %v879 = vld [vmem:[%s878] sm:$0xff]
        %v880 = vld [vmem:[%s878 + $0x8] sm:$0xff]
        %887 = vrot.lane.b32.xlu0 %v872, 15
        %v888 = vpop.permute.xlu0 %887
        %889 = vrot.lane.b32.xlu0 %v873, 15
        %v890 = vpop.permute.xlu0 %889
        %891 = vrot.lane.b32.xlu0 %v874, 15
        %v892 = vpop.permute.xlu0 %891
        %893 = vrot.lane.b32.xlu0 %v875, 15
        %v894 = vpop.permute.xlu0 %893
        %895 = vrot.lane.b32.xlu0 %v876, 15
        %v896 = vpop.permute.xlu0 %895
        %897 = vrot.lane.b32.xlu0 %v877, 15
        %v898 = vpop.permute.xlu0 %897
        %vm899 = vcmask 121856
        %v900 = vsel %vm899, %v888, %v890
        %v901 = vsel %vm899, %v890, %v892
        %v902 = vsel %vm899, %v894, %v896
        %v903 = vsel %vm899, %v896, %v898
        %v909 = vsel %vm719, %v879, 0
        %v912 = vsel %vm719, %v880, 0
        %914 = vmatpush.msra.mxu0 0.0
        %915 = vmatpush.msra.mxu0 0.0
        %916 = vmatpush.msra.mxu0 0.0
        %917 = vmatpush.msra.mxu0 0.0
        %918 = vmatpush.msra.mxu0 0.0
        %919 = vmatpush.msra.mxu0 0.0
        %920 = vmatpush.msra.mxu0 0.0
        %921 = vmatpush.msra.mxu0 0.0
        %922 = vmatpush.msra.mxu0 0.0
        %923 = vmatpush.msra.mxu0 0.0
        %924 = vmatpush.msra.mxu0 0.0
        %925 = vmatpush.msra.mxu0 0.0
        %926 = vmatpush.msra.mxu0 0.0
        %927 = vmatpush.msra.mxu0 0.0
        %928 = vmatpush.msra.mxu0 %v902
        %929 = vmatpush.msra.mxu0 %v900
        %930 = vmatmul.f32.gmra.mxu0 %v909
        %v931 = vpop.f32.mrf.mxu0
        %v932 = vadd.f32 0.0, %v931
        %933 = vmatmul.f32.gmra.mxu0 %v912
        %v934 = vpop.f32.mrf.mxu0
        %v935 = vadd.f32 0.0, %v934
        %936 = vdwg.mxu0
        %937 = vmatpush.msra.mxu0 0.0
        %938 = vmatpush.msra.mxu0 0.0
        %939 = vmatpush.msra.mxu0 0.0
        %940 = vmatpush.msra.mxu0 0.0
        %941 = vmatpush.msra.mxu0 0.0
        %942 = vmatpush.msra.mxu0 0.0
        %943 = vmatpush.msra.mxu0 0.0
        %944 = vmatpush.msra.mxu0 0.0
        %945 = vmatpush.msra.mxu0 0.0
        %946 = vmatpush.msra.mxu0 0.0
        %947 = vmatpush.msra.mxu0 0.0
        %948 = vmatpush.msra.mxu0 0.0
        %949 = vmatpush.msra.mxu0 0.0
        %950 = vmatpush.msra.mxu0 0.0
        %951 = vmatpush.msra.mxu0 %v903
        %952 = vmatpush.msra.mxu0 %v901
        %953 = vmatmul.f32.gmra.mxu0 %v909
        %v954 = vpop.f32.mrf.mxu0
        %v955 = vadd.f32 0.0, %v954
        %956 = vmatmul.f32.gmra.mxu0 %v912
        %v957 = vpop.f32.mrf.mxu0
        %v958 = vadd.f32 0.0, %v957
        %959 = vdwg.mxu0
        %v960 = vadd.f32 %v831, %v932
        %v961 = vadd.f32 %v854, %v955
        %v962 = vadd.f32 %v834, %v935
        %v963 = vadd.f32 %v857, %v958
        %v964 = vperm.slane %v638, 3
        %v965 = vperm.slane %v639, 3
        %968 = vrot.lane.b32.xlu0 %v964, 127
        %v969 = vpop.permute.xlu0 %968
        %970 = vrot.lane.b32.xlu0 %v965, 127
        %v971 = vpop.permute.xlu0 %970
        %vm972 = vcmask 1039360
        %v973 = vsel %vm972, %v969, %v971
        %v977 = vmul.f32 %v652, %v969
        %v978 = vmul.f32 %v653, %v973
        %v979 = vmul.f32 %v654, %v971
        %v980 = vmul.f32 %v655, %v969
        %v981 = vmul.f32 %v656, %v973
        %v982 = vmul.f32 %v657, %v971
        %s983 = scalar_lea.vmem %s580, 48
        %v984 = vld [vmem:[%s983] sm:$0xff]
        %v985 = vld [vmem:[%s983 + $0x8] sm:$0xff]
        %992 = vrot.lane.b32.xlu0 %v977, 1
        %v993 = vpop.permute.xlu0 %992
        %994 = vrot.lane.b32.xlu0 %v978, 1
        %v995 = vpop.permute.xlu0 %994
        %996 = vrot.lane.b32.xlu0 %v979, 1
        %v997 = vpop.permute.xlu0 %996
        %998 = vrot.lane.b32.xlu0 %v980, 1
        %v999 = vpop.permute.xlu0 %998
        %1000 = vrot.lane.b32.xlu0 %v981, 1
        %v1001 = vpop.permute.xlu0 %1000
        %1002 = vrot.lane.b32.xlu0 %v982, 1
        %v1003 = vpop.permute.xlu0 %1002
        %vm1004 = vcmask 7168
        %v1005 = vsel %vm1004, %v993, %v995
        %v1006 = vsel %vm1004, %v995, %v997
        %v1007 = vsel %vm1004, %v999, %v1001
        %v1008 = vsel %vm1004, %v1001, %v1003
        %v1014 = vsel %vm719, %v984, 0
        %v1017 = vsel %vm719, %v985, 0
        %1019 = vmatpush.msra.mxu0 0.0
        %1020 = vmatpush.msra.mxu0 0.0
        %1021 = vmatpush.msra.mxu0 0.0
        %1022 = vmatpush.msra.mxu0 0.0
        %1023 = vmatpush.msra.mxu0 0.0
        %1024 = vmatpush.msra.mxu0 0.0
        %1025 = vmatpush.msra.mxu0 0.0
        %1026 = vmatpush.msra.mxu0 0.0
        %1027 = vmatpush.msra.mxu0 0.0
        %1028 = vmatpush.msra.mxu0 0.0
        %1029 = vmatpush.msra.mxu0 0.0
        %1030 = vmatpush.msra.mxu0 0.0
        %1031 = vmatpush.msra.mxu0 0.0
        %1032 = vmatpush.msra.mxu0 0.0
        %1033 = vmatpush.msra.mxu0 %v1007
        %1034 = vmatpush.msra.mxu0 %v1005
        %1035 = vmatmul.f32.gmra.mxu0 %v1014
        %v1036 = vpop.f32.mrf.mxu0
        %v1037 = vadd.f32 0.0, %v1036
        %1038 = vmatmul.f32.gmra.mxu0 %v1017
        %v1039 = vpop.f32.mrf.mxu0
        %v1040 = vadd.f32 0.0, %v1039
        %1041 = vdwg.mxu0
        %1042 = vmatpush.msra.mxu0 0.0
        %1043 = vmatpush.msra.mxu0 0.0
        %1044 = vmatpush.msra.mxu0 0.0
        %1045 = vmatpush.msra.mxu0 0.0
        %1046 = vmatpush.msra.mxu0 0.0
        %1047 = vmatpush.msra.mxu0 0.0
        %1048 = vmatpush.msra.mxu0 0.0
        %1049 = vmatpush.msra.mxu0 0.0
        %1050 = vmatpush.msra.mxu0 0.0
        %1051 = vmatpush.msra.mxu0 0.0
        %1052 = vmatpush.msra.mxu0 0.0
        %1053 = vmatpush.msra.mxu0 0.0
        %1054 = vmatpush.msra.mxu0 0.0
        %1055 = vmatpush.msra.mxu0 0.0
        %1056 = vmatpush.msra.mxu0 %v1008
        %1057 = vmatpush.msra.mxu0 %v1006
        %1058 = vmatmul.f32.gmra.mxu0 %v1014
        %v1059 = vpop.f32.mrf.mxu0
        %v1060 = vadd.f32 0.0, %v1059
        %1061 = vmatmul.f32.gmra.mxu0 %v1017
        %v1062 = vpop.f32.mrf.mxu0
        %v1063 = vadd.f32 0.0, %v1062
        %1064 = vdwg.mxu0
        %v1065 = vadd.f32 %v960, %v1037
        %v1066 = vadd.f32 %v961, %v1060
        %v1067 = vadd.f32 %v962, %v1040
        %v1068 = vadd.f32 %v963, %v1063
        %s1069 = scalar_lea.vmem %s580, 64
        %v1070 = vld [vmem:[%s1069] sm:$0xff]
        %v1071 = vld [vmem:[%s1069 + $0x8] sm:$0xff]
        %v1073 = vsel %vm719, %v1070, 0
        %v1076 = vsel %vm719, %v1071, 0
        %1078 = vmatpush.msra.mxu0 0.0
        %1079 = vmatpush.msra.mxu0 0.0
        %1080 = vmatpush.msra.mxu0 0.0
        %1081 = vmatpush.msra.mxu0 0.0
        %1082 = vmatpush.msra.mxu0 0.0
        %1083 = vmatpush.msra.mxu0 0.0
        %1084 = vmatpush.msra.mxu0 0.0
        %1085 = vmatpush.msra.mxu0 0.0
        %1086 = vmatpush.msra.mxu0 0.0
        %1087 = vmatpush.msra.mxu0 0.0
        %1088 = vmatpush.msra.mxu0 0.0
        %1089 = vmatpush.msra.mxu0 0.0
        %1090 = vmatpush.msra.mxu0 0.0
        %1091 = vmatpush.msra.mxu0 0.0
        %1092 = vmatpush.msra.mxu0 %v656
        %1093 = vmatpush.msra.mxu0 %v653
        %1094 = vmatmul.f32.gmra.mxu0 %v1073
        %v1095 = vpop.f32.mrf.mxu0
        %v1096 = vadd.f32 0.0, %v1095
        %1097 = vmatmul.f32.gmra.mxu0 %v1076
        %v1098 = vpop.f32.mrf.mxu0
        %v1099 = vadd.f32 0.0, %v1098
        %1100 = vdwg.mxu0
        %1101 = vmatpush.msra.mxu0 0.0
        %1102 = vmatpush.msra.mxu0 0.0
        %1103 = vmatpush.msra.mxu0 0.0
        %1104 = vmatpush.msra.mxu0 0.0
        %1105 = vmatpush.msra.mxu0 0.0
        %1106 = vmatpush.msra.mxu0 0.0
        %1107 = vmatpush.msra.mxu0 0.0
        %1108 = vmatpush.msra.mxu0 0.0
        %1109 = vmatpush.msra.mxu0 0.0
        %1110 = vmatpush.msra.mxu0 0.0
        %1111 = vmatpush.msra.mxu0 0.0
        %1112 = vmatpush.msra.mxu0 0.0
        %1113 = vmatpush.msra.mxu0 0.0
        %1114 = vmatpush.msra.mxu0 0.0
        %1115 = vmatpush.msra.mxu0 %v657
        %1116 = vmatpush.msra.mxu0 %v654
        %1117 = vmatmul.f32.gmra.mxu0 %v1073
        %v1118 = vpop.f32.mrf.mxu0
        %v1119 = vadd.f32 0.0, %v1118
        %1120 = vmatmul.f32.gmra.mxu0 %v1076
        %v1121 = vpop.f32.mrf.mxu0
        %v1122 = vadd.f32 0.0, %v1121
        %1123 = vdwg.mxu0
        %v1124 = vadd.f32 %v1065, %v1096
        %v1125 = vadd.f32 %v1066, %v1119
        %v1126 = vadd.f32 %v1067, %v1099
        %v1127 = vadd.f32 %v1068, %v1122
        %v1128 = vld [vmem:[#allocation2 + $0x8] sm:$0xff]
        %v1129 = vld [vmem:[#allocation2 + $0x10] sm:$0xff]
        %v1130 = vld [vmem:[#allocation2 + $0x18] sm:$0xff]
        %v1131 = vld [vmem:[#allocation2 + $0x28] sm:$0xff]
        %v1132 = vld [vmem:[#allocation2 + $0x30] sm:$0xff]
        %v1133 = vld [vmem:[#allocation2 + $0x38] sm:$0xff]
        %v1134 = vperm.slane %v638, 5
        %v1135 = vperm.slane %v639, 5
        %1138 = vrot.lane.b32.xlu0 %v1134, 1
        %v1139 = vpop.permute.xlu0 %1138
        %1140 = vrot.lane.b32.xlu0 %v1135, 1
        %v1141 = vpop.permute.xlu0 %1140
        %v1142 = vsel %vm1004, %v1139, %v1141
        %v1146 = vmul.f32 %v1128, %v1139
        %v1147 = vmul.f32 %v1129, %v1142
        %v1148 = vmul.f32 %v1130, %v1141
        %v1149 = vmul.f32 %v1131, %v1139
        %v1150 = vmul.f32 %v1132, %v1142
        %v1151 = vmul.f32 %v1133, %v1141
        %s1152 = scalar_lea.vmem %s580, 80
        %v1153 = vld [vmem:[%s1152] sm:$0xff]
        %v1154 = vld [vmem:[%s1152 + $0x8] sm:$0xff]
        %1161 = vrot.lane.b32.xlu0 %v1146, 127
        %v1162 = vpop.permute.xlu0 %1161
        %1163 = vrot.lane.b32.xlu0 %v1147, 127
        %v1164 = vpop.permute.xlu0 %1163
        %1165 = vrot.lane.b32.xlu0 %v1148, 127
        %v1166 = vpop.permute.xlu0 %1165
        %1167 = vrot.lane.b32.xlu0 %v1149, 127
        %v1168 = vpop.permute.xlu0 %1167
        %1169 = vrot.lane.b32.xlu0 %v1150, 127
        %v1170 = vpop.permute.xlu0 %1169
        %1171 = vrot.lane.b32.xlu0 %v1151, 127
        %v1172 = vpop.permute.xlu0 %1171
        %v1173 = vsel %vm972, %v1162, %v1164
        %v1174 = vsel %vm972, %v1164, %v1166
        %v1175 = vsel %vm972, %v1168, %v1170
        %v1176 = vsel %vm972, %v1170, %v1172
        %v1182 = vsel %vm719, %v1153, 0
        %v1185 = vsel %vm719, %v1154, 0
        %1187 = vmatpush.msra.mxu0 0.0
        %1188 = vmatpush.msra.mxu0 0.0
        %1189 = vmatpush.msra.mxu0 0.0
        %1190 = vmatpush.msra.mxu0 0.0
        %1191 = vmatpush.msra.mxu0 0.0
        %1192 = vmatpush.msra.mxu0 0.0
        %1193 = vmatpush.msra.mxu0 0.0
        %1194 = vmatpush.msra.mxu0 0.0
        %1195 = vmatpush.msra.mxu0 0.0
        %1196 = vmatpush.msra.mxu0 0.0
        %1197 = vmatpush.msra.mxu0 0.0
        %1198 = vmatpush.msra.mxu0 0.0
        %1199 = vmatpush.msra.mxu0 0.0
        %1200 = vmatpush.msra.mxu0 0.0
        %1201 = vmatpush.msra.mxu0 %v1175
        %1202 = vmatpush.msra.mxu0 %v1173
        %1203 = vmatmul.f32.gmra.mxu0 %v1182
        %v1204 = vpop.f32.mrf.mxu0
        %v1205 = vadd.f32 0.0, %v1204
        %1206 = vmatmul.f32.gmra.mxu0 %v1185
        %v1207 = vpop.f32.mrf.mxu0
        %v1208 = vadd.f32 0.0, %v1207
        %1209 = vdwg.mxu0
        %1210 = vmatpush.msra.mxu0 0.0
        %1211 = vmatpush.msra.mxu0 0.0
        %1212 = vmatpush.msra.mxu0 0.0
        %1213 = vmatpush.msra.mxu0 0.0
        %1214 = vmatpush.msra.mxu0 0.0
        %1215 = vmatpush.msra.mxu0 0.0
        %1216 = vmatpush.msra.mxu0 0.0
        %1217 = vmatpush.msra.mxu0 0.0
        %1218 = vmatpush.msra.mxu0 0.0
        %1219 = vmatpush.msra.mxu0 0.0
        %1220 = vmatpush.msra.mxu0 0.0
        %1221 = vmatpush.msra.mxu0 0.0
        %1222 = vmatpush.msra.mxu0 0.0
        %1223 = vmatpush.msra.mxu0 0.0
        %1224 = vmatpush.msra.mxu0 %v1176
        %1225 = vmatpush.msra.mxu0 %v1174
        %1226 = vmatmul.f32.gmra.mxu0 %v1182
        %v1227 = vpop.f32.mrf.mxu0
        %v1228 = vadd.f32 0.0, %v1227
        %1229 = vmatmul.f32.gmra.mxu0 %v1185
        %v1230 = vpop.f32.mrf.mxu0
        %v1231 = vadd.f32 0.0, %v1230
        %1232 = vdwg.mxu0
        %v1233 = vadd.f32 %v1124, %v1205
        %v1234 = vadd.f32 %v1125, %v1228
        %v1235 = vadd.f32 %v1126, %v1208
        %v1236 = vadd.f32 %v1127, %v1231
        %v1237 = vperm.slane %v638, 6
        %v1238 = vperm.slane %v639, 6
        %1241 = vrot.lane.b32.xlu0 %v1237, 15
        %v1242 = vpop.permute.xlu0 %1241
        %1243 = vrot.lane.b32.xlu0 %v1238, 15
        %v1244 = vpop.permute.xlu0 %1243
        %v1245 = vsel %vm899, %v1242, %v1244
        %v1249 = vmul.f32 %v1128, %v1242
        %v1250 = vmul.f32 %v1129, %v1245
        %v1251 = vmul.f32 %v1130, %v1244
        %v1252 = vmul.f32 %v1131, %v1242
        %v1253 = vmul.f32 %v1132, %v1245
        %v1254 = vmul.f32 %v1133, %v1244
        %s1255 = scalar_lea.vmem %s580, 96
        %v1256 = vld [vmem:[%s1255] sm:$0xff]
        %v1257 = vld [vmem:[%s1255 + $0x8] sm:$0xff]
        %1264 = vrot.lane.b32.xlu0 %v1249, 113
        %v1265 = vpop.permute.xlu0 %1264
        %1266 = vrot.lane.b32.xlu0 %v1250, 113
        %v1267 = vpop.permute.xlu0 %1266
        %1268 = vrot.lane.b32.xlu0 %v1251, 113
        %v1269 = vpop.permute.xlu0 %1268
        %1270 = vrot.lane.b32.xlu0 %v1252, 113
        %v1271 = vpop.permute.xlu0 %1270
        %1272 = vrot.lane.b32.xlu0 %v1253, 113
        %v1273 = vpop.permute.xlu0 %1272
        %1274 = vrot.lane.b32.xlu0 %v1254, 113
        %v1275 = vpop.permute.xlu0 %1274
        %v1276 = vsel %vm867, %v1265, %v1267
        %v1277 = vsel %vm867, %v1267, %v1269
        %v1278 = vsel %vm867, %v1271, %v1273
        %v1279 = vsel %vm867, %v1273, %v1275
        %v1285 = vsel %vm719, %v1256, 0
        %v1288 = vsel %vm719, %v1257, 0
        %1290 = vmatpush.msra.mxu0 0.0
        %1291 = vmatpush.msra.mxu0 0.0
        %1292 = vmatpush.msra.mxu0 0.0
        %1293 = vmatpush.msra.mxu0 0.0
        %1294 = vmatpush.msra.mxu0 0.0
        %1295 = vmatpush.msra.mxu0 0.0
        %1296 = vmatpush.msra.mxu0 0.0
        %1297 = vmatpush.msra.mxu0 0.0
        %1298 = vmatpush.msra.mxu0 0.0
        %1299 = vmatpush.msra.mxu0 0.0
        %1300 = vmatpush.msra.mxu0 0.0
        %1301 = vmatpush.msra.mxu0 0.0
        %1302 = vmatpush.msra.mxu0 0.0
        %1303 = vmatpush.msra.mxu0 0.0
        %1304 = vmatpush.msra.mxu0 %v1278
        %1305 = vmatpush.msra.mxu0 %v1276
        %1306 = vmatmul.f32.gmra.mxu0 %v1285
        %v1307 = vpop.f32.mrf.mxu0
        %v1308 = vadd.f32 0.0, %v1307
        %1309 = vmatmul.f32.gmra.mxu0 %v1288
        %v1310 = vpop.f32.mrf.mxu0
        %v1311 = vadd.f32 0.0, %v1310
        %1312 = vdwg.mxu0
        %1313 = vmatpush.msra.mxu0 0.0
        %1314 = vmatpush.msra.mxu0 0.0
        %1315 = vmatpush.msra.mxu0 0.0
        %1316 = vmatpush.msra.mxu0 0.0
        %1317 = vmatpush.msra.mxu0 0.0
        %1318 = vmatpush.msra.mxu0 0.0
        %1319 = vmatpush.msra.mxu0 0.0
        %1320 = vmatpush.msra.mxu0 0.0
        %1321 = vmatpush.msra.mxu0 0.0
        %1322 = vmatpush.msra.mxu0 0.0
        %1323 = vmatpush.msra.mxu0 0.0
        %1324 = vmatpush.msra.mxu0 0.0
        %1325 = vmatpush.msra.mxu0 0.0
        %1326 = vmatpush.msra.mxu0 0.0
        %1327 = vmatpush.msra.mxu0 %v1279
        %1328 = vmatpush.msra.mxu0 %v1277
        %1329 = vmatmul.f32.gmra.mxu0 %v1285
        %v1330 = vpop.f32.mrf.mxu0
        %v1331 = vadd.f32 0.0, %v1330
        %1332 = vmatmul.f32.gmra.mxu0 %v1288
        %v1333 = vpop.f32.mrf.mxu0
        %v1334 = vadd.f32 0.0, %v1333
        %1335 = vdwg.mxu0
        %v1336 = vadd.f32 %v1233, %v1308
        %v1337 = vadd.f32 %v1234, %v1331
        %v1338 = vadd.f32 %v1235, %v1311
        %v1339 = vadd.f32 %v1236, %v1334
        %v1340 = vperm.slane %v638, 7
        %v1341 = vperm.slane %v639, 7
        %1344 = vrot.lane.b32.xlu0 %v1340, 16
        %v1345 = vpop.permute.xlu0 %1344
        %1346 = vrot.lane.b32.xlu0 %v1341, 16
        %v1347 = vpop.permute.xlu0 %1346
        %v1348 = vsel %vm719, %v1345, %v1347
        %v1352 = vmul.f32 %v1128, %v1345
        %v1353 = vmul.f32 %v1129, %v1348
        %v1354 = vmul.f32 %v1130, %v1347
        %v1355 = vmul.f32 %v1131, %v1345
        %v1356 = vmul.f32 %v1132, %v1348
        %v1357 = vmul.f32 %v1133, %v1347
        %s1358 = scalar_lea.vmem %s580, 112
        %v1359 = vld [vmem:[%s1358] sm:$0xff]
        %v1360 = vld [vmem:[%s1358 + $0x8] sm:$0xff]
        %1367 = vrot.lane.b32.xlu0 %v1352, 112
        %v1368 = vpop.permute.xlu0 %1367
        %1369 = vrot.lane.b32.xlu0 %v1353, 112
        %v1370 = vpop.permute.xlu0 %1369
        %1371 = vrot.lane.b32.xlu0 %v1354, 112
        %v1372 = vpop.permute.xlu0 %1371
        %1373 = vrot.lane.b32.xlu0 %v1355, 112
        %v1374 = vpop.permute.xlu0 %1373
        %1375 = vrot.lane.b32.xlu0 %v1356, 112
        %v1376 = vpop.permute.xlu0 %1375
        %1377 = vrot.lane.b32.xlu0 %v1357, 112
        %v1378 = vpop.permute.xlu0 %1377
        %v1379 = vsel %vm687, %v1368, %v1370
        %v1380 = vsel %vm687, %v1370, %v1372
        %v1381 = vsel %vm687, %v1374, %v1376
        %v1382 = vsel %vm687, %v1376, %v1378
        %v1388 = vsel %vm719, %v1359, 0
        %v1391 = vsel %vm719, %v1360, 0
        %1393 = vmatpush.msra.mxu0 0.0
        %1394 = vmatpush.msra.mxu0 0.0
        %1395 = vmatpush.msra.mxu0 0.0
        %1396 = vmatpush.msra.mxu0 0.0
        %1397 = vmatpush.msra.mxu0 0.0
        %1398 = vmatpush.msra.mxu0 0.0
        %1399 = vmatpush.msra.mxu0 0.0
        %1400 = vmatpush.msra.mxu0 0.0
        %1401 = vmatpush.msra.mxu0 0.0
        %1402 = vmatpush.msra.mxu0 0.0
        %1403 = vmatpush.msra.mxu0 0.0
        %1404 = vmatpush.msra.mxu0 0.0
        %1405 = vmatpush.msra.mxu0 0.0
        %1406 = vmatpush.msra.mxu0 0.0
        %1407 = vmatpush.msra.mxu0 %v1381
        %1408 = vmatpush.msra.mxu0 %v1379
        %1409 = vmatmul.f32.gmra.mxu0 %v1388
        %v1410 = vpop.f32.mrf.mxu0
        %v1411 = vadd.f32 0.0, %v1410
        %1412 = vmatmul.f32.gmra.mxu0 %v1391
        %v1413 = vpop.f32.mrf.mxu0
        %v1414 = vadd.f32 0.0, %v1413
        %1415 = vdwg.mxu0
        %1416 = vmatpush.msra.mxu0 0.0
        %1417 = vmatpush.msra.mxu0 0.0
        %1418 = vmatpush.msra.mxu0 0.0
        %1419 = vmatpush.msra.mxu0 0.0
        %1420 = vmatpush.msra.mxu0 0.0
        %1421 = vmatpush.msra.mxu0 0.0
        %1422 = vmatpush.msra.mxu0 0.0
        %1423 = vmatpush.msra.mxu0 0.0
        %1424 = vmatpush.msra.mxu0 0.0
        %1425 = vmatpush.msra.mxu0 0.0
        %1426 = vmatpush.msra.mxu0 0.0
        %1427 = vmatpush.msra.mxu0 0.0
        %1428 = vmatpush.msra.mxu0 0.0
        %1429 = vmatpush.msra.mxu0 0.0
        %1430 = vmatpush.msra.mxu0 %v1382
        %1431 = vmatpush.msra.mxu0 %v1380
        %1432 = vmatmul.f32.gmra.mxu0 %v1388
        %v1433 = vpop.f32.mrf.mxu0
        %v1434 = vadd.f32 0.0, %v1433
        %1435 = vmatmul.f32.gmra.mxu0 %v1391
        %v1436 = vpop.f32.mrf.mxu0
        %v1437 = vadd.f32 0.0, %v1436
        %1438 = vdwg.mxu0
        %v1439 = vadd.f32 %v1336, %v1411
        %v1440 = vadd.f32 %v1337, %v1434
        %v1441 = vadd.f32 %v1338, %v1414
        %v1442 = vadd.f32 %v1339, %v1437
        %v1443 = vperm.slane %v640, 0
        %v1444 = vperm.slane %v641, 0
        %1447 = vrot.lane.b32.xlu0 %v1443, 17
        %v1448 = vpop.permute.xlu0 %1447
        %1449 = vrot.lane.b32.xlu0 %v1444, 17
        %v1450 = vpop.permute.xlu0 %1449
        %v1451 = vsel %vm798, %v1448, %v1450
        %v1455 = vmul.f32 %v1128, %v1448
        %v1456 = vmul.f32 %v1129, %v1451
        %v1457 = vmul.f32 %v1130, %v1450
        %v1458 = vmul.f32 %v1131, %v1448
        %v1459 = vmul.f32 %v1132, %v1451
        %v1460 = vmul.f32 %v1133, %v1450
        %s1461 = scalar_lea.vmem %s580, 128
        %v1462 = vld [vmem:[%s1461] sm:$0xff]
        %v1463 = vld [vmem:[%s1461 + $0x8] sm:$0xff]
        %1470 = vrot.lane.b32.xlu0 %v1455, 111
        %v1471 = vpop.permute.xlu0 %1470
        %1472 = vrot.lane.b32.xlu0 %v1456, 111
        %v1473 = vpop.permute.xlu0 %1472
        %1474 = vrot.lane.b32.xlu0 %v1457, 111
        %v1475 = vpop.permute.xlu0 %1474
        %1476 = vrot.lane.b32.xlu0 %v1458, 111
        %v1477 = vpop.permute.xlu0 %1476
        %1478 = vrot.lane.b32.xlu0 %v1459, 111
        %v1479 = vpop.permute.xlu0 %1478
        %1480 = vrot.lane.b32.xlu0 %v1460, 111
        %v1481 = vpop.permute.xlu0 %1480
        %v1482 = vsel %vm666, %v1471, %v1473
        %v1483 = vsel %vm666, %v1473, %v1475
        %v1484 = vsel %vm666, %v1477, %v1479
        %v1485 = vsel %vm666, %v1479, %v1481
        %v1491 = vsel %vm719, %v1462, 0
        %v1494 = vsel %vm719, %v1463, 0
        %1496 = vmatpush.msra.mxu0 0.0
        %1497 = vmatpush.msra.mxu0 0.0
        %1498 = vmatpush.msra.mxu0 0.0
        %1499 = vmatpush.msra.mxu0 0.0
        %1500 = vmatpush.msra.mxu0 0.0
        %1501 = vmatpush.msra.mxu0 0.0
        %1502 = vmatpush.msra.mxu0 0.0
        %1503 = vmatpush.msra.mxu0 0.0
        %1504 = vmatpush.msra.mxu0 0.0
        %1505 = vmatpush.msra.mxu0 0.0
        %1506 = vmatpush.msra.mxu0 0.0
        %1507 = vmatpush.msra.mxu0 0.0
        %1508 = vmatpush.msra.mxu0 0.0
        %1509 = vmatpush.msra.mxu0 0.0
        %1510 = vmatpush.msra.mxu0 %v1484
        %1511 = vmatpush.msra.mxu0 %v1482
        %1512 = vmatmul.f32.gmra.mxu0 %v1491
        %v1513 = vpop.f32.mrf.mxu0
        %v1514 = vadd.f32 0.0, %v1513
        %1515 = vmatmul.f32.gmra.mxu0 %v1494
        %v1516 = vpop.f32.mrf.mxu0
        %v1517 = vadd.f32 0.0, %v1516
        %1518 = vdwg.mxu0
        %1519 = vmatpush.msra.mxu0 0.0
        %1520 = vmatpush.msra.mxu0 0.0
        %1521 = vmatpush.msra.mxu0 0.0
        %1522 = vmatpush.msra.mxu0 0.0
        %1523 = vmatpush.msra.mxu0 0.0
        %1524 = vmatpush.msra.mxu0 0.0
        %1525 = vmatpush.msra.mxu0 0.0
        %1526 = vmatpush.msra.mxu0 0.0
        %1527 = vmatpush.msra.mxu0 0.0
        %1528 = vmatpush.msra.mxu0 0.0
        %1529 = vmatpush.msra.mxu0 0.0
        %1530 = vmatpush.msra.mxu0 0.0
        %1531 = vmatpush.msra.mxu0 0.0
        %1532 = vmatpush.msra.mxu0 0.0
        %1533 = vmatpush.msra.mxu0 %v1485
        %1534 = vmatpush.msra.mxu0 %v1483
        %1535 = vmatmul.f32.gmra.mxu0 %v1491
        %v1536 = vpop.f32.mrf.mxu0
        %v1537 = vadd.f32 0.0, %v1536
        %1538 = vmatmul.f32.gmra.mxu0 %v1494
        %v1539 = vpop.f32.mrf.mxu0
        %v1540 = vadd.f32 0.0, %v1539
        %1541 = vdwg.mxu0
        %v1542 = vadd.f32 %v1439, %v1514
        %v1543 = vadd.f32 %v1440, %v1537
        %v1544 = vadd.f32 %v1441, %v1517
        %v1545 = vadd.f32 %v1442, %v1540
        %v1546 = vld [vmem:[%s585] sm:$0xff]
        %v1547 = vld [vmem:[%s585 + $0x8] sm:$0xff]
        %1549 = vset.pattern.permute.xlu0 0
        %1550 = vperm.xlu0 %1549, %v1546
        %v1551 = vpop.permute.xlu0 %1550
        %1554 = vset.pattern.permute.xlu0 0
        %1555 = vperm.xlu0 %1554, %v1547
        %v1556 = vpop.permute.xlu0 %1555
        %v1558 = vadd.f32 %v1542, %v1551
        %v1559 = vadd.f32 %v1543, %v1551
        %v1560 = vadd.f32 %v1544, %v1556
        %v1561 = vadd.f32 %v1545, %v1556
        %vm1562 = vcmp.gt.f32.partialorder %v1558, 0.0
        %vm1563 = vcmp.gt.f32.partialorder %v1559, 0.0
        %vm1564 = vcmp.gt.f32.partialorder %v1560, 0.0
        %vm1565 = vcmp.gt.f32.partialorder %v1561, 0.0
        %v1566 = vstv %s643
        %v1567 = vmul.f32 %v1566, %v1558
        %v1568 = vmul.f32 %v1566, %v1559
        %v1569 = vmul.f32 %v1566, %v1560
        %v1570 = vmul.f32 %v1566, %v1561
        %v1571 = vsel %vm1562, %v1558, %v1567
        %v1572 = vsel %vm1563, %v1559, %v1568
        %v1573 = vsel %vm1564, %v1560, %v1569
        %v1574 = vsel %vm1565, %v1561, %v1570
        %v1575 = vadd.f32 %v1571, %v634
        %v1576 = vadd.f32 %v1572, %v635
        %v1577 = vadd.f32 %v1573, %v636
        %v1578 = vadd.f32 %v1574, %v637
        %1579 = vst [vmem:[#allocation2 + $0x8] sm:$0xff] %v1575
        %1580 = vst [vmem:[#allocation2 + $0x10] sm:$0xff] %v1576
        %1581 = vst [vmem:[#allocation2 + $0x28] sm:$0xff] %v1577
        %1582 = vst [vmem:[#allocation2 + $0x30] sm:$0xff] %v1578
        %v1583 = vld [vmem:[#allocation2] sm:$0xff]
        %v1584 = vld [vmem:[#allocation2 + $0x8] sm:$0xff]
        %v1585 = vld [vmem:[#allocation2 + $0x10] sm:$0xff]
        %v1586 = vld [vmem:[#allocation2 + $0x20] sm:$0xff]
        %v1587 = vld [vmem:[#allocation2 + $0x28] sm:$0xff]
        %v1588 = vld [vmem:[#allocation2 + $0x30] sm:$0xff]
        %v1589 = vmul.f32 %v1583, %v663
        %v1590 = vmul.f32 %v1584, %v667
        %v1591 = vmul.f32 %v1585, %v665
        %v1592 = vmul.f32 %v1586, %v663
        %v1593 = vmul.f32 %v1587, %v667
        %v1594 = vmul.f32 %v1588, %v665
        %v1595 = vld [vmem:[%s590] sm:$0xff]
        %v1596 = vld [vmem:[%s590 + $0x8] sm:$0xff]
        %v1597 = vmul.f32 %v1583, %v684
        %v1598 = vmul.f32 %v1584, %v688
        %v1599 = vmul.f32 %v1585, %v686
        %v1600 = vmul.f32 %v1586, %v684
        %v1601 = vmul.f32 %v1587, %v688
        %v1602 = vmul.f32 %v1588, %v686
        %s1603 = scalar_lea.vmem %s590, 16
        %v1604 = vld [vmem:[%s1603] sm:$0xff]
        %v1605 = vld [vmem:[%s1603 + $0x8] sm:$0xff]
        %1612 = vrot.lane.b32.xlu0 %v1597, 16
        %v1613 = vpop.permute.xlu0 %1612
        %1614 = vrot.lane.b32.xlu0 %v1598, 16
        %v1615 = vpop.permute.xlu0 %1614
        %1616 = vrot.lane.b32.xlu0 %v1599, 16
        %v1617 = vpop.permute.xlu0 %1616
        %1618 = vrot.lane.b32.xlu0 %v1600, 16
        %v1619 = vpop.permute.xlu0 %1618
        %1620 = vrot.lane.b32.xlu0 %v1601, 16
        %v1621 = vpop.permute.xlu0 %1620
        %1622 = vrot.lane.b32.xlu0 %v1602, 16
        %v1623 = vpop.permute.xlu0 %1622
        %v1624 = vsel %vm719, %v1613, %v1615
        %v1625 = vsel %vm719, %v1615, %v1617
        %v1626 = vsel %vm719, %v1619, %v1621
        %v1627 = vsel %vm719, %v1621, %v1623
        %v1633 = vsel %vm719, %v1604, 0
        %v1636 = vsel %vm719, %v1605, 0
        %1638 = vmatpush.msra.mxu0 0.0
        %1639 = vmatpush.msra.mxu0 0.0
        %1640 = vmatpush.msra.mxu0 0.0
        %1641 = vmatpush.msra.mxu0 0.0
        %1642 = vmatpush.msra.mxu0 0.0
        %1643 = vmatpush.msra.mxu0 0.0
        %1644 = vmatpush.msra.mxu0 0.0
        %1645 = vmatpush.msra.mxu0 0.0
        %1646 = vmatpush.msra.mxu0 0.0
        %1647 = vmatpush.msra.mxu0 0.0
        %1648 = vmatpush.msra.mxu0 0.0
        %1649 = vmatpush.msra.mxu0 0.0
        %1650 = vmatpush.msra.mxu0 0.0
        %1651 = vmatpush.msra.mxu0 0.0
        %1652 = vmatpush.msra.mxu0 %v1626
        %1653 = vmatpush.msra.mxu0 %v1624
        %1654 = vmatmul.f32.gmra.mxu0 %v1633
        %v1655 = vpop.f32.mrf.mxu0
        %v1656 = vadd.f32 0.0, %v1655
        %1657 = vmatmul.f32.gmra.mxu0 %v1636
        %v1658 = vpop.f32.mrf.mxu0
        %v1659 = vadd.f32 0.0, %v1658
        %1660 = vdwg.mxu0
        %1661 = vmatpush.msra.mxu0 0.0
        %1662 = vmatpush.msra.mxu0 0.0
        %1663 = vmatpush.msra.mxu0 0.0
        %1664 = vmatpush.msra.mxu0 0.0
        %1665 = vmatpush.msra.mxu0 0.0
        %1666 = vmatpush.msra.mxu0 0.0
        %1667 = vmatpush.msra.mxu0 0.0
        %1668 = vmatpush.msra.mxu0 0.0
        %1669 = vmatpush.msra.mxu0 0.0
        %1670 = vmatpush.msra.mxu0 0.0
        %1671 = vmatpush.msra.mxu0 0.0
        %1672 = vmatpush.msra.mxu0 0.0
        %1673 = vmatpush.msra.mxu0 0.0
        %1674 = vmatpush.msra.mxu0 0.0
        %1675 = vmatpush.msra.mxu0 %v1627
        %1676 = vmatpush.msra.mxu0 %v1625
        %1677 = vmatmul.f32.gmra.mxu0 %v1633
        %v1678 = vpop.f32.mrf.mxu0
        %v1679 = vadd.f32 0.0, %v1678
        %1680 = vmatmul.f32.gmra.mxu0 %v1636
        %v1681 = vpop.f32.mrf.mxu0
        %v1682 = vadd.f32 0.0, %v1681
        %1683 = vdwg.mxu0
        %1690 = vrot.lane.b32.xlu0 %v1589, 17
        %v1691 = vpop.permute.xlu0 %1690
        %1692 = vrot.lane.b32.xlu0 %v1590, 17
        %v1693 = vpop.permute.xlu0 %1692
        %1694 = vrot.lane.b32.xlu0 %v1591, 17
        %v1695 = vpop.permute.xlu0 %1694
        %1696 = vrot.lane.b32.xlu0 %v1592, 17
        %v1697 = vpop.permute.xlu0 %1696
        %1698 = vrot.lane.b32.xlu0 %v1593, 17
        %v1699 = vpop.permute.xlu0 %1698
        %1700 = vrot.lane.b32.xlu0 %v1594, 17
        %v1701 = vpop.permute.xlu0 %1700
        %v1702 = vsel %vm798, %v1691, %v1693
        %v1703 = vsel %vm798, %v1693, %v1695
        %v1704 = vsel %vm798, %v1697, %v1699
        %v1705 = vsel %vm798, %v1699, %v1701
        %v1711 = vsel %vm719, %v1595, 0
        %v1714 = vsel %vm719, %v1596, 0
        %1716 = vmatpush.msra.mxu0 0.0
        %1717 = vmatpush.msra.mxu0 0.0
        %1718 = vmatpush.msra.mxu0 0.0
        %1719 = vmatpush.msra.mxu0 0.0
        %1720 = vmatpush.msra.mxu0 0.0
        %1721 = vmatpush.msra.mxu0 0.0
        %1722 = vmatpush.msra.mxu0 0.0
        %1723 = vmatpush.msra.mxu0 0.0
        %1724 = vmatpush.msra.mxu0 0.0
        %1725 = vmatpush.msra.mxu0 0.0
        %1726 = vmatpush.msra.mxu0 0.0
        %1727 = vmatpush.msra.mxu0 0.0
        %1728 = vmatpush.msra.mxu0 0.0
        %1729 = vmatpush.msra.mxu0 0.0
        %1730 = vmatpush.msra.mxu0 %v1704
        %1731 = vmatpush.msra.mxu0 %v1702
        %1732 = vmatmul.f32.gmra.mxu0 %v1711
        %v1733 = vpop.f32.mrf.mxu0
        %v1734 = vadd.f32 %v1656, %v1733
        %1735 = vmatmul.f32.gmra.mxu0 %v1714
        %v1736 = vpop.f32.mrf.mxu0
        %v1737 = vadd.f32 %v1659, %v1736
        %1738 = vdwg.mxu0
        %1739 = vmatpush.msra.mxu0 0.0
        %1740 = vmatpush.msra.mxu0 0.0
        %1741 = vmatpush.msra.mxu0 0.0
        %1742 = vmatpush.msra.mxu0 0.0
        %1743 = vmatpush.msra.mxu0 0.0
        %1744 = vmatpush.msra.mxu0 0.0
        %1745 = vmatpush.msra.mxu0 0.0
        %1746 = vmatpush.msra.mxu0 0.0
        %1747 = vmatpush.msra.mxu0 0.0
        %1748 = vmatpush.msra.mxu0 0.0
        %1749 = vmatpush.msra.mxu0 0.0
        %1750 = vmatpush.msra.mxu0 0.0
        %1751 = vmatpush.msra.mxu0 0.0
        %1752 = vmatpush.msra.mxu0 0.0
        %1753 = vmatpush.msra.mxu0 %v1705
        %1754 = vmatpush.msra.mxu0 %v1703
        %1755 = vmatmul.f32.gmra.mxu0 %v1711
        %v1756 = vpop.f32.mrf.mxu0
        %v1757 = vadd.f32 %v1679, %v1756
        %1758 = vmatmul.f32.gmra.mxu0 %v1714
        %v1759 = vpop.f32.mrf.mxu0
        %v1760 = vadd.f32 %v1682, %v1759
        %1761 = vdwg.mxu0
        %v1762 = vmul.f32 %v1583, %v864
        %v1763 = vmul.f32 %v1584, %v868
        %v1764 = vmul.f32 %v1585, %v866
        %v1765 = vmul.f32 %v1586, %v864
        %v1766 = vmul.f32 %v1587, %v868
        %v1767 = vmul.f32 %v1588, %v866
        %s1768 = scalar_lea.vmem %s590, 32
        %v1769 = vld [vmem:[%s1768] sm:$0xff]
        %v1770 = vld [vmem:[%s1768 + $0x8] sm:$0xff]
        %1777 = vrot.lane.b32.xlu0 %v1762, 15
        %v1778 = vpop.permute.xlu0 %1777
        %1779 = vrot.lane.b32.xlu0 %v1763, 15
        %v1780 = vpop.permute.xlu0 %1779
        %1781 = vrot.lane.b32.xlu0 %v1764, 15
        %v1782 = vpop.permute.xlu0 %1781
        %1783 = vrot.lane.b32.xlu0 %v1765, 15
        %v1784 = vpop.permute.xlu0 %1783
        %1785 = vrot.lane.b32.xlu0 %v1766, 15
        %v1786 = vpop.permute.xlu0 %1785
        %1787 = vrot.lane.b32.xlu0 %v1767, 15
        %v1788 = vpop.permute.xlu0 %1787
        %v1789 = vsel %vm899, %v1778, %v1780
        %v1790 = vsel %vm899, %v1780, %v1782
        %v1791 = vsel %vm899, %v1784, %v1786
        %v1792 = vsel %vm899, %v1786, %v1788
        %v1798 = vsel %vm719, %v1769, 0
        %v1801 = vsel %vm719, %v1770, 0
        %1803 = vmatpush.msra.mxu0 0.0
        %1804 = vmatpush.msra.mxu0 0.0
        %1805 = vmatpush.msra.mxu0 0.0
        %1806 = vmatpush.msra.mxu0 0.0
        %1807 = vmatpush.msra.mxu0 0.0
        %1808 = vmatpush.msra.mxu0 0.0
        %1809 = vmatpush.msra.mxu0 0.0
        %1810 = vmatpush.msra.mxu0 0.0
        %1811 = vmatpush.msra.mxu0 0.0
        %1812 = vmatpush.msra.mxu0 0.0
        %1813 = vmatpush.msra.mxu0 0.0
        %1814 = vmatpush.msra.mxu0 0.0
        %1815 = vmatpush.msra.mxu0 0.0
        %1816 = vmatpush.msra.mxu0 0.0
        %1817 = vmatpush.msra.mxu0 %v1791
        %1818 = vmatpush.msra.mxu0 %v1789
        %1819 = vmatmul.f32.gmra.mxu0 %v1798
        %v1820 = vpop.f32.mrf.mxu0
        %v1821 = vadd.f32 0.0, %v1820
        %1822 = vmatmul.f32.gmra.mxu0 %v1801
        %v1823 = vpop.f32.mrf.mxu0
        %v1824 = vadd.f32 0.0, %v1823
        %1825 = vdwg.mxu0
        %1826 = vmatpush.msra.mxu0 0.0
        %1827 = vmatpush.msra.mxu0 0.0
        %1828 = vmatpush.msra.mxu0 0.0
        %1829 = vmatpush.msra.mxu0 0.0
        %1830 = vmatpush.msra.mxu0 0.0
        %1831 = vmatpush.msra.mxu0 0.0
        %1832 = vmatpush.msra.mxu0 0.0
        %1833 = vmatpush.msra.mxu0 0.0
        %1834 = vmatpush.msra.mxu0 0.0
        %1835 = vmatpush.msra.mxu0 0.0
        %1836 = vmatpush.msra.mxu0 0.0
        %1837 = vmatpush.msra.mxu0 0.0
        %1838 = vmatpush.msra.mxu0 0.0
        %1839 = vmatpush.msra.mxu0 0.0
        %1840 = vmatpush.msra.mxu0 %v1792
        %1841 = vmatpush.msra.mxu0 %v1790
        %1842 = vmatmul.f32.gmra.mxu0 %v1798
        %v1843 = vpop.f32.mrf.mxu0
        %v1844 = vadd.f32 0.0, %v1843
        %1845 = vmatmul.f32.gmra.mxu0 %v1801
        %v1846 = vpop.f32.mrf.mxu0
        %v1847 = vadd.f32 0.0, %v1846
        %1848 = vdwg.mxu0
        %v1849 = vadd.f32 %v1734, %v1821
        %v1850 = vadd.f32 %v1757, %v1844
        %v1851 = vadd.f32 %v1737, %v1824
        %v1852 = vadd.f32 %v1760, %v1847
        %v1853 = vmul.f32 %v1583, %v969
        %v1854 = vmul.f32 %v1584, %v973
        %v1855 = vmul.f32 %v1585, %v971
        %v1856 = vmul.f32 %v1586, %v969
        %v1857 = vmul.f32 %v1587, %v973
        %v1858 = vmul.f32 %v1588, %v971
        %s1859 = scalar_lea.vmem %s590, 48
        %v1860 = vld [vmem:[%s1859] sm:$0xff]
        %v1861 = vld [vmem:[%s1859 + $0x8] sm:$0xff]
        %1868 = vrot.lane.b32.xlu0 %v1853, 1
        %v1869 = vpop.permute.xlu0 %1868
        %1870 = vrot.lane.b32.xlu0 %v1854, 1
        %v1871 = vpop.permute.xlu0 %1870
        %1872 = vrot.lane.b32.xlu0 %v1855, 1
        %v1873 = vpop.permute.xlu0 %1872
        %1874 = vrot.lane.b32.xlu0 %v1856, 1
        %v1875 = vpop.permute.xlu0 %1874
        %1876 = vrot.lane.b32.xlu0 %v1857, 1
        %v1877 = vpop.permute.xlu0 %1876
        %1878 = vrot.lane.b32.xlu0 %v1858, 1
        %v1879 = vpop.permute.xlu0 %1878
        %v1880 = vsel %vm1004, %v1869, %v1871
        %v1881 = vsel %vm1004, %v1871, %v1873
        %v1882 = vsel %vm1004, %v1875, %v1877
        %v1883 = vsel %vm1004, %v1877, %v1879
        %v1889 = vsel %vm719, %v1860, 0
        %v1892 = vsel %vm719, %v1861, 0
        %1894 = vmatpush.msra.mxu0 0.0
        %1895 = vmatpush.msra.mxu0 0.0
        %1896 = vmatpush.msra.mxu0 0.0
        %1897 = vmatpush.msra.mxu0 0.0
        %1898 = vmatpush.msra.mxu0 0.0
        %1899 = vmatpush.msra.mxu0 0.0
        %1900 = vmatpush.msra.mxu0 0.0
        %1901 = vmatpush.msra.mxu0 0.0
        %1902 = vmatpush.msra.mxu0 0.0
        %1903 = vmatpush.msra.mxu0 0.0
        %1904 = vmatpush.msra.mxu0 0.0
        %1905 = vmatpush.msra.mxu0 0.0
        %1906 = vmatpush.msra.mxu0 0.0
        %1907 = vmatpush.msra.mxu0 0.0
        %1908 = vmatpush.msra.mxu0 %v1882
        %1909 = vmatpush.msra.mxu0 %v1880
        %1910 = vmatmul.f32.gmra.mxu0 %v1889
        %v1911 = vpop.f32.mrf.mxu0
        %v1912 = vadd.f32 0.0, %v1911
        %1913 = vmatmul.f32.gmra.mxu0 %v1892
        %v1914 = vpop.f32.mrf.mxu0
        %v1915 = vadd.f32 0.0, %v1914
        %1916 = vdwg.mxu0
        %1917 = vmatpush.msra.mxu0 0.0
        %1918 = vmatpush.msra.mxu0 0.0
        %1919 = vmatpush.msra.mxu0 0.0
        %1920 = vmatpush.msra.mxu0 0.0
        %1921 = vmatpush.msra.mxu0 0.0
        %1922 = vmatpush.msra.mxu0 0.0
        %1923 = vmatpush.msra.mxu0 0.0
        %1924 = vmatpush.msra.mxu0 0.0
        %1925 = vmatpush.msra.mxu0 0.0
        %1926 = vmatpush.msra.mxu0 0.0
        %1927 = vmatpush.msra.mxu0 0.0
        %1928 = vmatpush.msra.mxu0 0.0
        %1929 = vmatpush.msra.mxu0 0.0
        %1930 = vmatpush.msra.mxu0 0.0
        %1931 = vmatpush.msra.mxu0 %v1883
        %1932 = vmatpush.msra.mxu0 %v1881
        %1933 = vmatmul.f32.gmra.mxu0 %v1889
        %v1934 = vpop.f32.mrf.mxu0
        %v1935 = vadd.f32 0.0, %v1934
        %1936 = vmatmul.f32.gmra.mxu0 %v1892
        %v1937 = vpop.f32.mrf.mxu0
        %v1938 = vadd.f32 0.0, %v1937
        %1939 = vdwg.mxu0
        %v1940 = vadd.f32 %v1849, %v1912
        %v1941 = vadd.f32 %v1850, %v1935
        %v1942 = vadd.f32 %v1851, %v1915
        %v1943 = vadd.f32 %v1852, %v1938
        %s1944 = scalar_lea.vmem %s590, 64
        %v1945 = vld [vmem:[%s1944] sm:$0xff]
        %v1946 = vld [vmem:[%s1944 + $0x8] sm:$0xff]
        %v1948 = vsel %vm719, %v1945, 0
        %v1951 = vsel %vm719, %v1946, 0
        %1953 = vmatpush.msra.mxu0 0.0
        %1954 = vmatpush.msra.mxu0 0.0
        %1955 = vmatpush.msra.mxu0 0.0
        %1956 = vmatpush.msra.mxu0 0.0
        %1957 = vmatpush.msra.mxu0 0.0
        %1958 = vmatpush.msra.mxu0 0.0
        %1959 = vmatpush.msra.mxu0 0.0
        %1960 = vmatpush.msra.mxu0 0.0
        %1961 = vmatpush.msra.mxu0 0.0
        %1962 = vmatpush.msra.mxu0 0.0
        %1963 = vmatpush.msra.mxu0 0.0
        %1964 = vmatpush.msra.mxu0 0.0
        %1965 = vmatpush.msra.mxu0 0.0
        %1966 = vmatpush.msra.mxu0 0.0
        %1967 = vmatpush.msra.mxu0 %v1587
        %1968 = vmatpush.msra.mxu0 %v1584
        %1969 = vmatmul.f32.gmra.mxu0 %v1948
        %v1970 = vpop.f32.mrf.mxu0
        %v1971 = vadd.f32 0.0, %v1970
        %1972 = vmatmul.f32.gmra.mxu0 %v1951
        %v1973 = vpop.f32.mrf.mxu0
        %v1974 = vadd.f32 0.0, %v1973
        %1975 = vdwg.mxu0
        %1976 = vmatpush.msra.mxu0 0.0
        %1977 = vmatpush.msra.mxu0 0.0
        %1978 = vmatpush.msra.mxu0 0.0
        %1979 = vmatpush.msra.mxu0 0.0
        %1980 = vmatpush.msra.mxu0 0.0
        %1981 = vmatpush.msra.mxu0 0.0
        %1982 = vmatpush.msra.mxu0 0.0
        %1983 = vmatpush.msra.mxu0 0.0
        %1984 = vmatpush.msra.mxu0 0.0
        %1985 = vmatpush.msra.mxu0 0.0
        %1986 = vmatpush.msra.mxu0 0.0
        %1987 = vmatpush.msra.mxu0 0.0
        %1988 = vmatpush.msra.mxu0 0.0
        %1989 = vmatpush.msra.mxu0 0.0
        %1990 = vmatpush.msra.mxu0 %v1588
        %1991 = vmatpush.msra.mxu0 %v1585
        %1992 = vmatmul.f32.gmra.mxu0 %v1948
        %v1993 = vpop.f32.mrf.mxu0
        %v1994 = vadd.f32 0.0, %v1993
        %1995 = vmatmul.f32.gmra.mxu0 %v1951
        %v1996 = vpop.f32.mrf.mxu0
        %v1997 = vadd.f32 0.0, %v1996
        %1998 = vdwg.mxu0
        %v1999 = vadd.f32 %v1940, %v1971
        %v2000 = vadd.f32 %v1941, %v1994
        %v2001 = vadd.f32 %v1942, %v1974
        %v2002 = vadd.f32 %v1943, %v1997
        %v2003 = vld [vmem:[#allocation2 + $0x8] sm:$0xff]
        %v2004 = vld [vmem:[#allocation2 + $0x10] sm:$0xff]
        %v2005 = vld [vmem:[#allocation2 + $0x18] sm:$0xff]
        %v2006 = vld [vmem:[#allocation2 + $0x28] sm:$0xff]
        %v2007 = vld [vmem:[#allocation2 + $0x30] sm:$0xff]
        %v2008 = vld [vmem:[#allocation2 + $0x38] sm:$0xff]
        %v2009 = vmul.f32 %v2003, %v1139
        %v2010 = vmul.f32 %v2004, %v1142
        %v2011 = vmul.f32 %v2005, %v1141
        %v2012 = vmul.f32 %v2006, %v1139
        %v2013 = vmul.f32 %v2007, %v1142
        %v2014 = vmul.f32 %v2008, %v1141
        %s2015 = scalar_lea.vmem %s590, 80
        %v2016 = vld [vmem:[%s2015] sm:$0xff]
        %v2017 = vld [vmem:[%s2015 + $0x8] sm:$0xff]
        %2024 = vrot.lane.b32.xlu0 %v2009, 127
        %v2025 = vpop.permute.xlu0 %2024
        %2026 = vrot.lane.b32.xlu0 %v2010, 127
        %v2027 = vpop.permute.xlu0 %2026
        %2028 = vrot.lane.b32.xlu0 %v2011, 127
        %v2029 = vpop.permute.xlu0 %2028
        %2030 = vrot.lane.b32.xlu0 %v2012, 127
        %v2031 = vpop.permute.xlu0 %2030
        %2032 = vrot.lane.b32.xlu0 %v2013, 127
        %v2033 = vpop.permute.xlu0 %2032
        %2034 = vrot.lane.b32.xlu0 %v2014, 127
        %v2035 = vpop.permute.xlu0 %2034
        %v2036 = vsel %vm972, %v2025, %v2027
        %v2037 = vsel %vm972, %v2027, %v2029
        %v2038 = vsel %vm972, %v2031, %v2033
        %v2039 = vsel %vm972, %v2033, %v2035
        %v2045 = vsel %vm719, %v2016, 0
        %v2048 = vsel %vm719, %v2017, 0
        %2050 = vmatpush.msra.mxu0 0.0
        %2051 = vmatpush.msra.mxu0 0.0
        %2052 = vmatpush.msra.mxu0 0.0
        %2053 = vmatpush.msra.mxu0 0.0
        %2054 = vmatpush.msra.mxu0 0.0
        %2055 = vmatpush.msra.mxu0 0.0
        %2056 = vmatpush.msra.mxu0 0.0
        %2057 = vmatpush.msra.mxu0 0.0
        %2058 = vmatpush.msra.mxu0 0.0
        %2059 = vmatpush.msra.mxu0 0.0
        %2060 = vmatpush.msra.mxu0 0.0
        %2061 = vmatpush.msra.mxu0 0.0
        %2062 = vmatpush.msra.mxu0 0.0
        %2063 = vmatpush.msra.mxu0 0.0
        %2064 = vmatpush.msra.mxu0 %v2038
        %2065 = vmatpush.msra.mxu0 %v2036
        %2066 = vmatmul.f32.gmra.mxu0 %v2045
        %v2067 = vpop.f32.mrf.mxu0
        %v2068 = vadd.f32 0.0, %v2067
        %2069 = vmatmul.f32.gmra.mxu0 %v2048
        %v2070 = vpop.f32.mrf.mxu0
        %v2071 = vadd.f32 0.0, %v2070
        %2072 = vdwg.mxu0
        %2073 = vmatpush.msra.mxu0 0.0
        %2074 = vmatpush.msra.mxu0 0.0
        %2075 = vmatpush.msra.mxu0 0.0
        %2076 = vmatpush.msra.mxu0 0.0
        %2077 = vmatpush.msra.mxu0 0.0
        %2078 = vmatpush.msra.mxu0 0.0
        %2079 = vmatpush.msra.mxu0 0.0
        %2080 = vmatpush.msra.mxu0 0.0
        %2081 = vmatpush.msra.mxu0 0.0
        %2082 = vmatpush.msra.mxu0 0.0
        %2083 = vmatpush.msra.mxu0 0.0
        %2084 = vmatpush.msra.mxu0 0.0
        %2085 = vmatpush.msra.mxu0 0.0
        %2086 = vmatpush.msra.mxu0 0.0
        %2087 = vmatpush.msra.mxu0 %v2039
        %2088 = vmatpush.msra.mxu0 %v2037
        %2089 = vmatmul.f32.gmra.mxu0 %v2045
        %v2090 = vpop.f32.mrf.mxu0
        %v2091 = vadd.f32 0.0, %v2090
        %2092 = vmatmul.f32.gmra.mxu0 %v2048
        %v2093 = vpop.f32.mrf.mxu0
        %v2094 = vadd.f32 0.0, %v2093
        %2095 = vdwg.mxu0
        %v2096 = vadd.f32 %v1999, %v2068
        %v2097 = vadd.f32 %v2000, %v2091
        %v2098 = vadd.f32 %v2001, %v2071
        %v2099 = vadd.f32 %v2002, %v2094
        %v2100 = vmul.f32 %v2003, %v1242
        %v2101 = vmul.f32 %v2004, %v1245
        %v2102 = vmul.f32 %v2005, %v1244
        %v2103 = vmul.f32 %v2006, %v1242
        %v2104 = vmul.f32 %v2007, %v1245
        %v2105 = vmul.f32 %v2008, %v1244
        %s2106 = scalar_lea.vmem %s590, 96
        %v2107 = vld [vmem:[%s2106] sm:$0xff]
        %v2108 = vld [vmem:[%s2106 + $0x8] sm:$0xff]
        %2115 = vrot.lane.b32.xlu0 %v2100, 113
        %v2116 = vpop.permute.xlu0 %2115
        %2117 = vrot.lane.b32.xlu0 %v2101, 113
        %v2118 = vpop.permute.xlu0 %2117
        %2119 = vrot.lane.b32.xlu0 %v2102, 113
        %v2120 = vpop.permute.xlu0 %2119
        %2121 = vrot.lane.b32.xlu0 %v2103, 113
        %v2122 = vpop.permute.xlu0 %2121
        %2123 = vrot.lane.b32.xlu0 %v2104, 113
        %v2124 = vpop.permute.xlu0 %2123
        %2125 = vrot.lane.b32.xlu0 %v2105, 113
        %v2126 = vpop.permute.xlu0 %2125
        %v2127 = vsel %vm867, %v2116, %v2118
        %v2128 = vsel %vm867, %v2118, %v2120
        %v2129 = vsel %vm867, %v2122, %v2124
        %v2130 = vsel %vm867, %v2124, %v2126
        %v2136 = vsel %vm719, %v2107, 0
        %v2139 = vsel %vm719, %v2108, 0
        %2141 = vmatpush.msra.mxu0 0.0
        %2142 = vmatpush.msra.mxu0 0.0
        %2143 = vmatpush.msra.mxu0 0.0
        %2144 = vmatpush.msra.mxu0 0.0
        %2145 = vmatpush.msra.mxu0 0.0
        %2146 = vmatpush.msra.mxu0 0.0
        %2147 = vmatpush.msra.mxu0 0.0
        %2148 = vmatpush.msra.mxu0 0.0
        %2149 = vmatpush.msra.mxu0 0.0
        %2150 = vmatpush.msra.mxu0 0.0
        %2151 = vmatpush.msra.mxu0 0.0
        %2152 = vmatpush.msra.mxu0 0.0
        %2153 = vmatpush.msra.mxu0 0.0
        %2154 = vmatpush.msra.mxu0 0.0
        %2155 = vmatpush.msra.mxu0 %v2129
        %2156 = vmatpush.msra.mxu0 %v2127
        %2157 = vmatmul.f32.gmra.mxu0 %v2136
        %v2158 = vpop.f32.mrf.mxu0
        %v2159 = vadd.f32 0.0, %v2158
        %2160 = vmatmul.f32.gmra.mxu0 %v2139
        %v2161 = vpop.f32.mrf.mxu0
        %v2162 = vadd.f32 0.0, %v2161
        %2163 = vdwg.mxu0
        %2164 = vmatpush.msra.mxu0 0.0
        %2165 = vmatpush.msra.mxu0 0.0
        %2166 = vmatpush.msra.mxu0 0.0
        %2167 = vmatpush.msra.mxu0 0.0
        %2168 = vmatpush.msra.mxu0 0.0
        %2169 = vmatpush.msra.mxu0 0.0
        %2170 = vmatpush.msra.mxu0 0.0
        %2171 = vmatpush.msra.mxu0 0.0
        %2172 = vmatpush.msra.mxu0 0.0
        %2173 = vmatpush.msra.mxu0 0.0
        %2174 = vmatpush.msra.mxu0 0.0
        %2175 = vmatpush.msra.mxu0 0.0
        %2176 = vmatpush.msra.mxu0 0.0
        %2177 = vmatpush.msra.mxu0 0.0
        %2178 = vmatpush.msra.mxu0 %v2130
        %2179 = vmatpush.msra.mxu0 %v2128
        %2180 = vmatmul.f32.gmra.mxu0 %v2136
        %v2181 = vpop.f32.mrf.mxu0
        %v2182 = vadd.f32 0.0, %v2181
        %2183 = vmatmul.f32.gmra.mxu0 %v2139
        %v2184 = vpop.f32.mrf.mxu0
        %v2185 = vadd.f32 0.0, %v2184
        %2186 = vdwg.mxu0
        %v2187 = vadd.f32 %v2096, %v2159
        %v2188 = vadd.f32 %v2097, %v2182
        %v2189 = vadd.f32 %v2098, %v2162
        %v2190 = vadd.f32 %v2099, %v2185
        %v2191 = vmul.f32 %v2003, %v1345
        %v2192 = vmul.f32 %v2004, %v1348
        %v2193 = vmul.f32 %v2005, %v1347
        %v2194 = vmul.f32 %v2006, %v1345
        %v2195 = vmul.f32 %v2007, %v1348
        %v2196 = vmul.f32 %v2008, %v1347
        %s2197 = scalar_lea.vmem %s590, 112
        %v2198 = vld [vmem:[%s2197] sm:$0xff]
        %v2199 = vld [vmem:[%s2197 + $0x8] sm:$0xff]
        %2206 = vrot.lane.b32.xlu0 %v2191, 112
        %v2207 = vpop.permute.xlu0 %2206
        %2208 = vrot.lane.b32.xlu0 %v2192, 112
        %v2209 = vpop.permute.xlu0 %2208
        %2210 = vrot.lane.b32.xlu0 %v2193, 112
        %v2211 = vpop.permute.xlu0 %2210
        %2212 = vrot.lane.b32.xlu0 %v2194, 112
        %v2213 = vpop.permute.xlu0 %2212
        %2214 = vrot.lane.b32.xlu0 %v2195, 112
        %v2215 = vpop.permute.xlu0 %2214
        %2216 = vrot.lane.b32.xlu0 %v2196, 112
        %v2217 = vpop.permute.xlu0 %2216
        %v2218 = vsel %vm687, %v2207, %v2209
        %v2219 = vsel %vm687, %v2209, %v2211
        %v2220 = vsel %vm687, %v2213, %v2215
        %v2221 = vsel %vm687, %v2215, %v2217
        %v2227 = vsel %vm719, %v2198, 0
        %v2230 = vsel %vm719, %v2199, 0
        %2232 = vmatpush.msra.mxu0 0.0
        %2233 = vmatpush.msra.mxu0 0.0
        %2234 = vmatpush.msra.mxu0 0.0
        %2235 = vmatpush.msra.mxu0 0.0
        %2236 = vmatpush.msra.mxu0 0.0
        %2237 = vmatpush.msra.mxu0 0.0
        %2238 = vmatpush.msra.mxu0 0.0
        %2239 = vmatpush.msra.mxu0 0.0
        %2240 = vmatpush.msra.mxu0 0.0
        %2241 = vmatpush.msra.mxu0 0.0
        %2242 = vmatpush.msra.mxu0 0.0
        %2243 = vmatpush.msra.mxu0 0.0
        %2244 = vmatpush.msra.mxu0 0.0
        %2245 = vmatpush.msra.mxu0 0.0
        %2246 = vmatpush.msra.mxu0 %v2220
        %2247 = vmatpush.msra.mxu0 %v2218
        %2248 = vmatmul.f32.gmra.mxu0 %v2227
        %v2249 = vpop.f32.mrf.mxu0
        %v2250 = vadd.f32 0.0, %v2249
        %2251 = vmatmul.f32.gmra.mxu0 %v2230
        %v2252 = vpop.f32.mrf.mxu0
        %v2253 = vadd.f32 0.0, %v2252
        %2254 = vdwg.mxu0
        %2255 = vmatpush.msra.mxu0 0.0
        %2256 = vmatpush.msra.mxu0 0.0
        %2257 = vmatpush.msra.mxu0 0.0
        %2258 = vmatpush.msra.mxu0 0.0
        %2259 = vmatpush.msra.mxu0 0.0
        %2260 = vmatpush.msra.mxu0 0.0
        %2261 = vmatpush.msra.mxu0 0.0
        %2262 = vmatpush.msra.mxu0 0.0
        %2263 = vmatpush.msra.mxu0 0.0
        %2264 = vmatpush.msra.mxu0 0.0
        %2265 = vmatpush.msra.mxu0 0.0
        %2266 = vmatpush.msra.mxu0 0.0
        %2267 = vmatpush.msra.mxu0 0.0
        %2268 = vmatpush.msra.mxu0 0.0
        %2269 = vmatpush.msra.mxu0 %v2221
        %2270 = vmatpush.msra.mxu0 %v2219
        %2271 = vmatmul.f32.gmra.mxu0 %v2227
        %v2272 = vpop.f32.mrf.mxu0
        %v2273 = vadd.f32 0.0, %v2272
        %2274 = vmatmul.f32.gmra.mxu0 %v2230
        %v2275 = vpop.f32.mrf.mxu0
        %v2276 = vadd.f32 0.0, %v2275
        %2277 = vdwg.mxu0
        %v2278 = vadd.f32 %v2187, %v2250
        %v2279 = vadd.f32 %v2188, %v2273
        %v2280 = vadd.f32 %v2189, %v2253
        %v2281 = vadd.f32 %v2190, %v2276
        %v2282 = vmul.f32 %v2003, %v1448
        %v2283 = vmul.f32 %v2004, %v1451
        %v2284 = vmul.f32 %v2005, %v1450
        %v2285 = vmul.f32 %v2006, %v1448
        %v2286 = vmul.f32 %v2007, %v1451
        %v2287 = vmul.f32 %v2008, %v1450
        %s2288 = scalar_lea.vmem %s590, 128
        %v2289 = vld [vmem:[%s2288] sm:$0xff]
        %v2290 = vld [vmem:[%s2288 + $0x8] sm:$0xff]
        %2297 = vrot.lane.b32.xlu0 %v2282, 111
        %v2298 = vpop.permute.xlu0 %2297
        %2299 = vrot.lane.b32.xlu0 %v2283, 111
        %v2300 = vpop.permute.xlu0 %2299
        %2301 = vrot.lane.b32.xlu0 %v2284, 111
        %v2302 = vpop.permute.xlu0 %2301
        %2303 = vrot.lane.b32.xlu0 %v2285, 111
        %v2304 = vpop.permute.xlu0 %2303
        %2305 = vrot.lane.b32.xlu0 %v2286, 111
        %v2306 = vpop.permute.xlu0 %2305
        %2307 = vrot.lane.b32.xlu0 %v2287, 111
        %v2308 = vpop.permute.xlu0 %2307
        %v2309 = vsel %vm666, %v2298, %v2300
        %v2310 = vsel %vm666, %v2300, %v2302
        %v2311 = vsel %vm666, %v2304, %v2306
        %v2312 = vsel %vm666, %v2306, %v2308
        %v2318 = vsel %vm719, %v2289, 0
        %v2321 = vsel %vm719, %v2290, 0
        %2323 = vmatpush.msra.mxu0 0.0
        %2324 = vmatpush.msra.mxu0 0.0
        %2325 = vmatpush.msra.mxu0 0.0
        %2326 = vmatpush.msra.mxu0 0.0
        %2327 = vmatpush.msra.mxu0 0.0
        %2328 = vmatpush.msra.mxu0 0.0
        %2329 = vmatpush.msra.mxu0 0.0
        %2330 = vmatpush.msra.mxu0 0.0
        %2331 = vmatpush.msra.mxu0 0.0
        %2332 = vmatpush.msra.mxu0 0.0
        %2333 = vmatpush.msra.mxu0 0.0
        %2334 = vmatpush.msra.mxu0 0.0
        %2335 = vmatpush.msra.mxu0 0.0
        %2336 = vmatpush.msra.mxu0 0.0
        %2337 = vmatpush.msra.mxu0 %v2311
        %2338 = vmatpush.msra.mxu0 %v2309
        %2339 = vmatmul.f32.gmra.mxu0 %v2318
        %v2340 = vpop.f32.mrf.mxu0
        %v2341 = vadd.f32 0.0, %v2340
        %2342 = vmatmul.f32.gmra.mxu0 %v2321
        %v2343 = vpop.f32.mrf.mxu0
        %v2344 = vadd.f32 0.0, %v2343
        %2345 = vdwg.mxu0
        %2346 = vmatpush.msra.mxu0 0.0
        %2347 = vmatpush.msra.mxu0 0.0
        %2348 = vmatpush.msra.mxu0 0.0
        %2349 = vmatpush.msra.mxu0 0.0
        %2350 = vmatpush.msra.mxu0 0.0
        %2351 = vmatpush.msra.mxu0 0.0
        %2352 = vmatpush.msra.mxu0 0.0
        %2353 = vmatpush.msra.mxu0 0.0
        %2354 = vmatpush.msra.mxu0 0.0
        %2355 = vmatpush.msra.mxu0 0.0
        %2356 = vmatpush.msra.mxu0 0.0
        %2357 = vmatpush.msra.mxu0 0.0
        %2358 = vmatpush.msra.mxu0 0.0
        %2359 = vmatpush.msra.mxu0 0.0
        %2360 = vmatpush.msra.mxu0 %v2312
        %2361 = vmatpush.msra.mxu0 %v2310
        %2362 = vmatmul.f32.gmra.mxu0 %v2318
        %v2363 = vpop.f32.mrf.mxu0
        %v2364 = vadd.f32 0.0, %v2363
        %2365 = vmatmul.f32.gmra.mxu0 %v2321
        %v2366 = vpop.f32.mrf.mxu0
        %v2367 = vadd.f32 0.0, %v2366
        %2368 = vdwg.mxu0
        %v2369 = vadd.f32 %v2278, %v2341
        %v2370 = vadd.f32 %v2279, %v2364
        %v2371 = vadd.f32 %v2280, %v2344
        %v2372 = vadd.f32 %v2281, %v2367
        %v2373 = vld [vmem:[%s595] sm:$0xff]
        %v2374 = vld [vmem:[%s595 + $0x8] sm:$0xff]
        %2376 = vset.pattern.permute.xlu0 0
        %2377 = vperm.xlu0 %2376, %v2373
        %v2378 = vpop.permute.xlu0 %2377
        %2381 = vset.pattern.permute.xlu0 0
        %2382 = vperm.xlu0 %2381, %v2374
        %v2383 = vpop.permute.xlu0 %2382
        %v2385 = vadd.f32 %v2369, %v2378
        %v2386 = vadd.f32 %v2370, %v2378
        %v2387 = vadd.f32 %v2371, %v2383
        %v2388 = vadd.f32 %v2372, %v2383
        %v2389 = vadd.f32 %v2385, %v2386
        %2390 = vadd.xlane.f32.xlu0 %v2389
        %v2391 = vpop.xlane.xlu0 %2390
        %v2392 = vadd.f32 %v2387, %v2388
        %2393 = vadd.xlane.f32.xlu0 %v2392
        %v2394 = vpop.xlane.xlu0 %2393
        %v2395 = vrcp.pop 256.0
        %v2396 = vmul.f32 256.0, %v2395
        %v2397 = vsub.f32 1.0, %v2396
        %v2398 = vmul.f32 %v2395, %v2397
        %v2399 = vadd.f32 %v2395, %v2398
        %vm2400 = vweird.f32 %v2395
        %v2401 = vsel %vm2400, %v2395, %v2399
        %v2402 = vmul.f32 %v2391, %v2401
        %v2403 = vmul.f32 %v2394, %v2401
        %v2404 = vld [vmem:[%s600] sm:$0xff]
        %v2405 = vld [vmem:[%s600 + $0x8] sm:$0xff]
        %v2407 = vsel %vm719, %v2404, 0
        %v2410 = vsel %vm719, %v2405, 0
        %2412 = vmatpush.msra.mxu0 0.0
        %2413 = vmatpush.msra.mxu0 0.0
        %2414 = vmatpush.msra.mxu0 0.0
        %2415 = vmatpush.msra.mxu0 0.0
        %2416 = vmatpush.msra.mxu0 0.0
        %2417 = vmatpush.msra.mxu0 0.0
        %2418 = vmatpush.msra.mxu0 0.0
        %2419 = vmatpush.msra.mxu0 0.0
        %2420 = vmatpush.msra.mxu0 0.0
        %2421 = vmatpush.msra.mxu0 0.0
        %2422 = vmatpush.msra.mxu0 0.0
        %2423 = vmatpush.msra.mxu0 0.0
        %2424 = vmatpush.msra.mxu0 0.0
        %2425 = vmatpush.msra.mxu0 0.0
        %2426 = vmatpush.msra.mxu0 %v2403
        %2427 = vmatpush.msra.mxu0 %v2402
        %2428 = vmatmul.f32.gmra.mxu0 %v2407
        %v2429 = vpop.f32.mrf.mxu0
        %v2430 = vadd.f32 0.0, %v2429
        %2431 = vmatmul.f32.gmra.mxu0 %v2410
        %v2432 = vpop.f32.mrf.mxu0
        %v2433 = vadd.f32 0.0, %v2432
        %2434 = vdwg.mxu0
        %v2435 = vxor.u32 %v2430, 2147483648
        %v2436 = vxor.u32 %v2433, 2147483648
        %v2437 = vmul.f32 %v2435, 1.442695
        %v2438 = vpow.pop %v2437
        %v2439 = vmul.f32 %v2436, 1.442695
        %v2440 = vpow.pop %v2439
        %v2441 = vadd.f32 %v2438, 1.0
        %v2442 = vadd.f32 %v2440, 1.0
        %v2443 = vrcp.pop %v2441
        %v2444 = vmul.f32 %v2441, %v2443
        %v2445 = vsub.f32 1.0, %v2444
        %v2446 = vmul.f32 %v2443, %v2445
        %v2447 = vadd.f32 %v2443, %v2446
        %vm2448 = vweird.f32 %v2441
        %vm2449 = vweird.f32 %v2443
        %vm2450 = vmor %vm2448, %vm2449
        %v2451 = vsel %vm2450, %v2443, %v2447
        %v2452 = vand.u32 2147483647, %v2441
        %vm2453 = vcmp.eq.f32.partialorder %v2452, 8.507059e+37
        %v2454 = vand.u32 %v2441, 2147483648
        %v2455 = vor.u32 1.1754944e-38, %v2454
        %v2456 = vsel %vm2453, %v2455, %v2451
        %v2457 = vmul.f32 1.0, %v2456
        %v2458 = vrcp.pop %v2442
        %v2459 = vmul.f32 %v2442, %v2458
        %v2460 = vsub.f32 1.0, %v2459
        %v2461 = vmul.f32 %v2458, %v2460
        %v2462 = vadd.f32 %v2458, %v2461
        %vm2463 = vweird.f32 %v2442
        %vm2464 = vweird.f32 %v2458
        %vm2465 = vmor %vm2463, %vm2464
        %v2466 = vsel %vm2465, %v2458, %v2462
        %v2467 = vand.u32 2147483647, %v2442
        %vm2468 = vcmp.eq.f32.partialorder %v2467, 8.507059e+37
        %v2469 = vand.u32 %v2442, 2147483648
        %v2470 = vor.u32 1.1754944e-38, %v2469
        %v2471 = vsel %vm2468, %v2470, %v2466
        %v2472 = vmul.f32 1.0, %v2471
        %2474 = vset.pattern.permute.xlu0 0
        %2475 = vperm.xlu0 %2474, %v2457
        %v2476 = vpop.permute.xlu0 %2475
        %2479 = vset.pattern.permute.xlu0 0
        %2480 = vperm.xlu0 %2479, %v2472
        %v2481 = vpop.permute.xlu0 %2480
        %v2483 = vmul.f32 %v2385, %v2476
        %v2484 = vmul.f32 %v2386, %v2476
        %v2485 = vmul.f32 %v2387, %v2481
        %v2486 = vmul.f32 %v2388, %v2481
        %v2487 = vld [vmem:[%s604] sm:$0x3]
        %v2488 = vld [vmem:[%s608] sm:$0x3]
        %2490 = vset.pattern.permute.xlu0 0
        %2491 = vperm.xlu0 %2490, %v2488
        %v2492 = vpop.permute.xlu0 %2491
        %v2495 = vsel %vm719, %v2487, 0
        %2497 = vmatpush.msra.mxu0 0.0
        %2498 = vmatpush.msra.mxu0 0.0
        %2499 = vmatpush.msra.mxu0 0.0
        %2500 = vmatpush.msra.mxu0 0.0
        %2501 = vmatpush.msra.mxu0 0.0
        %2502 = vmatpush.msra.mxu0 0.0
        %2503 = vmatpush.msra.mxu0 0.0
        %2504 = vmatpush.msra.mxu0 0.0
        %2505 = vmatpush.msra.mxu0 0.0
        %2506 = vmatpush.msra.mxu0 0.0
        %2507 = vmatpush.msra.mxu0 0.0
        %2508 = vmatpush.msra.mxu0 0.0
        %2509 = vmatpush.msra.mxu0 0.0
        %2510 = vmatpush.msra.mxu0 0.0
        %2511 = vmatpush.msra.mxu0 %v2485
        %2512 = vmatpush.msra.mxu0 %v2483
        %2513 = vmatmul.f32.gmra.mxu0 %v2495
        %v2514 = vpop.f32.mrf.mxu0
        %v2515 = vadd.f32 %v2492, %v2514
        %2516 = vdwg.mxu0
        %2517 = vmatpush.msra.mxu0 0.0
        %2518 = vmatpush.msra.mxu0 0.0
        %2519 = vmatpush.msra.mxu0 0.0
        %2520 = vmatpush.msra.mxu0 0.0
        %2521 = vmatpush.msra.mxu0 0.0
        %2522 = vmatpush.msra.mxu0 0.0
        %2523 = vmatpush.msra.mxu0 0.0
        %2524 = vmatpush.msra.mxu0 0.0
        %2525 = vmatpush.msra.mxu0 0.0
        %2526 = vmatpush.msra.mxu0 0.0
        %2527 = vmatpush.msra.mxu0 0.0
        %2528 = vmatpush.msra.mxu0 0.0
        %2529 = vmatpush.msra.mxu0 0.0
        %2530 = vmatpush.msra.mxu0 0.0
        %2531 = vmatpush.msra.mxu0 %v2486
        %2532 = vmatpush.msra.mxu0 %v2484
        %2533 = vmatmul.f32.gmra.mxu0 %v2495
        %v2534 = vpop.f32.mrf.mxu0
        %v2535 = vadd.f32 %v2492, %v2534
        %2536 = vdwg.mxu0
        %vm2537 = vcmp.gt.f32.partialorder %v2515, 0.0
        %vm2538 = vcmp.gt.f32.partialorder %v2535, 0.0
        %v2539 = vstv %s645
        %v2540 = vmul.f32 %v2539, %v2515
        %v2541 = vmul.f32 %v2539, %v2535
        %v2542 = vsel %vm2537, %v2515, %v2540
        %v2543 = vsel %vm2538, %v2535, %v2541
        %v2544 = vld [vmem:[%s612] sm:$0x3]
        %2546 = vset.pattern.permute.xlu0 0
        %2547 = vperm.xlu0 %2546, %v2544
        %v2548 = vpop.permute.xlu0 %2547
        %v2550 = vmul.f32 %v2548, %v2542
        %v2551 = vmul.f32 %v2548, %v2543
        %vm2552 = vcmask 1041408
        %v2553 = vsel %vm2552, %v2550, 0.0
        %v2554 = vrot.slane %v2553, 4
        %v2555 = vadd.f32 %v2553, %v2554
        %v2556 = vrot.slane %v2555, 2
        %v2557 = vadd.f32 %v2555, %v2556
        %v2558 = vrot.slane %v2557, 1
        %v2559 = vadd.f32 %v2557, %v2558
        %v2560 = vsel %vm2552, %v2551, 0.0
        %v2561 = vrot.slane %v2560, 4
        %v2562 = vadd.f32 %v2560, %v2561
        %v2563 = vrot.slane %v2562, 2
        %v2564 = vadd.f32 %v2562, %v2563
        %v2565 = vrot.slane %v2564, 1
        %v2566 = vadd.f32 %v2564, %v2565
        %v2567 = vstv %s647
        %v2568 = vadd.f32 %v2559, %v2567
        %v2569 = vadd.f32 %v2566, %v2567
        %v2570 = vxor.u32 %v2568, 2147483648
        %v2571 = vxor.u32 %v2569, 2147483648
        %v2572 = vmul.f32 %v2570, 1.442695
        %v2573 = vpow.pop %v2572
        %v2574 = vmul.f32 %v2571, 1.442695
        %v2575 = vpow.pop %v2574
        %v2576 = vadd.f32 %v2573, 1.0
        %v2577 = vadd.f32 %v2575, 1.0
        %v2578 = vrcp.pop %v2576
        %v2579 = vmul.f32 %v2576, %v2578
        %v2580 = vsub.f32 1.0, %v2579
        %v2581 = vmul.f32 %v2578, %v2580
        %v2582 = vadd.f32 %v2578, %v2581
        %vm2583 = vweird.f32 %v2576
        %vm2584 = vweird.f32 %v2578
        %vm2585 = vmor %vm2583, %vm2584
        %v2586 = vsel %vm2585, %v2578, %v2582
        %v2587 = vand.u32 2147483647, %v2576
        %vm2588 = vcmp.eq.f32.partialorder %v2587, 8.507059e+37
        %v2589 = vand.u32 %v2576, 2147483648
        %v2590 = vor.u32 1.1754944e-38, %v2589
        %v2591 = vsel %vm2588, %v2590, %v2586
        %v2592 = vmul.f32 1.0, %v2591
        %v2593 = vrcp.pop %v2577
        %v2594 = vmul.f32 %v2577, %v2593
        %v2595 = vsub.f32 1.0, %v2594
        %v2596 = vmul.f32 %v2593, %v2595
        %v2597 = vadd.f32 %v2593, %v2596
        %vm2598 = vweird.f32 %v2577
        %vm2599 = vweird.f32 %v2593
        %vm2600 = vmor %vm2598, %vm2599
        %v2601 = vsel %vm2600, %v2593, %v2597
        %v2602 = vand.u32 2147483647, %v2577
        %vm2603 = vcmp.eq.f32.partialorder %v2602, 8.507059e+37
        %v2604 = vand.u32 %v2577, 2147483648
        %v2605 = vor.u32 1.1754944e-38, %v2604
        %v2606 = vsel %vm2603, %v2605, %v2601
        %v2607 = vmul.f32 1.0, %v2606
        %v2608 = vmul.f32 %v2483, %v2592
        %v2609 = vmul.f32 %v2484, %v2607
        %v2610 = vmul.f32 %v2485, %v2592
        %v2611 = vmul.f32 %v2486, %v2607
        %v2612 = vadd.f32 %v2608, %v634
        %v2613 = vadd.f32 %v2609, %v635
        %v2614 = vadd.f32 %v2610, %v636
        %v2615 = vadd.f32 %v2611, %v637
        %2616 = vst [vmem:[#allocation3] sm:$0xff] %v2612
        %2617 = vst [vmem:[#allocation3 + $0x8] sm:$0xff] %v2613
        %2618 = vst [vmem:[#allocation3 + $0x10] sm:$0xff] %v2614
        %2619 = vst [vmem:[#allocation3 + $0x18] sm:$0xff] %v2615
        %p2620 = scmp.eq.s32.totalorder %s30, 1
        // Predicated region
        $region81: #{group_forward_pallas.1} parent=71 // pred_check
          %p2621 = pneg %p2620
        $region82: #{group_forward_pallas.1} parent=71 // pred_check_branch
          %2623 = sbr.rel (%p2621) target = $region84
        $region83: #{group_forward_pallas.1} parent=71 // pred_region
          %2624 = vst [vmem:[#allocation2 + $0x8] sm:$0xff] %v2612
          %2625 = vst [vmem:[#allocation2 + $0x10] sm:$0xff] %v2613
          %2626 = vst [vmem:[#allocation2 + $0x28] sm:$0xff] %v2614
          %2627 = vst [vmem:[#allocation2 + $0x30] sm:$0xff] %v2615
          %v2628 = vld [vmem:[#allocation2] sm:$0xff]
          %v2629 = vld [vmem:[#allocation2 + $0x8] sm:$0xff]
          %v2630 = vld [vmem:[#allocation2 + $0x10] sm:$0xff]
          %v2631 = vld [vmem:[#allocation2 + $0x20] sm:$0xff]
          %v2632 = vld [vmem:[#allocation2 + $0x28] sm:$0xff]
          %v2633 = vld [vmem:[#allocation2 + $0x30] sm:$0xff]
          %v2634 = vmul.f32 %v2628, %v663
          %v2635 = vmul.f32 %v2629, %v667
          %v2636 = vmul.f32 %v2630, %v665
          %v2637 = vmul.f32 %v2631, %v663
          %v2638 = vmul.f32 %v2632, %v667
          %v2639 = vmul.f32 %v2633, %v665
          %v2640 = vld [vmem:[%s11] sm:$0xff]
          %v2641 = vld [vmem:[%s11 + $0x8] sm:$0xff]
          %v2642 = vmul.f32 %v2628, %v684
          %v2643 = vmul.f32 %v2629, %v688
          %v2644 = vmul.f32 %v2630, %v686
          %v2645 = vmul.f32 %v2631, %v684
          %v2646 = vmul.f32 %v2632, %v688
          %v2647 = vmul.f32 %v2633, %v686
          %s2648 = scalar_lea.vmem %s11, 16
          %v2649 = vld [vmem:[%s2648] sm:$0xff]
          %v2650 = vld [vmem:[%s2648 + $0x8] sm:$0xff]
          %2657 = vrot.lane.b32.xlu0 %v2642, 16
          %v2658 = vpop.permute.xlu0 %2657
          %2659 = vrot.lane.b32.xlu0 %v2643, 16
          %v2660 = vpop.permute.xlu0 %2659
          %2661 = vrot.lane.b32.xlu0 %v2644, 16
          %v2662 = vpop.permute.xlu0 %2661
          %2663 = vrot.lane.b32.xlu0 %v2645, 16
          %v2664 = vpop.permute.xlu0 %2663
          %2665 = vrot.lane.b32.xlu0 %v2646, 16
          %v2666 = vpop.permute.xlu0 %2665
          %2667 = vrot.lane.b32.xlu0 %v2647, 16
          %v2668 = vpop.permute.xlu0 %2667
          %v2669 = vsel %vm719, %v2658, %v2660
          %v2670 = vsel %vm719, %v2660, %v2662
          %v2671 = vsel %vm719, %v2664, %v2666
          %v2672 = vsel %vm719, %v2666, %v2668
          %v2678 = vsel %vm719, %v2649, 0
          %v2681 = vsel %vm719, %v2650, 0
          %2683 = vmatpush.msra.mxu0 0.0
          %2684 = vmatpush.msra.mxu0 0.0
          %2685 = vmatpush.msra.mxu0 0.0
          %2686 = vmatpush.msra.mxu0 0.0
          %2687 = vmatpush.msra.mxu0 0.0
          %2688 = vmatpush.msra.mxu0 0.0
          %2689 = vmatpush.msra.mxu0 0.0
          %2690 = vmatpush.msra.mxu0 0.0
          %2691 = vmatpush.msra.mxu0 0.0
          %2692 = vmatpush.msra.mxu0 0.0
          %2693 = vmatpush.msra.mxu0 0.0
          %2694 = vmatpush.msra.mxu0 0.0
          %2695 = vmatpush.msra.mxu0 0.0
          %2696 = vmatpush.msra.mxu0 0.0
          %2697 = vmatpush.msra.mxu0 %v2671
          %2698 = vmatpush.msra.mxu0 %v2669
          %2699 = vmatmul.f32.gmra.mxu0 %v2678
          %v2700 = vpop.f32.mrf.mxu0
          %v2701 = vadd.f32 0.0, %v2700
          %2702 = vmatmul.f32.gmra.mxu0 %v2681
          %v2703 = vpop.f32.mrf.mxu0
          %v2704 = vadd.f32 0.0, %v2703
          %2705 = vdwg.mxu0
          %2706 = vmatpush.msra.mxu0 0.0
          %2707 = vmatpush.msra.mxu0 0.0
          %2708 = vmatpush.msra.mxu0 0.0
          %2709 = vmatpush.msra.mxu0 0.0
          %2710 = vmatpush.msra.mxu0 0.0
          %2711 = vmatpush.msra.mxu0 0.0
          %2712 = vmatpush.msra.mxu0 0.0
          %2713 = vmatpush.msra.mxu0 0.0
          %2714 = vmatpush.msra.mxu0 0.0
          %2715 = vmatpush.msra.mxu0 0.0
          %2716 = vmatpush.msra.mxu0 0.0
          %2717 = vmatpush.msra.mxu0 0.0
          %2718 = vmatpush.msra.mxu0 0.0
          %2719 = vmatpush.msra.mxu0 0.0
          %2720 = vmatpush.msra.mxu0 %v2672
          %2721 = vmatpush.msra.mxu0 %v2670
          %2722 = vmatmul.f32.gmra.mxu0 %v2678
          %v2723 = vpop.f32.mrf.mxu0
          %v2724 = vadd.f32 0.0, %v2723
          %2725 = vmatmul.f32.gmra.mxu0 %v2681
          %v2726 = vpop.f32.mrf.mxu0
          %v2727 = vadd.f32 0.0, %v2726
          %2728 = vdwg.mxu0
          %2735 = vrot.lane.b32.xlu0 %v2634, 17
          %v2736 = vpop.permute.xlu0 %2735
          %2737 = vrot.lane.b32.xlu0 %v2635, 17
          %v2738 = vpop.permute.xlu0 %2737
          %2739 = vrot.lane.b32.xlu0 %v2636, 17
          %v2740 = vpop.permute.xlu0 %2739
          %2741 = vrot.lane.b32.xlu0 %v2637, 17
          %v2742 = vpop.permute.xlu0 %2741
          %2743 = vrot.lane.b32.xlu0 %v2638, 17
          %v2744 = vpop.permute.xlu0 %2743
          %2745 = vrot.lane.b32.xlu0 %v2639, 17
          %v2746 = vpop.permute.xlu0 %2745
          %v2747 = vsel %vm798, %v2736, %v2738
          %v2748 = vsel %vm798, %v2738, %v2740
          %v2749 = vsel %vm798, %v2742, %v2744
          %v2750 = vsel %vm798, %v2744, %v2746
          %v2756 = vsel %vm719, %v2640, 0
          %v2759 = vsel %vm719, %v2641, 0
          %2761 = vmatpush.msra.mxu0 0.0
          %2762 = vmatpush.msra.mxu0 0.0
          %2763 = vmatpush.msra.mxu0 0.0
          %2764 = vmatpush.msra.mxu0 0.0
          %2765 = vmatpush.msra.mxu0 0.0
          %2766 = vmatpush.msra.mxu0 0.0
          %2767 = vmatpush.msra.mxu0 0.0
          %2768 = vmatpush.msra.mxu0 0.0
          %2769 = vmatpush.msra.mxu0 0.0
          %2770 = vmatpush.msra.mxu0 0.0
          %2771 = vmatpush.msra.mxu0 0.0
          %2772 = vmatpush.msra.mxu0 0.0
          %2773 = vmatpush.msra.mxu0 0.0
          %2774 = vmatpush.msra.mxu0 0.0
          %2775 = vmatpush.msra.mxu0 %v2749
          %2776 = vmatpush.msra.mxu0 %v2747
          %2777 = vmatmul.f32.gmra.mxu0 %v2756
          %v2778 = vpop.f32.mrf.mxu0
          %v2779 = vadd.f32 %v2701, %v2778
          %2780 = vmatmul.f32.gmra.mxu0 %v2759
          %v2781 = vpop.f32.mrf.mxu0
          %v2782 = vadd.f32 %v2704, %v2781
          %2783 = vdwg.mxu0
          %2784 = vmatpush.msra.mxu0 0.0
          %2785 = vmatpush.msra.mxu0 0.0
          %2786 = vmatpush.msra.mxu0 0.0
          %2787 = vmatpush.msra.mxu0 0.0
          %2788 = vmatpush.msra.mxu0 0.0
          %2789 = vmatpush.msra.mxu0 0.0
          %2790 = vmatpush.msra.mxu0 0.0
          %2791 = vmatpush.msra.mxu0 0.0
          %2792 = vmatpush.msra.mxu0 0.0
          %2793 = vmatpush.msra.mxu0 0.0
          %2794 = vmatpush.msra.mxu0 0.0
          %2795 = vmatpush.msra.mxu0 0.0
          %2796 = vmatpush.msra.mxu0 0.0
          %2797 = vmatpush.msra.mxu0 0.0
          %2798 = vmatpush.msra.mxu0 %v2750
          %2799 = vmatpush.msra.mxu0 %v2748
          %2800 = vmatmul.f32.gmra.mxu0 %v2756
          %v2801 = vpop.f32.mrf.mxu0
          %v2802 = vadd.f32 %v2724, %v2801
          %2803 = vmatmul.f32.gmra.mxu0 %v2759
          %v2804 = vpop.f32.mrf.mxu0
          %v2805 = vadd.f32 %v2727, %v2804
          %2806 = vdwg.mxu0
          %v2807 = vmul.f32 %v2628, %v864
          %v2808 = vmul.f32 %v2629, %v868
          %v2809 = vmul.f32 %v2630, %v866
          %v2810 = vmul.f32 %v2631, %v864
          %v2811 = vmul.f32 %v2632, %v868
          %v2812 = vmul.f32 %v2633, %v866
          %s2813 = scalar_lea.vmem %s11, 32
          %v2814 = vld [vmem:[%s2813] sm:$0xff]
          %v2815 = vld [vmem:[%s2813 + $0x8] sm:$0xff]
          %2822 = vrot.lane.b32.xlu0 %v2807, 15
          %v2823 = vpop.permute.xlu0 %2822
          %2824 = vrot.lane.b32.xlu0 %v2808, 15
          %v2825 = vpop.permute.xlu0 %2824
          %2826 = vrot.lane.b32.xlu0 %v2809, 15
          %v2827 = vpop.permute.xlu0 %2826
          %2828 = vrot.lane.b32.xlu0 %v2810, 15
          %v2829 = vpop.permute.xlu0 %2828
          %2830 = vrot.lane.b32.xlu0 %v2811, 15
          %v2831 = vpop.permute.xlu0 %2830
          %2832 = vrot.lane.b32.xlu0 %v2812, 15
          %v2833 = vpop.permute.xlu0 %2832
          %v2834 = vsel %vm899, %v2823, %v2825
          %v2835 = vsel %vm899, %v2825, %v2827
          %v2836 = vsel %vm899, %v2829, %v2831
          %v2837 = vsel %vm899, %v2831, %v2833
          %v2843 = vsel %vm719, %v2814, 0
          %v2846 = vsel %vm719, %v2815, 0
          %2848 = vmatpush.msra.mxu0 0.0
          %2849 = vmatpush.msra.mxu0 0.0
          %2850 = vmatpush.msra.mxu0 0.0
          %2851 = vmatpush.msra.mxu0 0.0
          %2852 = vmatpush.msra.mxu0 0.0
          %2853 = vmatpush.msra.mxu0 0.0
          %2854 = vmatpush.msra.mxu0 0.0
          %2855 = vmatpush.msra.mxu0 0.0
          %2856 = vmatpush.msra.mxu0 0.0
          %2857 = vmatpush.msra.mxu0 0.0
          %2858 = vmatpush.msra.mxu0 0.0
          %2859 = vmatpush.msra.mxu0 0.0
          %2860 = vmatpush.msra.mxu0 0.0
          %2861 = vmatpush.msra.mxu0 0.0
          %2862 = vmatpush.msra.mxu0 %v2836
          %2863 = vmatpush.msra.mxu0 %v2834
          %2864 = vmatmul.f32.gmra.mxu0 %v2843
          %v2865 = vpop.f32.mrf.mxu0
          %v2866 = vadd.f32 0.0, %v2865
          %2867 = vmatmul.f32.gmra.mxu0 %v2846
          %v2868 = vpop.f32.mrf.mxu0
          %v2869 = vadd.f32 0.0, %v2868
          %2870 = vdwg.mxu0
          %2871 = vmatpush.msra.mxu0 0.0
          %2872 = vmatpush.msra.mxu0 0.0
          %2873 = vmatpush.msra.mxu0 0.0
          %2874 = vmatpush.msra.mxu0 0.0
          %2875 = vmatpush.msra.mxu0 0.0
          %2876 = vmatpush.msra.mxu0 0.0
          %2877 = vmatpush.msra.mxu0 0.0
          %2878 = vmatpush.msra.mxu0 0.0
          %2879 = vmatpush.msra.mxu0 0.0
          %2880 = vmatpush.msra.mxu0 0.0
          %2881 = vmatpush.msra.mxu0 0.0
          %2882 = vmatpush.msra.mxu0 0.0
          %2883 = vmatpush.msra.mxu0 0.0
          %2884 = vmatpush.msra.mxu0 0.0
          %2885 = vmatpush.msra.mxu0 %v2837
          %2886 = vmatpush.msra.mxu0 %v2835
          %2887 = vmatmul.f32.gmra.mxu0 %v2843
          %v2888 = vpop.f32.mrf.mxu0
          %v2889 = vadd.f32 0.0, %v2888
          %2890 = vmatmul.f32.gmra.mxu0 %v2846
          %v2891 = vpop.f32.mrf.mxu0
          %v2892 = vadd.f32 0.0, %v2891
          %2893 = vdwg.mxu0
          %v2894 = vadd.f32 %v2779, %v2866
          %v2895 = vadd.f32 %v2802, %v2889
          %v2896 = vadd.f32 %v2782, %v2869
          %v2897 = vadd.f32 %v2805, %v2892
          %v2898 = vmul.f32 %v2628, %v969
          %v2899 = vmul.f32 %v2629, %v973
          %v2900 = vmul.f32 %v2630, %v971
          %v2901 = vmul.f32 %v2631, %v969
          %v2902 = vmul.f32 %v2632, %v973
          %v2903 = vmul.f32 %v2633, %v971
          %s2904 = scalar_lea.vmem %s11, 48
          %v2905 = vld [vmem:[%s2904] sm:$0xff]
          %v2906 = vld [vmem:[%s2904 + $0x8] sm:$0xff]
          %2913 = vrot.lane.b32.xlu0 %v2898, 1
          %v2914 = vpop.permute.xlu0 %2913
          %2915 = vrot.lane.b32.xlu0 %v2899, 1
          %v2916 = vpop.permute.xlu0 %2915
          %2917 = vrot.lane.b32.xlu0 %v2900, 1
          %v2918 = vpop.permute.xlu0 %2917
          %2919 = vrot.lane.b32.xlu0 %v2901, 1
          %v2920 = vpop.permute.xlu0 %2919
          %2921 = vrot.lane.b32.xlu0 %v2902, 1
          %v2922 = vpop.permute.xlu0 %2921
          %2923 = vrot.lane.b32.xlu0 %v2903, 1
          %v2924 = vpop.permute.xlu0 %2923
          %v2925 = vsel %vm1004, %v2914, %v2916
          %v2926 = vsel %vm1004, %v2916, %v2918
          %v2927 = vsel %vm1004, %v2920, %v2922
          %v2928 = vsel %vm1004, %v2922, %v2924
          %v2934 = vsel %vm719, %v2905, 0
          %v2937 = vsel %vm719, %v2906, 0
          %2939 = vmatpush.msra.mxu0 0.0
          %2940 = vmatpush.msra.mxu0 0.0
          %2941 = vmatpush.msra.mxu0 0.0
          %2942 = vmatpush.msra.mxu0 0.0
          %2943 = vmatpush.msra.mxu0 0.0
          %2944 = vmatpush.msra.mxu0 0.0
          %2945 = vmatpush.msra.mxu0 0.0
          %2946 = vmatpush.msra.mxu0 0.0
          %2947 = vmatpush.msra.mxu0 0.0
          %2948 = vmatpush.msra.mxu0 0.0
          %2949 = vmatpush.msra.mxu0 0.0
          %2950 = vmatpush.msra.mxu0 0.0
          %2951 = vmatpush.msra.mxu0 0.0
          %2952 = vmatpush.msra.mxu0 0.0
          %2953 = vmatpush.msra.mxu0 %v2927
          %2954 = vmatpush.msra.mxu0 %v2925
          %2955 = vmatmul.f32.gmra.mxu0 %v2934
          %v2956 = vpop.f32.mrf.mxu0
          %v2957 = vadd.f32 0.0, %v2956
          %2958 = vmatmul.f32.gmra.mxu0 %v2937
          %v2959 = vpop.f32.mrf.mxu0
          %v2960 = vadd.f32 0.0, %v2959
          %2961 = vdwg.mxu0
          %2962 = vmatpush.msra.mxu0 0.0
          %2963 = vmatpush.msra.mxu0 0.0
          %2964 = vmatpush.msra.mxu0 0.0
          %2965 = vmatpush.msra.mxu0 0.0
          %2966 = vmatpush.msra.mxu0 0.0
          %2967 = vmatpush.msra.mxu0 0.0
          %2968 = vmatpush.msra.mxu0 0.0
          %2969 = vmatpush.msra.mxu0 0.0
          %2970 = vmatpush.msra.mxu0 0.0
          %2971 = vmatpush.msra.mxu0 0.0
          %2972 = vmatpush.msra.mxu0 0.0
          %2973 = vmatpush.msra.mxu0 0.0
          %2974 = vmatpush.msra.mxu0 0.0
          %2975 = vmatpush.msra.mxu0 0.0
          %2976 = vmatpush.msra.mxu0 %v2928
          %2977 = vmatpush.msra.mxu0 %v2926
          %2978 = vmatmul.f32.gmra.mxu0 %v2934
          %v2979 = vpop.f32.mrf.mxu0
          %v2980 = vadd.f32 0.0, %v2979
          %2981 = vmatmul.f32.gmra.mxu0 %v2937
          %v2982 = vpop.f32.mrf.mxu0
          %v2983 = vadd.f32 0.0, %v2982
          %2984 = vdwg.mxu0
          %v2985 = vadd.f32 %v2894, %v2957
          %v2986 = vadd.f32 %v2895, %v2980
          %v2987 = vadd.f32 %v2896, %v2960
          %v2988 = vadd.f32 %v2897, %v2983
          %s2989 = scalar_lea.vmem %s11, 64
          %v2990 = vld [vmem:[%s2989] sm:$0xff]
          %v2991 = vld [vmem:[%s2989 + $0x8] sm:$0xff]
          %v2993 = vsel %vm719, %v2990, 0
          %v2996 = vsel %vm719, %v2991, 0
          %2998 = vmatpush.msra.mxu0 0.0
          %2999 = vmatpush.msra.mxu0 0.0
          %3000 = vmatpush.msra.mxu0 0.0
          %3001 = vmatpush.msra.mxu0 0.0
          %3002 = vmatpush.msra.mxu0 0.0
          %3003 = vmatpush.msra.mxu0 0.0
          %3004 = vmatpush.msra.mxu0 0.0
          %3005 = vmatpush.msra.mxu0 0.0
          %3006 = vmatpush.msra.mxu0 0.0
          %3007 = vmatpush.msra.mxu0 0.0
          %3008 = vmatpush.msra.mxu0 0.0
          %3009 = vmatpush.msra.mxu0 0.0
          %3010 = vmatpush.msra.mxu0 0.0
          %3011 = vmatpush.msra.mxu0 0.0
          %3012 = vmatpush.msra.mxu0 %v2632
          %3013 = vmatpush.msra.mxu0 %v2629
          %3014 = vmatmul.f32.gmra.mxu0 %v2993
          %v3015 = vpop.f32.mrf.mxu0
          %v3016 = vadd.f32 0.0, %v3015
          %3017 = vmatmul.f32.gmra.mxu0 %v2996
          %v3018 = vpop.f32.mrf.mxu0
          %v3019 = vadd.f32 0.0, %v3018
          %3020 = vdwg.mxu0
          %3021 = vmatpush.msra.mxu0 0.0
          %3022 = vmatpush.msra.mxu0 0.0
          %3023 = vmatpush.msra.mxu0 0.0
          %3024 = vmatpush.msra.mxu0 0.0
          %3025 = vmatpush.msra.mxu0 0.0
          %3026 = vmatpush.msra.mxu0 0.0
          %3027 = vmatpush.msra.mxu0 0.0
          %3028 = vmatpush.msra.mxu0 0.0
          %3029 = vmatpush.msra.mxu0 0.0
          %3030 = vmatpush.msra.mxu0 0.0
          %3031 = vmatpush.msra.mxu0 0.0
          %3032 = vmatpush.msra.mxu0 0.0
          %3033 = vmatpush.msra.mxu0 0.0
          %3034 = vmatpush.msra.mxu0 0.0
          %3035 = vmatpush.msra.mxu0 %v2633
          %3036 = vmatpush.msra.mxu0 %v2630
          %3037 = vmatmul.f32.gmra.mxu0 %v2993
          %v3038 = vpop.f32.mrf.mxu0
          %v3039 = vadd.f32 0.0, %v3038
          %3040 = vmatmul.f32.gmra.mxu0 %v2996
          %v3041 = vpop.f32.mrf.mxu0
          %v3042 = vadd.f32 0.0, %v3041
          %3043 = vdwg.mxu0
          %v3044 = vadd.f32 %v2985, %v3016
          %v3045 = vadd.f32 %v2986, %v3039
          %v3046 = vadd.f32 %v2987, %v3019
          %v3047 = vadd.f32 %v2988, %v3042
          %v3048 = vld [vmem:[#allocation2 + $0x8] sm:$0xff]
          %v3049 = vld [vmem:[#allocation2 + $0x10] sm:$0xff]
          %v3050 = vld [vmem:[#allocation2 + $0x18] sm:$0xff]
          %v3051 = vld [vmem:[#allocation2 + $0x28] sm:$0xff]
          %v3052 = vld [vmem:[#allocation2 + $0x30] sm:$0xff]
          %v3053 = vld [vmem:[#allocation2 + $0x38] sm:$0xff]
          %v3054 = vmul.f32 %v3048, %v1139
          %v3055 = vmul.f32 %v3049, %v1142
          %v3056 = vmul.f32 %v3050, %v1141
          %v3057 = vmul.f32 %v3051, %v1139
          %v3058 = vmul.f32 %v3052, %v1142
          %v3059 = vmul.f32 %v3053, %v1141
          %s3060 = scalar_lea.vmem %s11, 80
          %v3061 = vld [vmem:[%s3060] sm:$0xff]
          %v3062 = vld [vmem:[%s3060 + $0x8] sm:$0xff]
          %3069 = vrot.lane.b32.xlu0 %v3054, 127
          %v3070 = vpop.permute.xlu0 %3069
          %3071 = vrot.lane.b32.xlu0 %v3055, 127
          %v3072 = vpop.permute.xlu0 %3071
          %3073 = vrot.lane.b32.xlu0 %v3056, 127
          %v3074 = vpop.permute.xlu0 %3073
          %3075 = vrot.lane.b32.xlu0 %v3057, 127
          %v3076 = vpop.permute.xlu0 %3075
          %3077 = vrot.lane.b32.xlu0 %v3058, 127
          %v3078 = vpop.permute.xlu0 %3077
          %3079 = vrot.lane.b32.xlu0 %v3059, 127
          %v3080 = vpop.permute.xlu0 %3079
          %v3081 = vsel %vm972, %v3070, %v3072
          %v3082 = vsel %vm972, %v3072, %v3074
          %v3083 = vsel %vm972, %v3076, %v3078
          %v3084 = vsel %vm972, %v3078, %v3080
          %v3090 = vsel %vm719, %v3061, 0
          %v3093 = vsel %vm719, %v3062, 0
          %3095 = vmatpush.msra.mxu0 0.0
          %3096 = vmatpush.msra.mxu0 0.0
          %3097 = vmatpush.msra.mxu0 0.0
          %3098 = vmatpush.msra.mxu0 0.0
          %3099 = vmatpush.msra.mxu0 0.0
          %3100 = vmatpush.msra.mxu0 0.0
          %3101 = vmatpush.msra.mxu0 0.0
          %3102 = vmatpush.msra.mxu0 0.0
          %3103 = vmatpush.msra.mxu0 0.0
          %3104 = vmatpush.msra.mxu0 0.0
          %3105 = vmatpush.msra.mxu0 0.0
          %3106 = vmatpush.msra.mxu0 0.0
          %3107 = vmatpush.msra.mxu0 0.0
          %3108 = vmatpush.msra.mxu0 0.0
          %3109 = vmatpush.msra.mxu0 %v3083
          %3110 = vmatpush.msra.mxu0 %v3081
          %3111 = vmatmul.f32.gmra.mxu0 %v3090
          %v3112 = vpop.f32.mrf.mxu0
          %v3113 = vadd.f32 0.0, %v3112
          %3114 = vmatmul.f32.gmra.mxu0 %v3093
          %v3115 = vpop.f32.mrf.mxu0
          %v3116 = vadd.f32 0.0, %v3115
          %3117 = vdwg.mxu0
          %3118 = vmatpush.msra.mxu0 0.0
          %3119 = vmatpush.msra.mxu0 0.0
          %3120 = vmatpush.msra.mxu0 0.0
          %3121 = vmatpush.msra.mxu0 0.0
          %3122 = vmatpush.msra.mxu0 0.0
          %3123 = vmatpush.msra.mxu0 0.0
          %3124 = vmatpush.msra.mxu0 0.0
          %3125 = vmatpush.msra.mxu0 0.0
          %3126 = vmatpush.msra.mxu0 0.0
          %3127 = vmatpush.msra.mxu0 0.0
          %3128 = vmatpush.msra.mxu0 0.0
          %3129 = vmatpush.msra.mxu0 0.0
          %3130 = vmatpush.msra.mxu0 0.0
          %3131 = vmatpush.msra.mxu0 0.0
          %3132 = vmatpush.msra.mxu0 %v3084
          %3133 = vmatpush.msra.mxu0 %v3082
          %3134 = vmatmul.f32.gmra.mxu0 %v3090
          %v3135 = vpop.f32.mrf.mxu0
          %v3136 = vadd.f32 0.0, %v3135
          %3137 = vmatmul.f32.gmra.mxu0 %v3093
          %v3138 = vpop.f32.mrf.mxu0
          %v3139 = vadd.f32 0.0, %v3138
          %3140 = vdwg.mxu0
          %v3141 = vadd.f32 %v3044, %v3113
          %v3142 = vadd.f32 %v3045, %v3136
          %v3143 = vadd.f32 %v3046, %v3116
          %v3144 = vadd.f32 %v3047, %v3139
          %v3145 = vmul.f32 %v3048, %v1242
          %v3146 = vmul.f32 %v3049, %v1245
          %v3147 = vmul.f32 %v3050, %v1244
          %v3148 = vmul.f32 %v3051, %v1242
          %v3149 = vmul.f32 %v3052, %v1245
          %v3150 = vmul.f32 %v3053, %v1244
          %s3151 = scalar_lea.vmem %s11, 96
          %v3152 = vld [vmem:[%s3151] sm:$0xff]
          %v3153 = vld [vmem:[%s3151 + $0x8] sm:$0xff]
          %3160 = vrot.lane.b32.xlu0 %v3145, 113
          %v3161 = vpop.permute.xlu0 %3160
          %3162 = vrot.lane.b32.xlu0 %v3146, 113
          %v3163 = vpop.permute.xlu0 %3162
          %3164 = vrot.lane.b32.xlu0 %v3147, 113
          %v3165 = vpop.permute.xlu0 %3164
          %3166 = vrot.lane.b32.xlu0 %v3148, 113
          %v3167 = vpop.permute.xlu0 %3166
          %3168 = vrot.lane.b32.xlu0 %v3149, 113
          %v3169 = vpop.permute.xlu0 %3168
          %3170 = vrot.lane.b32.xlu0 %v3150, 113
          %v3171 = vpop.permute.xlu0 %3170
          %v3172 = vsel %vm867, %v3161, %v3163
          %v3173 = vsel %vm867, %v3163, %v3165
          %v3174 = vsel %vm867, %v3167, %v3169
          %v3175 = vsel %vm867, %v3169, %v3171
          %v3181 = vsel %vm719, %v3152, 0
          %v3184 = vsel %vm719, %v3153, 0
          %3186 = vmatpush.msra.mxu0 0.0
          %3187 = vmatpush.msra.mxu0 0.0
          %3188 = vmatpush.msra.mxu0 0.0
          %3189 = vmatpush.msra.mxu0 0.0
          %3190 = vmatpush.msra.mxu0 0.0
          %3191 = vmatpush.msra.mxu0 0.0
          %3192 = vmatpush.msra.mxu0 0.0
          %3193 = vmatpush.msra.mxu0 0.0
          %3194 = vmatpush.msra.mxu0 0.0
          %3195 = vmatpush.msra.mxu0 0.0
          %3196 = vmatpush.msra.mxu0 0.0
          %3197 = vmatpush.msra.mxu0 0.0
          %3198 = vmatpush.msra.mxu0 0.0
          %3199 = vmatpush.msra.mxu0 0.0
          %3200 = vmatpush.msra.mxu0 %v3174
          %3201 = vmatpush.msra.mxu0 %v3172
          %3202 = vmatmul.f32.gmra.mxu0 %v3181
          %v3203 = vpop.f32.mrf.mxu0
          %v3204 = vadd.f32 0.0, %v3203
          %3205 = vmatmul.f32.gmra.mxu0 %v3184
          %v3206 = vpop.f32.mrf.mxu0
          %v3207 = vadd.f32 0.0, %v3206
          %3208 = vdwg.mxu0
          %3209 = vmatpush.msra.mxu0 0.0
          %3210 = vmatpush.msra.mxu0 0.0
          %3211 = vmatpush.msra.mxu0 0.0
          %3212 = vmatpush.msra.mxu0 0.0
          %3213 = vmatpush.msra.mxu0 0.0
          %3214 = vmatpush.msra.mxu0 0.0
          %3215 = vmatpush.msra.mxu0 0.0
          %3216 = vmatpush.msra.mxu0 0.0
          %3217 = vmatpush.msra.mxu0 0.0
          %3218 = vmatpush.msra.mxu0 0.0
          %3219 = vmatpush.msra.mxu0 0.0
          %3220 = vmatpush.msra.mxu0 0.0
          %3221 = vmatpush.msra.mxu0 0.0
          %3222 = vmatpush.msra.mxu0 0.0
          %3223 = vmatpush.msra.mxu0 %v3175
          %3224 = vmatpush.msra.mxu0 %v3173
          %3225 = vmatmul.f32.gmra.mxu0 %v3181
          %v3226 = vpop.f32.mrf.mxu0
          %v3227 = vadd.f32 0.0, %v3226
          %3228 = vmatmul.f32.gmra.mxu0 %v3184
          %v3229 = vpop.f32.mrf.mxu0
          %v3230 = vadd.f32 0.0, %v3229
          %3231 = vdwg.mxu0
          %v3232 = vadd.f32 %v3141, %v3204
          %v3233 = vadd.f32 %v3142, %v3227
          %v3234 = vadd.f32 %v3143, %v3207
          %v3235 = vadd.f32 %v3144, %v3230
          %v3236 = vmul.f32 %v3048, %v1345
          %v3237 = vmul.f32 %v3049, %v1348
          %v3238 = vmul.f32 %v3050, %v1347
          %v3239 = vmul.f32 %v3051, %v1345
          %v3240 = vmul.f32 %v3052, %v1348
          %v3241 = vmul.f32 %v3053, %v1347
          %s3242 = scalar_lea.vmem %s11, 112
          %v3243 = vld [vmem:[%s3242] sm:$0xff]
          %v3244 = vld [vmem:[%s3242 + $0x8] sm:$0xff]
          %3251 = vrot.lane.b32.xlu0 %v3236, 112
          %v3252 = vpop.permute.xlu0 %3251
          %3253 = vrot.lane.b32.xlu0 %v3237, 112
          %v3254 = vpop.permute.xlu0 %3253
          %3255 = vrot.lane.b32.xlu0 %v3238, 112
          %v3256 = vpop.permute.xlu0 %3255
          %3257 = vrot.lane.b32.xlu0 %v3239, 112
          %v3258 = vpop.permute.xlu0 %3257
          %3259 = vrot.lane.b32.xlu0 %v3240, 112
          %v3260 = vpop.permute.xlu0 %3259
          %3261 = vrot.lane.b32.xlu0 %v3241, 112
          %v3262 = vpop.permute.xlu0 %3261
          %v3263 = vsel %vm687, %v3252, %v3254
          %v3264 = vsel %vm687, %v3254, %v3256
          %v3265 = vsel %vm687, %v3258, %v3260
          %v3266 = vsel %vm687, %v3260, %v3262
          %v3272 = vsel %vm719, %v3243, 0
          %v3275 = vsel %vm719, %v3244, 0
          %3277 = vmatpush.msra.mxu0 0.0
          %3278 = vmatpush.msra.mxu0 0.0
          %3279 = vmatpush.msra.mxu0 0.0
          %3280 = vmatpush.msra.mxu0 0.0
          %3281 = vmatpush.msra.mxu0 0.0
          %3282 = vmatpush.msra.mxu0 0.0
          %3283 = vmatpush.msra.mxu0 0.0
          %3284 = vmatpush.msra.mxu0 0.0
          %3285 = vmatpush.msra.mxu0 0.0
          %3286 = vmatpush.msra.mxu0 0.0
          %3287 = vmatpush.msra.mxu0 0.0
          %3288 = vmatpush.msra.mxu0 0.0
          %3289 = vmatpush.msra.mxu0 0.0
          %3290 = vmatpush.msra.mxu0 0.0
          %3291 = vmatpush.msra.mxu0 %v3265
          %3292 = vmatpush.msra.mxu0 %v3263
          %3293 = vmatmul.f32.gmra.mxu0 %v3272
          %v3294 = vpop.f32.mrf.mxu0
          %v3295 = vadd.f32 0.0, %v3294
          %3296 = vmatmul.f32.gmra.mxu0 %v3275
          %v3297 = vpop.f32.mrf.mxu0
          %v3298 = vadd.f32 0.0, %v3297
          %3299 = vdwg.mxu0
          %3300 = vmatpush.msra.mxu0 0.0
          %3301 = vmatpush.msra.mxu0 0.0
          %3302 = vmatpush.msra.mxu0 0.0
          %3303 = vmatpush.msra.mxu0 0.0
          %3304 = vmatpush.msra.mxu0 0.0
          %3305 = vmatpush.msra.mxu0 0.0
          %3306 = vmatpush.msra.mxu0 0.0
          %3307 = vmatpush.msra.mxu0 0.0
          %3308 = vmatpush.msra.mxu0 0.0
          %3309 = vmatpush.msra.mxu0 0.0
          %3310 = vmatpush.msra.mxu0 0.0
          %3311 = vmatpush.msra.mxu0 0.0
          %3312 = vmatpush.msra.mxu0 0.0
          %3313 = vmatpush.msra.mxu0 0.0
          %3314 = vmatpush.msra.mxu0 %v3266
          %3315 = vmatpush.msra.mxu0 %v3264
          %3316 = vmatmul.f32.gmra.mxu0 %v3272
          %v3317 = vpop.f32.mrf.mxu0
          %v3318 = vadd.f32 0.0, %v3317
          %3319 = vmatmul.f32.gmra.mxu0 %v3275
          %v3320 = vpop.f32.mrf.mxu0
          %v3321 = vadd.f32 0.0, %v3320
          %3322 = vdwg.mxu0
          %v3323 = vadd.f32 %v3232, %v3295
          %v3324 = vadd.f32 %v3233, %v3318
          %v3325 = vadd.f32 %v3234, %v3298
          %v3326 = vadd.f32 %v3235, %v3321
          %v3327 = vmul.f32 %v3048, %v1448
          %v3328 = vmul.f32 %v3049, %v1451
          %v3329 = vmul.f32 %v3050, %v1450
          %v3330 = vmul.f32 %v3051, %v1448
          %v3331 = vmul.f32 %v3052, %v1451
          %v3332 = vmul.f32 %v3053, %v1450
          %s3333 = scalar_lea.vmem %s11, 128
          %v3334 = vld [vmem:[%s3333] sm:$0xff]
          %v3335 = vld [vmem:[%s3333 + $0x8] sm:$0xff]
          %3342 = vrot.lane.b32.xlu0 %v3327, 111
          %v3343 = vpop.permute.xlu0 %3342
          %3344 = vrot.lane.b32.xlu0 %v3328, 111
          %v3345 = vpop.permute.xlu0 %3344
          %3346 = vrot.lane.b32.xlu0 %v3329, 111
          %v3347 = vpop.permute.xlu0 %3346
          %3348 = vrot.lane.b32.xlu0 %v3330, 111
          %v3349 = vpop.permute.xlu0 %3348
          %3350 = vrot.lane.b32.xlu0 %v3331, 111
          %v3351 = vpop.permute.xlu0 %3350
          %3352 = vrot.lane.b32.xlu0 %v3332, 111
          %v3353 = vpop.permute.xlu0 %3352
          %v3354 = vsel %vm666, %v3343, %v3345
          %v3355 = vsel %vm666, %v3345, %v3347
          %v3356 = vsel %vm666, %v3349, %v3351
          %v3357 = vsel %vm666, %v3351, %v3353
          %v3363 = vsel %vm719, %v3334, 0
          %v3366 = vsel %vm719, %v3335, 0
          %3368 = vmatpush.msra.mxu0 0.0
          %3369 = vmatpush.msra.mxu0 0.0
          %3370 = vmatpush.msra.mxu0 0.0
          %3371 = vmatpush.msra.mxu0 0.0
          %3372 = vmatpush.msra.mxu0 0.0
          %3373 = vmatpush.msra.mxu0 0.0
          %3374 = vmatpush.msra.mxu0 0.0
          %3375 = vmatpush.msra.mxu0 0.0
          %3376 = vmatpush.msra.mxu0 0.0
          %3377 = vmatpush.msra.mxu0 0.0
          %3378 = vmatpush.msra.mxu0 0.0
          %3379 = vmatpush.msra.mxu0 0.0
          %3380 = vmatpush.msra.mxu0 0.0
          %3381 = vmatpush.msra.mxu0 0.0
          %3382 = vmatpush.msra.mxu0 %v3356
          %3383 = vmatpush.msra.mxu0 %v3354
          %3384 = vmatmul.f32.gmra.mxu0 %v3363
          %v3385 = vpop.f32.mrf.mxu0
          %v3386 = vadd.f32 0.0, %v3385
          %3387 = vmatmul.f32.gmra.mxu0 %v3366
          %v3388 = vpop.f32.mrf.mxu0
          %v3389 = vadd.f32 0.0, %v3388
          %3390 = vdwg.mxu0
          %3391 = vmatpush.msra.mxu0 0.0
          %3392 = vmatpush.msra.mxu0 0.0
          %3393 = vmatpush.msra.mxu0 0.0
          %3394 = vmatpush.msra.mxu0 0.0
          %3395 = vmatpush.msra.mxu0 0.0
          %3396 = vmatpush.msra.mxu0 0.0
          %3397 = vmatpush.msra.mxu0 0.0
          %3398 = vmatpush.msra.mxu0 0.0
          %3399 = vmatpush.msra.mxu0 0.0
          %3400 = vmatpush.msra.mxu0 0.0
          %3401 = vmatpush.msra.mxu0 0.0
          %3402 = vmatpush.msra.mxu0 0.0
          %3403 = vmatpush.msra.mxu0 0.0
          %3404 = vmatpush.msra.mxu0 0.0
          %3405 = vmatpush.msra.mxu0 %v3357
          %3406 = vmatpush.msra.mxu0 %v3355
          %3407 = vmatmul.f32.gmra.mxu0 %v3363
          %v3408 = vpop.f32.mrf.mxu0
          %v3409 = vadd.f32 0.0, %v3408
          %3410 = vmatmul.f32.gmra.mxu0 %v3366
          %v3411 = vpop.f32.mrf.mxu0
          %v3412 = vadd.f32 0.0, %v3411
          %3413 = vdwg.mxu0
          %v3414 = vadd.f32 %v3323, %v3386
          %v3415 = vadd.f32 %v3324, %v3409
          %v3416 = vadd.f32 %v3325, %v3389
          %v3417 = vadd.f32 %v3326, %v3412
          %v3418 = vld [vmem:[%s12] sm:$0xff]
          %v3419 = vld [vmem:[%s12 + $0x8] sm:$0xff]
          %3421 = vset.pattern.permute.xlu0 0
          %3422 = vperm.xlu0 %3421, %v3418
          %v3423 = vpop.permute.xlu0 %3422
          %3426 = vset.pattern.permute.xlu0 0
          %3427 = vperm.xlu0 %3426, %v3419
          %v3428 = vpop.permute.xlu0 %3427
          %v3430 = vadd.f32 %v3414, %v3423
          %v3431 = vadd.f32 %v3415, %v3423
          %v3432 = vadd.f32 %v3416, %v3428
          %v3433 = vadd.f32 %v3417, %v3428
          %v3434 = vld [vmem:[%s575] sm:$0xff]
          %v3435 = vld [vmem:[%s575 + $0x8] sm:$0xff]
          %v3436 = vld [vmem:[%s575 + $0x10] sm:$0xff]
          %v3437 = vld [vmem:[%s575 + $0x18] sm:$0xff]
          %v3438 = vadd.f32 %v3430, %v3434
          %v3439 = vadd.f32 %v3431, %v3435
          %v3440 = vadd.f32 %v3432, %v3436
          %v3441 = vadd.f32 %v3433, %v3437
          %3442 = vst [vmem:[%s617] sm:$0xff] %v3438
          %3443 = vst [vmem:[%s617 + $0x8] sm:$0xff] %v3439
          %3444 = vst [vmem:[%s617 + $0x10] sm:$0xff] %v3440
          %3445 = vst [vmem:[%s617 + $0x18] sm:$0xff] %v3441
        $region84: #{group_forward_pallas.1} parent=71 // pred_fallthru
          _
        %p3446 = scmp.lt.s32.totalorder %s29, 1
        %s3447 = scalar_select %p3446, %s29, 1
        %s3448 = smul.addr %s3447, 4
        %s3449 = smul.addr %s3448, 8
        %s3450 = scalar_lea.vmem %s13, %s3449
        // Predicated region
        $region85: #{group_forward_pallas.1} parent=71 // pred_check
          %p3451 = pneg %p373
        $region86: #{group_forward_pallas.1} parent=71 // pred_check_branch
          %3453 = sbr.rel (%p3451) target = $region88
        $region87: #{group_forward_pallas.1} parent=71 // pred_region
          _
        $region88: #{group_forward_pallas.1} parent=71 // pred_fallthru
          _
      $region72: #{group_forward_pallas.1} parent=5 // pred_fallthru
        _
      %p3454 = scmp.le.s32.totalorder 2, %s20
      // Predicated region
      $region89: #{group_forward_pallas.1} parent=5 // pred_check
        %p3455 = pneg %p3454
      $region90: #{group_forward_pallas.1} parent=5 // pred_check_branch
        %3457 = sbr.rel (%p3455) target = $region92
      $region91: #{group_forward_pallas.1} parent=5 // pred_region
        %s3458 = ssub.s32 %s20, 2
        // Predicated region
        $region93: #{group_forward_pallas.1} parent=91 // pred_check
          %p3459 = pneg %p379
        $region94: #{group_forward_pallas.1} parent=91 // pred_check_branch
          %3461 = sbr.rel (%p3459) target = $region96
        $region95: #{group_forward_pallas.1} parent=91 // pred_region
          %p3462 = scmp.lt.s32.totalorder %s31, 1
          %s3463 = scalar_select %p3462, %s31, 1
          %s3464 = smul.addr %s3463, 4
          %s3465 = smul.addr %s3464, 8
          %s3466 = scalar_lea.vmem %s13, %s3465
        $region96: #{group_forward_pallas.1} parent=91 // pred_fallthru
          _
      $region92: #{group_forward_pallas.1} parent=5 // pred_fallthru
        _
    $region6: #{group_forward_pallas.1} parent=1 // loop_footer
      %s24 = sadd.s32 1, %s20
    $region7: #{group_forward_pallas.1} parent=1 // loop_footer_branch
      %19 = sbr.rel target = $region3
    $region8: #{group_forward_pallas.1} parent=1 // loop_exit
      _
    %3467 = vsyncpa [#allocation5], 1
    %s3468 = scalar_lea.sflag [#allocation5], 1
    %3469 = vsyncpa %s3468, 1

</llo_original>
